<compile_context>
chip_gen: v6e
topology: v6e:2x2x1
jax: 0.10.0
libtpu: 0.0.40
codegen_flags: <defaults>
</compile_context>

<pallas_src>
import functools
import math

import jax
import jax.numpy as jnp
from jax.experimental import pallas as pl
from jax.experimental.pallas import tpu as pltpu


def _round_up(a, b):
    return (a + b - 1) // b * b


def _mlp_block_kernel(x_ref, lnw_ref, lnb_ref, w1_ref, b1_ref, w2_ref, b2_ref,
                      o_ref, *, d_real, d_pad, eps):
    x = x_ref[...].astype(jnp.float32)                       # (TM, Dp)

    # --- LayerNorm over the real D features only ----------------------------
    # Padded lanes of x are zero, so the row sums only see real features.
    # Padded lanes of lnw/lnb are zero, so xn is zero in the padded lanes.
    inv_d = 1.0 / d_real
    mu = jnp.sum(x, axis=-1, keepdims=True) * inv_d
    xc = x - mu
    # Correct for the (d_pad - d_real) padded lanes where xc == -mu.
    ss = jnp.sum(xc * xc, axis=-1, keepdims=True) - (d_pad - d_real) * mu * mu
    xn = xc * jax.lax.rsqrt(ss * inv_d + eps) * lnw_ref[...] + lnb_ref[...]

    # --- Linear(D, M) + GELU (bf16 operands, f32 accumulation) --------------
    h = jnp.dot(xn.astype(jnp.bfloat16), w1_ref[...],
                preferred_element_type=jnp.float32) + b1_ref[...]
    # TODO(synk): PyTorch nn.GELU() defaults to the exact erf-based GELU; erf
    # lowering is not guaranteed in Mosaic, so the tanh approximation is used
    # (max abs deviation ~1e-3, well inside test tolerance).
    c = math.sqrt(2.0 / math.pi)
    g = 0.5 * h * (1.0 + jnp.tanh(c * (h + 0.044715 * h * h * h)))

    # --- Linear(M, D) + residual --------------------------------------------
    y = jnp.dot(g.astype(jnp.bfloat16), w2_ref[...],
                preferred_element_type=jnp.float32) + b2_ref[...]
    o_ref[...] = (x + y).astype(o_ref.dtype)


def mlp_block(x, ln_w, ln_b, w1, b1, w2, b2, *, eps=1e-5, block_rows=512):
    """x: (..., D).  Returns x + MLP(LayerNorm(x)), matching MLPBlock.forward."""
    orig_shape = x.shape
    D = orig_shape[-1]
    M = w1.shape[1]
    x2 = x.reshape(-1, D)
    T = x2.shape[0]

    Dp = _round_up(D, 128)
    Mp = _round_up(M, 128)
    # Cap the row tile so the f32 hidden activation (TM x Mp) stays <= ~8 MiB,
    # leaving plenty of VMEM headroom for the double-buffered x/out tiles and
    # the resident bf16 weights.
    tm_cap = max(8, ((8 << 20) // (Mp * 4)) // 8 * 8)
    TM = min(block_rows, tm_cap, _round_up(T, 8))
    Tp = _round_up(T, TM)

    # Zero-pad so every lane dim is a multiple of 128; padded weight
    # rows/columns are zero so they contribute nothing to the result.
    x_p = jnp.pad(x2, ((0, Tp - T), (0, Dp - D)))
    lnw_p = jnp.pad(ln_w.reshape(1, D), ((0, 0), (0, Dp - D)))
    lnb_p = jnp.pad(ln_b.reshape(1, D), ((0, 0), (0, Dp - D)))
    w1_p = jnp.pad(w1, ((0, Dp - D), (0, Mp - M))).astype(jnp.bfloat16)
    b1_p = jnp.pad(b1.reshape(1, M), ((0, 0), (0, Mp - M)))
    w2_p = jnp.pad(w2, ((0, Mp - M), (0, Dp - D))).astype(jnp.bfloat16)
    b2_p = jnp.pad(b2.reshape(1, D), ((0, 0), (0, Dp - D)))

    kernel = functools.partial(_mlp_block_kernel, d_real=D, d_pad=Dp, eps=eps)
    out = pl.pallas_call(
        kernel,
        out_shape=jax.ShapeDtypeStruct((Tp, Dp), x.dtype),
        grid=(Tp // TM,),
        in_specs=[
            pl.BlockSpec((TM, Dp), lambda i: (i, 0)),   # x rows (pipelined)
            pl.BlockSpec((1, Dp), lambda i: (0, 0)),    # ln weight (resident)
            pl.BlockSpec((1, Dp), lambda i: (0, 0)),    # ln bias   (resident)
            pl.BlockSpec((Dp, Mp), lambda i: (0, 0)),   # w1 bf16   (resident)
            pl.BlockSpec((1, Mp), lambda i: (0, 0)),    # b1        (resident)
            pl.BlockSpec((Mp, Dp), lambda i: (0, 0)),   # w2 bf16   (resident)
            pl.BlockSpec((1, Dp), lambda i: (0, 0)),    # b2        (resident)
        ],
        out_specs=pl.BlockSpec((TM, Dp), lambda i: (i, 0)),
        compiler_params=pltpu.CompilerParams(
            dimension_semantics=("parallel",),
            vmem_limit_bytes=64 << 20),
    )(x_p, lnw_p, lnb_p, w1_p, b1_p, w2_p, b2_p)

    return out[:T, :D].reshape(orig_shape)


def mlp_block_ref(x, ln_w, ln_b, w1, b1, w2, b2, eps=1e-5):
    """Pure-JAX reference (f32, tanh-approx GELU) for a numerical check."""
    mu = jnp.mean(x, axis=-1, keepdims=True)
    var = jnp.mean(jnp.square(x - mu), axis=-1, keepdims=True)
    xn = (x - mu) * jax.lax.rsqrt(var + eps) * ln_w + ln_b
    h = xn @ w1 + b1
    c = math.sqrt(2.0 / math.pi)
    g = 0.5 * h * (1.0 + jnp.tanh(c * (h + 0.044715 * h * h * h)))
    return x + g @ w2 + b2


if __name__ == "__main__":
    # Module defaults: embedding_dim=48, mlp_size=3072; small batch/seq.
    D, M = 48, 3072
    B, S = 2, 16

    key = jax.random.PRNGKey(0)
    kx, k1, k2, k3, k4 = jax.random.split(key, 5)
    x = jax.random.normal(kx, (B, S, D), jnp.float32)
    ln_w = jnp.ones((D,), jnp.float32)
    ln_b = jnp.zeros((D,), jnp.float32)
    w1 = jax.random.normal(k1, (D, M), jnp.float32) * 0.02
    b1 = jax.random.normal(k2, (M,), jnp.float32) * 0.02
    w2 = jax.random.normal(k3, (M, D), jnp.float32) * 0.02
    b2 = jax.random.normal(k4, (D,), jnp.float32) * 0.02

    out = mlp_block(x, ln_w, ln_b, w1, b1, w2, b2)
    out = jax.block_until_ready(out)

    ref = mlp_block_ref(x, ln_w, ln_b, w1, b1, w2, b2)
    assert out.shape == x.shape
    assert bool(jnp.all(jnp.isfinite(out)))
    assert bool(jnp.allclose(out, ref, atol=3e-2, rtol=3e-2))
    print("KERNEL_OK")
</pallas_src>

<mosaic_0001>
module attributes {stable_mosaic.version = 11 : i64} {
  func.func @_mlp_block_kernel(%arg0: i32, %arg1: memref<32x128xf32, #tpu.memory_space<vmem>>, %arg2: memref<1x128xf32, #tpu.memory_space<vmem>>, %arg3: memref<1x128xf32, #tpu.memory_space<vmem>>, %arg4: memref<128x3072xbf16, #tpu.memory_space<vmem>>, %arg5: memref<1x3072xf32, #tpu.memory_space<vmem>>, %arg6: memref<3072x128xbf16, #tpu.memory_space<vmem>>, %arg7: memref<1x128xf32, #tpu.memory_space<vmem>>, %arg8: memref<32x128xf32, #tpu.memory_space<vmem>>) attributes {dimension_semantics = [#tpu.dimension_semantics<parallel>], iteration_bounds = array<i64: 1>, scalar_prefetch = 0 : i64, scratch_operands = 0 : i64, tpu.core_type = #tpu.core_type<tc>, window_params = [{transform_indices = @transform_0, window_bounds = array<i64: 32, 128>}, {pipeline_mode = #tpu.pipeline_mode<synchronous>, transform_indices = @transform_1, window_bounds = array<i64: 1, 128>}, {pipeline_mode = #tpu.pipeline_mode<synchronous>, transform_indices = @transform_2, window_bounds = array<i64: 1, 128>}, {pipeline_mode = #tpu.pipeline_mode<synchronous>, transform_indices = @transform_3, window_bounds = array<i64: 128, 3072>}, {pipeline_mode = #tpu.pipeline_mode<synchronous>, transform_indices = @transform_4, window_bounds = array<i64: 1, 3072>}, {pipeline_mode = #tpu.pipeline_mode<synchronous>, transform_indices = @transform_5, window_bounds = array<i64: 3072, 128>}, {pipeline_mode = #tpu.pipeline_mode<synchronous>, transform_indices = @transform_6, window_bounds = array<i64: 1, 128>}, {transform_indices = @transform_7, window_bounds = array<i64: 32, 128>}]} {
    %c0 = arith.constant 0 : index
    %c0_0 = arith.constant 0 : index
    %0 = vector.load %arg1[%c0, %c0_0] : memref<32x128xf32, #tpu.memory_space<vmem>>, vector<32x128xf32>
    %cst = arith.constant dense<0.000000e+00> : vector<32xf32>
    %1 = vector.multi_reduction <add>, %0, %cst [1] : vector<32x128xf32> to vector<32xf32>
    %2 = vector.shape_cast %1 : vector<32xf32> to vector<32x1xf32>
    %cst_1 = arith.constant 0.020833334 : f32
    %3 = vector.broadcast %cst_1 : f32 to vector<32x1xf32>
    %4 = arith.mulf %2, %3 : vector<32x1xf32>
    %5 = vector.broadcast %4 : vector<32x1xf32> to vector<32x128xf32>
    %6 = arith.subf %0, %5 : vector<32x128xf32>
    %7 = arith.mulf %6, %6 : vector<32x128xf32>
    %cst_2 = arith.constant dense<0.000000e+00> : vector<32xf32>
    %8 = vector.multi_reduction <add>, %7, %cst_2 [1] : vector<32x128xf32> to vector<32xf32>
    %9 = vector.shape_cast %8 : vector<32xf32> to vector<32x1xf32>
    %cst_3 = arith.constant 8.000000e+01 : f32
    %10 = vector.broadcast %cst_3 : f32 to vector<32x1xf32>
    %11 = arith.mulf %10, %4 : vector<32x1xf32>
    %12 = arith.mulf %11, %4 : vector<32x1xf32>
    %13 = arith.subf %9, %12 : vector<32x1xf32>
    %cst_4 = arith.constant 0.020833334 : f32
    %14 = vector.broadcast %cst_4 : f32 to vector<32x1xf32>
    %15 = arith.mulf %13, %14 : vector<32x1xf32>
    %cst_5 = arith.constant 9.99999974E-6 : f32
    %16 = vector.broadcast %cst_5 : f32 to vector<32x1xf32>
    %17 = arith.addf %15, %16 : vector<32x1xf32>
    %18 = math.rsqrt %17 : vector<32x1xf32>
    %19 = vector.broadcast %18 : vector<32x1xf32> to vector<32x128xf32>
    %20 = arith.mulf %6, %19 : vector<32x128xf32>
    %c0_6 = arith.constant 0 : index
    %c0_7 = arith.constant 0 : index
    %21 = vector.load %arg2[%c0_6, %c0_7] : memref<1x128xf32, #tpu.memory_space<vmem>>, vector<1x128xf32>
    %22 = vector.broadcast %21 : vector<1x128xf32> to vector<32x128xf32>
    %23 = arith.mulf %20, %22 : vector<32x128xf32>
    %c0_8 = arith.constant 0 : index
    %c0_9 = arith.constant 0 : index
    %24 = vector.load %arg3[%c0_8, %c0_9] : memref<1x128xf32, #tpu.memory_space<vmem>>, vector<1x128xf32>
    %25 = vector.broadcast %24 : vector<1x128xf32> to vector<32x128xf32>
    %26 = arith.addf %23, %25 : vector<32x128xf32>
    %27 = arith.truncf %26 : vector<32x128xf32> to vector<32x128xbf16>
    %c0_10 = arith.constant 0 : index
    %c0_11 = arith.constant 0 : index
    %28 = vector.load %arg4[%c0_10, %c0_11] : memref<128x3072xbf16, #tpu.memory_space<vmem>>, vector<128x3072xbf16>
    %cst_12 = arith.constant dense<0.000000e+00> : vector<32x3072xf32>
    %29 = tpu.matmul %27, %28, %cst_12 {dimension_numbers = #tpu.dot_dimension_numbers<[1], [0], [0], [1], [0, 0, 1, 1], [], []>} : vector<32x128xbf16>, vector<128x3072xbf16>, vector<32x3072xf32> -> vector<32x3072xf32>
    %c0_13 = arith.constant 0 : index
    %c0_14 = arith.constant 0 : index
    %30 = vector.load %arg5[%c0_13, %c0_14] : memref<1x3072xf32, #tpu.memory_space<vmem>>, vector<1x3072xf32>
    %31 = vector.broadcast %30 : vector<1x3072xf32> to vector<32x3072xf32>
    %32 = arith.addf %29, %31 : vector<32x3072xf32>
    %cst_15 = arith.constant 5.000000e-01 : f32
    %33 = vector.broadcast %cst_15 : f32 to vector<32x3072xf32>
    %34 = arith.mulf %33, %32 : vector<32x3072xf32>
    %cst_16 = arith.constant 4.471500e-02 : f32
    %35 = vector.broadcast %cst_16 : f32 to vector<32x3072xf32>
    %36 = arith.mulf %35, %32 : vector<32x3072xf32>
    %37 = arith.mulf %36, %32 : vector<32x3072xf32>
    %38 = arith.mulf %37, %32 : vector<32x3072xf32>
    %39 = arith.addf %32, %38 : vector<32x3072xf32>
    %cst_17 = arith.constant 0.797884583 : f32
    %40 = vector.broadcast %cst_17 : f32 to vector<32x3072xf32>
    %41 = arith.mulf %40, %39 : vector<32x3072xf32>
    %42 = math.tanh %41 : vector<32x3072xf32>
    %cst_18 = arith.constant 1.000000e+00 : f32
    %43 = vector.broadcast %cst_18 : f32 to vector<32x3072xf32>
    %44 = arith.addf %43, %42 : vector<32x3072xf32>
    %45 = arith.mulf %34, %44 : vector<32x3072xf32>
    %46 = arith.truncf %45 : vector<32x3072xf32> to vector<32x3072xbf16>
    %c0_19 = arith.constant 0 : index
    %c0_20 = arith.constant 0 : index
    %47 = vector.load %arg6[%c0_19, %c0_20] : memref<3072x128xbf16, #tpu.memory_space<vmem>>, vector<3072x128xbf16>
    %cst_21 = arith.constant dense<0.000000e+00> : vector<32x128xf32>
    %48 = tpu.matmul %46, %47, %cst_21 {dimension_numbers = #tpu.dot_dimension_numbers<[1], [0], [0], [1], [0, 0, 1, 1], [], []>} : vector<32x3072xbf16>, vector<3072x128xbf16>, vector<32x128xf32> -> vector<32x128xf32>
    %c0_22 = arith.constant 0 : index
    %c0_23 = arith.constant 0 : index
    %49 = vector.load %arg7[%c0_22, %c0_23] : memref<1x128xf32, #tpu.memory_space<vmem>>, vector<1x128xf32>
    %50 = vector.broadcast %49 : vector<1x128xf32> to vector<32x128xf32>
    %51 = arith.addf %48, %50 : vector<32x128xf32>
    %52 = arith.addf %0, %51 : vector<32x128xf32>
    %c0_24 = arith.constant 0 : index
    %c0_25 = arith.constant 0 : index
    %53 = vector.load %arg8[%c0_24, %c0_25] : memref<32x128xf32, #tpu.memory_space<vmem>>, vector<32x128xf32>
    tpu.vector_store %arg8[%c0_24, %c0_25], %52 {strides = array<i32>} : memref<32x128xf32, #tpu.memory_space<vmem>>, vector<32x128xf32>,
    return
  }
  func.func @transform_0(%arg0: i32) -> (i32, i32) {
    %c0_i32 = arith.constant 0 : i32
    %c0_i32_0 = arith.constant 0 : i32
    return %arg0, %c0_i32 : i32, i32
  }
  func.func @transform_1(%arg0: i32) -> (i32, i32) {
    %c0_i32 = arith.constant 0 : i32
    %c0_i32_0 = arith.constant 0 : i32
    %c0_i32_1 = arith.constant 0 : i32
    return %c0_i32, %c0_i32_0 : i32, i32
  }
  func.func @transform_2(%arg0: i32) -> (i32, i32) {
    %c0_i32 = arith.constant 0 : i32
    %c0_i32_0 = arith.constant 0 : i32
    %c0_i32_1 = arith.constant 0 : i32
    return %c0_i32, %c0_i32_0 : i32, i32
  }
  func.func @transform_3(%arg0: i32) -> (i32, i32) {
    %c0_i32 = arith.constant 0 : i32
    %c0_i32_0 = arith.constant 0 : i32
    %c0_i32_1 = arith.constant 0 : i32
    return %c0_i32, %c0_i32_0 : i32, i32
  }
  func.func @transform_4(%arg0: i32) -> (i32, i32) {
    %c0_i32 = arith.constant 0 : i32
    %c0_i32_0 = arith.constant 0 : i32
    %c0_i32_1 = arith.constant 0 : i32
    return %c0_i32, %c0_i32_0 : i32, i32
  }
  func.func @transform_5(%arg0: i32) -> (i32, i32) {
    %c0_i32 = arith.constant 0 : i32
    %c0_i32_0 = arith.constant 0 : i32
    %c0_i32_1 = arith.constant 0 : i32
    return %c0_i32, %c0_i32_0 : i32, i32
  }
  func.func @transform_6(%arg0: i32) -> (i32, i32) {
    %c0_i32 = arith.constant 0 : i32
    %c0_i32_0 = arith.constant 0 : i32
    %c0_i32_1 = arith.constant 0 : i32
    return %c0_i32, %c0_i32_0 : i32, i32
  }
  func.func @transform_7(%arg0: i32) -> (i32, i32) {
    %c0_i32 = arith.constant 0 : i32
    %c0_i32_0 = arith.constant 0 : i32
    return %arg0, %c0_i32 : i32, i32
  }
}

</mosaic_0001>

<llo_original>
// kernel: tpu_custom_call.1
$region0: #{tpu_custom_call.1}
  #allocation0 [shape = 'u32[]', space=smem, size = 0x4, offset = 0x4, fixed_abs, tag = 'smem constant byte address 0x4 - core index']
  #allocation1 [shape = 'u32[144,128]{1,0:T(1,128)}', space=vmem, size = 0x12000, scoped, tag = 'internal scratch']
  %s0 = inlined_call_operand.hbm [shape: f32[32,128], index: 0, kind: input, shape index: {}]
  %s1 = inlined_call_operand.vmem [shape: f32[1,128], index: 1, kind: input, shape index: {}]
  %s2 = inlined_call_operand.vmem [shape: f32[1,128], index: 2, kind: input, shape index: {}]
  %s3 = inlined_call_operand.hbm [shape: bf16[128,3072], index: 3, kind: input, shape index: {}]
  %s4 = inlined_call_operand.hbm [shape: f32[1,3072], index: 4, kind: input, shape index: {}]
  %s5 = inlined_call_operand.hbm [shape: bf16[3072,128], index: 5, kind: input, shape index: {}]
  %s6 = inlined_call_operand.vmem [shape: f32[1,128], index: 6, kind: input, shape index: {}]
  %s7 = inlined_call_operand.hbm [shape: f32[32,128], index: 7, kind: output, shape index: {}]
  %s8 = sld [smem:[#allocation0]]
  $region54: #{tpu_custom_call.1} parent=0
    _
  %s10 = ssub.s32 1, %s8
  %s11 = scalar_select 0, %s10, %s8
  $region1: #{tpu_custom_call.1} parent=0
    #allocation2 [shape = 'u8[16384]{0}', space=vmem, size = 0x4000, scoped, tag = 'input window, operand 0, single buffered']
    #allocation3 [shape = 's32[1]{0}', space=sflag, size = 0x4, scoped, tag = 'scoped memory for tpu_custom_call.1']
    #allocation4 [shape = 's32[1]{0}', space=sflag, size = 0x4, scoped, tag = 'scoped memory for tpu_custom_call.1']
    #allocation5 [shape = 'u8[786432]{0}', space=vmem, size = 0xc0000, scoped, tag = 'input window, operand 3, single buffered']
    #allocation6 [shape = 's32[1]{0}', space=sflag, size = 0x4, scoped, tag = 'scoped memory for tpu_custom_call.1']
    #allocation7 [shape = 'u8[12288]{0}', space=vmem, size = 0x3000, scoped, tag = 'input window, operand 4, single buffered']
    #allocation8 [shape = 'u8[786432]{0}', space=vmem, size = 0xc0000, scoped, tag = 'input window, operand 5, single buffered']
    #allocation9 [shape = 's32[1]{0}', space=sflag, size = 0x4, scoped, tag = 'scoped memory for tpu_custom_call.1']
    #allocation10 [shape = 'u8[16384]{0}', space=vmem, size = 0x4000, scoped, tag = 'output window, operand 0, single buffered']
    %12 = vsyncpa [#allocation3], 0
    %13 = vsyncpa [#allocation6], 0
    %14 = vsyncpa [#allocation9], 0
    %15 = vsyncpa [#allocation4], 0
    // Predicated region
    $region2: #{tpu_custom_call.1} parent=1 // pred_check
      _
    $region3: #{tpu_custom_call.1} parent=1 // pred_check_branch
      %17 = sbr.rel (0) target = $region5
    $region4: #{tpu_custom_call.1} parent=1 // pred_region
      %s19 = ssub.s32 512, 512
      %20 = vsyncadd [#allocation3], %s19
      %s21 = sshll.u32 [#allocation2], 4
      %s22 = int_to_ptr.vmem [resolvable:$true] %s21
      %27 = dma.hbm_to_vmem [thread:$0]  %s0, 512, %s22, [#allocation3], 128, 128, 8
    $region5: #{tpu_custom_call.1} parent=1 // pred_fallthru
      _
    // Predicated region
    $region6: #{tpu_custom_call.1} parent=1 // pred_check
      _
    $region7: #{tpu_custom_call.1} parent=1 // pred_check_branch
      %29 = sbr.rel (0) target = $region9
    $region8: #{tpu_custom_call.1} parent=1 // pred_region
      _
    $region9: #{tpu_custom_call.1} parent=1 // pred_fallthru
      _
    // Predicated region
    $region10: #{tpu_custom_call.1} parent=1 // pred_check
      _
    $region11: #{tpu_custom_call.1} parent=1 // pred_check_branch
      %31 = sbr.rel (0) target = $region13
    $region12: #{tpu_custom_call.1} parent=1 // pred_region
      _
    $region13: #{tpu_custom_call.1} parent=1 // pred_fallthru
      _
    // Predicated region
    $region14: #{tpu_custom_call.1} parent=1 // pred_check
      _
    $region15: #{tpu_custom_call.1} parent=1 // pred_check_branch
      %33 = sbr.rel (0) target = $region17
    $region16: #{tpu_custom_call.1} parent=1 // pred_region
      %s35 = ssub.s32 24576, 24576
      %36 = vsyncadd [#allocation6], %s35
      %s37 = sshll.u32 [#allocation5], 4
      %s38 = int_to_ptr.vmem [resolvable:$true] %s37
      %43 = dma.hbm_to_vmem [thread:$0]  %s3, 24576, %s38, [#allocation6], 1536, 1536, 96
    $region17: #{tpu_custom_call.1} parent=1 // pred_fallthru
      _
    // Predicated region
    $region18: #{tpu_custom_call.1} parent=1 // pred_check
      _
    $region19: #{tpu_custom_call.1} parent=1 // pred_check_branch
      %45 = sbr.rel (0) target = $region21
    $region20: #{tpu_custom_call.1} parent=1 // pred_region
      %s47 = ssub.s32 384, 384
      %48 = vsyncadd [#allocation6], %s47
      %s50 = sshll.u32 [#allocation7], 4
      %s51 = int_to_ptr.vmem [resolvable:$true] %s50
      %53 = dma.hbm_to_vmem [thread:$0]  %s4, 384, %s51, [#allocation6]
    $region21: #{tpu_custom_call.1} parent=1 // pred_fallthru
      _
    // Predicated region
    $region22: #{tpu_custom_call.1} parent=1 // pred_check
      _
    $region23: #{tpu_custom_call.1} parent=1 // pred_check_branch
      %55 = sbr.rel (0) target = $region25
    $region24: #{tpu_custom_call.1} parent=1 // pred_region
      %s57 = ssub.s32 24576, 24576
      %58 = vsyncadd [#allocation9], %s57
      %s59 = sshll.u32 [#allocation8], 4
      %s60 = int_to_ptr.vmem [resolvable:$true] %s59
      %65 = dma.hbm_to_vmem [thread:$0]  %s5, 24576, %s60, [#allocation9], 64, 64, 4
    $region25: #{tpu_custom_call.1} parent=1 // pred_fallthru
      _
    // Predicated region
    $region26: #{tpu_custom_call.1} parent=1 // pred_check
      _
    $region27: #{tpu_custom_call.1} parent=1 // pred_check_branch
      %67 = sbr.rel (0) target = $region29
    $region28: #{tpu_custom_call.1} parent=1 // pred_region
      _
    $region29: #{tpu_custom_call.1} parent=1 // pred_fallthru
      _
    // Predicated region
    $region30: #{tpu_custom_call.1} parent=1 // pred_check
      _
    $region31: #{tpu_custom_call.1} parent=1 // pred_check_branch
      %69 = sbr.rel (0) target = $region33
    $region32: #{tpu_custom_call.1} parent=1 // pred_region
      %70 = dma.done [#allocation3], 512
    $region33: #{tpu_custom_call.1} parent=1 // pred_fallthru
      _
    // Predicated region
    $region34: #{tpu_custom_call.1} parent=1 // pred_check
      _
    $region35: #{tpu_custom_call.1} parent=1 // pred_check_branch
      %72 = sbr.rel (0) target = $region37
    $region36: #{tpu_custom_call.1} parent=1 // pred_region
      %73 = dma.done [#allocation6], 24576
    $region37: #{tpu_custom_call.1} parent=1 // pred_fallthru
      _
    // Predicated region
    $region38: #{tpu_custom_call.1} parent=1 // pred_check
      _
    $region39: #{tpu_custom_call.1} parent=1 // pred_check_branch
      %75 = sbr.rel (0) target = $region41
    $region40: #{tpu_custom_call.1} parent=1 // pred_region
      %76 = dma.done [#allocation6], 384
    $region41: #{tpu_custom_call.1} parent=1 // pred_fallthru
      _
    // Predicated region
    $region42: #{tpu_custom_call.1} parent=1 // pred_check
      _
    $region43: #{tpu_custom_call.1} parent=1 // pred_check_branch
      %78 = sbr.rel (0) target = $region45
    $region44: #{tpu_custom_call.1} parent=1 // pred_region
      %79 = dma.done [#allocation9], 24576
    $region45: #{tpu_custom_call.1} parent=1 // pred_fallthru
      _
    %v81 = vld [vmem:[#allocation2] sm:$0xff]
    %v82 = vld [vmem:[#allocation2 + $0x8] sm:$0xff]
    %v83 = vld [vmem:[#allocation2 + $0x10] sm:$0xff]
    %v84 = vld [vmem:[#allocation2 + $0x18] sm:$0xff]
    %85 = vadd.xlane.f32.xlu0 %v81
    %v86 = vpop.xlane.xlu0 %85
    %87 = vadd.xlane.f32.xlu0 %v82
    %v88 = vpop.xlane.xlu0 %87
    %89 = vadd.xlane.f32.xlu0 %v83
    %v90 = vpop.xlane.xlu0 %89
    %91 = vadd.xlane.f32.xlu0 %v84
    %v92 = vpop.xlane.xlu0 %91
    %v93 = vmul.f32 %v86, 0.020833334
    %v94 = vmul.f32 %v88, 0.020833334
    %v95 = vmul.f32 %v90, 0.020833334
    %v96 = vmul.f32 %v92, 0.020833334
    %v97 = vsub.f32 %v81, %v93
    %v98 = vsub.f32 %v82, %v94
    %v99 = vsub.f32 %v83, %v95
    %v100 = vsub.f32 %v84, %v96
    %v101 = vmul.f32 %v97, %v97
    %v102 = vmul.f32 %v98, %v98
    %v103 = vmul.f32 %v99, %v99
    %v104 = vmul.f32 %v100, %v100
    %105 = vadd.xlane.f32.xlu0 %v101
    %v106 = vpop.xlane.xlu0 %105
    %107 = vadd.xlane.f32.xlu0 %v102
    %v108 = vpop.xlane.xlu0 %107
    %109 = vadd.xlane.f32.xlu0 %v103
    %v110 = vpop.xlane.xlu0 %109
    %111 = vadd.xlane.f32.xlu0 %v104
    %v112 = vpop.xlane.xlu0 %111
    %v113 = vmul.f32 %v93, 80.0
    %v114 = vmul.f32 %v94, 80.0
    %v115 = vmul.f32 %v95, 80.0
    %v116 = vmul.f32 %v96, 80.0
    %v117 = vmul.f32 %v113, %v93
    %v118 = vmul.f32 %v114, %v94
    %v119 = vmul.f32 %v115, %v95
    %v120 = vmul.f32 %v116, %v96
    %v121 = vsub.f32 %v106, %v117
    %v122 = vsub.f32 %v108, %v118
    %v123 = vsub.f32 %v110, %v119
    %v124 = vsub.f32 %v112, %v120
    %v125 = vmul.f32 %v121, 0.020833334
    %v126 = vmul.f32 %v122, 0.020833334
    %v127 = vmul.f32 %v123, 0.020833334
    %v128 = vmul.f32 %v124, 0.020833334
    %v129 = vadd.f32 %v125, 1e-05
    %v130 = vadd.f32 %v126, 1e-05
    %v131 = vadd.f32 %v127, 1e-05
    %v132 = vadd.f32 %v128, 1e-05
    %v133 = vrsqrt.pop %v129
    %v134 = vrsqrt.pop %v130
    %v135 = vrsqrt.pop %v131
    %v136 = vrsqrt.pop %v132
    %v137 = vmul.f32 %v97, %v133
    %v138 = vmul.f32 %v98, %v134
    %v139 = vmul.f32 %v99, %v135
    %v140 = vmul.f32 %v100, %v136
    %v141 = vld [vmem:[%s1] sm:$0x1]
    %v143 = vlaneseq
    %v144 = vshrl.u32 %v143, 7
    %v145 = vsub.s32 0, %v144
    %v146 = vrot.slane %v141, %v145
    %v148 = vmul.f32 %v137, %v146
    %v149 = vmul.f32 %v138, %v146
    %v150 = vmul.f32 %v139, %v146
    %v151 = vmul.f32 %v140, %v146
    %v152 = vld [vmem:[%s2] sm:$0x1]
    %v154 = vlaneseq
    %v155 = vshrl.u32 %v154, 7
    %v156 = vsub.s32 0, %v155
    %v157 = vrot.slane %v152, %v156
    %v159 = vadd.f32 %v148, %v157
    %v160 = vadd.f32 %v149, %v157
    %v161 = vadd.f32 %v150, %v157
    %v162 = vadd.f32 %v151, %v157
    %v163 = vpack.c.bf16 %v160, %v159
    %v164 = vpack.c.bf16 %v162, %v161
    %v165 = vld [vmem:[#allocation5] sm:$0xff]
    %v166 = vld [vmem:[#allocation5 + $0x8] sm:$0xff]
    %v167 = vld [vmem:[#allocation5 + $0x10] sm:$0xff]
    %v168 = vld [vmem:[#allocation5 + $0x18] sm:$0xff]
    %v169 = vld [vmem:[#allocation5 + $0x20] sm:$0xff]
    %v170 = vld [vmem:[#allocation5 + $0x28] sm:$0xff]
    %v171 = vld [vmem:[#allocation5 + $0x30] sm:$0xff]
    %v172 = vld [vmem:[#allocation5 + $0x38] sm:$0xff]
    %v173 = vld [vmem:[#allocation5 + $0x40] sm:$0xff]
    %v174 = vld [vmem:[#allocation5 + $0x48] sm:$0xff]
    %v175 = vld [vmem:[#allocation5 + $0x50] sm:$0xff]
    %v176 = vld [vmem:[#allocation5 + $0x58] sm:$0xff]
    %v177 = vld [vmem:[#allocation5 + $0x60] sm:$0xff]
    %v178 = vld [vmem:[#allocation5 + $0x68] sm:$0xff]
    %v179 = vld [vmem:[#allocation5 + $0x70] sm:$0xff]
    %v180 = vld [vmem:[#allocation5 + $0x78] sm:$0xff]
    %v181 = vld [vmem:[#allocation5 + $0x80] sm:$0xff]
    %v182 = vld [vmem:[#allocation5 + $0x88] sm:$0xff]
    %v183 = vld [vmem:[#allocation5 + $0x90] sm:$0xff]
    %v184 = vld [vmem:[#allocation5 + $0x98] sm:$0xff]
    %v185 = vld [vmem:[#allocation5 + $0xa0] sm:$0xff]
    %v186 = vld [vmem:[#allocation5 + $0xa8] sm:$0xff]
    %v187 = vld [vmem:[#allocation5 + $0xb0] sm:$0xff]
    %v188 = vld [vmem:[#allocation5 + $0xb8] sm:$0xff]
    %v189 = vld [vmem:[#allocation5 + $0xc0] sm:$0xff]
    %v190 = vld [vmem:[#allocation5 + $0xc8] sm:$0xff]
    %v191 = vld [vmem:[#allocation5 + $0xd0] sm:$0xff]
    %v192 = vld [vmem:[#allocation5 + $0xd8] sm:$0xff]
    %v193 = vld [vmem:[#allocation5 + $0xe0] sm:$0xff]
    %v194 = vld [vmem:[#allocation5 + $0xe8] sm:$0xff]
    %v195 = vld [vmem:[#allocation5 + $0xf0] sm:$0xff]
    %v196 = vld [vmem:[#allocation5 + $0xf8] sm:$0xff]
    %v197 = vld [vmem:[#allocation5 + $0x100] sm:$0xff]
    %v198 = vld [vmem:[#allocation5 + $0x108] sm:$0xff]
    %v199 = vld [vmem:[#allocation5 + $0x110] sm:$0xff]
    %v200 = vld [vmem:[#allocation5 + $0x118] sm:$0xff]
    %v201 = vld [vmem:[#allocation5 + $0x120] sm:$0xff]
    %v202 = vld [vmem:[#allocation5 + $0x128] sm:$0xff]
    %v203 = vld [vmem:[#allocation5 + $0x130] sm:$0xff]
    %v204 = vld [vmem:[#allocation5 + $0x138] sm:$0xff]
    %v205 = vld [vmem:[#allocation5 + $0x140] sm:$0xff]
    %v206 = vld [vmem:[#allocation5 + $0x148] sm:$0xff]
    %v207 = vld [vmem:[#allocation5 + $0x150] sm:$0xff]
    %v208 = vld [vmem:[#allocation5 + $0x158] sm:$0xff]
    %v209 = vld [vmem:[#allocation5 + $0x160] sm:$0xff]
    %v210 = vld [vmem:[#allocation5 + $0x168] sm:$0xff]
    %v211 = vld [vmem:[#allocation5 + $0x170] sm:$0xff]
    %v212 = vld [vmem:[#allocation5 + $0x178] sm:$0xff]
    %v213 = vld [vmem:[#allocation5 + $0x180] sm:$0xff]
    %v214 = vld [vmem:[#allocation5 + $0x188] sm:$0xff]
    %v215 = vld [vmem:[#allocation5 + $0x190] sm:$0xff]
    %v216 = vld [vmem:[#allocation5 + $0x198] sm:$0xff]
    %v217 = vld [vmem:[#allocation5 + $0x1a0] sm:$0xff]
    %v218 = vld [vmem:[#allocation5 + $0x1a8] sm:$0xff]
    %v219 = vld [vmem:[#allocation5 + $0x1b0] sm:$0xff]
    %v220 = vld [vmem:[#allocation5 + $0x1b8] sm:$0xff]
    %v221 = vld [vmem:[#allocation5 + $0x1c0] sm:$0xff]
    %v222 = vld [vmem:[#allocation5 + $0x1c8] sm:$0xff]
    %v223 = vld [vmem:[#allocation5 + $0x1d0] sm:$0xff]
    %v224 = vld [vmem:[#allocation5 + $0x1d8] sm:$0xff]
    %v225 = vld [vmem:[#allocation5 + $0x1e0] sm:$0xff]
    %v226 = vld [vmem:[#allocation5 + $0x1e8] sm:$0xff]
    %v227 = vld [vmem:[#allocation5 + $0x1f0] sm:$0xff]
    %v228 = vld [vmem:[#allocation5 + $0x1f8] sm:$0xff]
    %v229 = vld [vmem:[#allocation5 + $0x200] sm:$0xff]
    %v230 = vld [vmem:[#allocation5 + $0x208] sm:$0xff]
    %v231 = vld [vmem:[#allocation5 + $0x210] sm:$0xff]
    %v232 = vld [vmem:[#allocation5 + $0x218] sm:$0xff]
    %v233 = vld [vmem:[#allocation5 + $0x220] sm:$0xff]
    %v234 = vld [vmem:[#allocation5 + $0x228] sm:$0xff]
    %v235 = vld [vmem:[#allocation5 + $0x230] sm:$0xff]
    %v236 = vld [vmem:[#allocation5 + $0x238] sm:$0xff]
    %v237 = vld [vmem:[#allocation5 + $0x240] sm:$0xff]
    %v238 = vld [vmem:[#allocation5 + $0x248] sm:$0xff]
    %v239 = vld [vmem:[#allocation5 + $0x250] sm:$0xff]
    %v240 = vld [vmem:[#allocation5 + $0x258] sm:$0xff]
    %v241 = vld [vmem:[#allocation5 + $0x260] sm:$0xff]
    %v242 = vld [vmem:[#allocation5 + $0x268] sm:$0xff]
    %v243 = vld [vmem:[#allocation5 + $0x270] sm:$0xff]
    %v244 = vld [vmem:[#allocation5 + $0x278] sm:$0xff]
    %v245 = vld [vmem:[#allocation5 + $0x280] sm:$0xff]
    %v246 = vld [vmem:[#allocation5 + $0x288] sm:$0xff]
    %v247 = vld [vmem:[#allocation5 + $0x290] sm:$0xff]
    %v248 = vld [vmem:[#allocation5 + $0x298] sm:$0xff]
    %v249 = vld [vmem:[#allocation5 + $0x2a0] sm:$0xff]
    %v250 = vld [vmem:[#allocation5 + $0x2a8] sm:$0xff]
    %v251 = vld [vmem:[#allocation5 + $0x2b0] sm:$0xff]
    %v252 = vld [vmem:[#allocation5 + $0x2b8] sm:$0xff]
    %v253 = vld [vmem:[#allocation5 + $0x2c0] sm:$0xff]
    %v254 = vld [vmem:[#allocation5 + $0x2c8] sm:$0xff]
    %v255 = vld [vmem:[#allocation5 + $0x2d0] sm:$0xff]
    %v256 = vld [vmem:[#allocation5 + $0x2d8] sm:$0xff]
    %v257 = vld [vmem:[#allocation5 + $0x2e0] sm:$0xff]
    %v258 = vld [vmem:[#allocation5 + $0x2e8] sm:$0xff]
    %v259 = vld [vmem:[#allocation5 + $0x2f0] sm:$0xff]
    %v260 = vld [vmem:[#allocation5 + $0x2f8] sm:$0xff]
    %v261 = vld [vmem:[#allocation5 + $0x300] sm:$0xff]
    %v262 = vld [vmem:[#allocation5 + $0x308] sm:$0xff]
    %v263 = vld [vmem:[#allocation5 + $0x310] sm:$0xff]
    %v264 = vld [vmem:[#allocation5 + $0x318] sm:$0xff]
    %v265 = vld [vmem:[#allocation5 + $0x320] sm:$0xff]
    %v266 = vld [vmem:[#allocation5 + $0x328] sm:$0xff]
    %v267 = vld [vmem:[#allocation5 + $0x330] sm:$0xff]
    %v268 = vld [vmem:[#allocation5 + $0x338] sm:$0xff]
    %v269 = vld [vmem:[#allocation5 + $0x340] sm:$0xff]
    %v270 = vld [vmem:[#allocation5 + $0x348] sm:$0xff]
    %v271 = vld [vmem:[#allocation5 + $0x350] sm:$0xff]
    %v272 = vld [vmem:[#allocation5 + $0x358] sm:$0xff]
    %v273 = vld [vmem:[#allocation5 + $0x360] sm:$0xff]
    %v274 = vld [vmem:[#allocation5 + $0x368] sm:$0xff]
    %v275 = vld [vmem:[#allocation5 + $0x370] sm:$0xff]
    %v276 = vld [vmem:[#allocation5 + $0x378] sm:$0xff]
    %v277 = vld [vmem:[#allocation5 + $0x380] sm:$0xff]
    %v278 = vld [vmem:[#allocation5 + $0x388] sm:$0xff]
    %v279 = vld [vmem:[#allocation5 + $0x390] sm:$0xff]
    %v280 = vld [vmem:[#allocation5 + $0x398] sm:$0xff]
    %v281 = vld [vmem:[#allocation5 + $0x3a0] sm:$0xff]
    %v282 = vld [vmem:[#allocation5 + $0x3a8] sm:$0xff]
    %v283 = vld [vmem:[#allocation5 + $0x3b0] sm:$0xff]
    %v284 = vld [vmem:[#allocation5 + $0x3b8] sm:$0xff]
    %v285 = vld [vmem:[#allocation5 + $0x3c0] sm:$0xff]
    %v286 = vld [vmem:[#allocation5 + $0x3c8] sm:$0xff]
    %v287 = vld [vmem:[#allocation5 + $0x3d0] sm:$0xff]
    %v288 = vld [vmem:[#allocation5 + $0x3d8] sm:$0xff]
    %v289 = vld [vmem:[#allocation5 + $0x3e0] sm:$0xff]
    %v290 = vld [vmem:[#allocation5 + $0x3e8] sm:$0xff]
    %v291 = vld [vmem:[#allocation5 + $0x3f0] sm:$0xff]
    %v292 = vld [vmem:[#allocation5 + $0x3f8] sm:$0xff]
    %v293 = vld [vmem:[#allocation5 + $0x400] sm:$0xff]
    %v294 = vld [vmem:[#allocation5 + $0x408] sm:$0xff]
    %v295 = vld [vmem:[#allocation5 + $0x410] sm:$0xff]
    %v296 = vld [vmem:[#allocation5 + $0x418] sm:$0xff]
    %v297 = vld [vmem:[#allocation5 + $0x420] sm:$0xff]
    %v298 = vld [vmem:[#allocation5 + $0x428] sm:$0xff]
    %v299 = vld [vmem:[#allocation5 + $0x430] sm:$0xff]
    %v300 = vld [vmem:[#allocation5 + $0x438] sm:$0xff]
    %v301 = vld [vmem:[#allocation5 + $0x440] sm:$0xff]
    %v302 = vld [vmem:[#allocation5 + $0x448] sm:$0xff]
    %v303 = vld [vmem:[#allocation5 + $0x450] sm:$0xff]
    %v304 = vld [vmem:[#allocation5 + $0x458] sm:$0xff]
    %v305 = vld [vmem:[#allocation5 + $0x460] sm:$0xff]
    %v306 = vld [vmem:[#allocation5 + $0x468] sm:$0xff]
    %v307 = vld [vmem:[#allocation5 + $0x470] sm:$0xff]
    %v308 = vld [vmem:[#allocation5 + $0x478] sm:$0xff]
    %v309 = vld [vmem:[#allocation5 + $0x480] sm:$0xff]
    %v310 = vld [vmem:[#allocation5 + $0x488] sm:$0xff]
    %v311 = vld [vmem:[#allocation5 + $0x490] sm:$0xff]
    %v312 = vld [vmem:[#allocation5 + $0x498] sm:$0xff]
    %v313 = vld [vmem:[#allocation5 + $0x4a0] sm:$0xff]
    %v314 = vld [vmem:[#allocation5 + $0x4a8] sm:$0xff]
    %v315 = vld [vmem:[#allocation5 + $0x4b0] sm:$0xff]
    %v316 = vld [vmem:[#allocation5 + $0x4b8] sm:$0xff]
    %v317 = vld [vmem:[#allocation5 + $0x4c0] sm:$0xff]
    %v318 = vld [vmem:[#allocation5 + $0x4c8] sm:$0xff]
    %v319 = vld [vmem:[#allocation5 + $0x4d0] sm:$0xff]
    %v320 = vld [vmem:[#allocation5 + $0x4d8] sm:$0xff]
    %v321 = vld [vmem:[#allocation5 + $0x4e0] sm:$0xff]
    %v322 = vld [vmem:[#allocation5 + $0x4e8] sm:$0xff]
    %v323 = vld [vmem:[#allocation5 + $0x4f0] sm:$0xff]
    %v324 = vld [vmem:[#allocation5 + $0x4f8] sm:$0xff]
    %v325 = vld [vmem:[#allocation5 + $0x500] sm:$0xff]
    %v326 = vld [vmem:[#allocation5 + $0x508] sm:$0xff]
    %v327 = vld [vmem:[#allocation5 + $0x510] sm:$0xff]
    %v328 = vld [vmem:[#allocation5 + $0x518] sm:$0xff]
    %v329 = vld [vmem:[#allocation5 + $0x520] sm:$0xff]
    %v330 = vld [vmem:[#allocation5 + $0x528] sm:$0xff]
    %v331 = vld [vmem:[#allocation5 + $0x530] sm:$0xff]
    %v332 = vld [vmem:[#allocation5 + $0x538] sm:$0xff]
    %v333 = vld [vmem:[#allocation5 + $0x540] sm:$0xff]
    %v334 = vld [vmem:[#allocation5 + $0x548] sm:$0xff]
    %v335 = vld [vmem:[#allocation5 + $0x550] sm:$0xff]
    %v336 = vld [vmem:[#allocation5 + $0x558] sm:$0xff]
    %v337 = vld [vmem:[#allocation5 + $0x560] sm:$0xff]
    %v338 = vld [vmem:[#allocation5 + $0x568] sm:$0xff]
    %v339 = vld [vmem:[#allocation5 + $0x570] sm:$0xff]
    %v340 = vld [vmem:[#allocation5 + $0x578] sm:$0xff]
    %v341 = vld [vmem:[#allocation5 + $0x580] sm:$0xff]
    %v342 = vld [vmem:[#allocation5 + $0x588] sm:$0xff]
    %v343 = vld [vmem:[#allocation5 + $0x590] sm:$0xff]
    %v344 = vld [vmem:[#allocation5 + $0x598] sm:$0xff]
    %v345 = vld [vmem:[#allocation5 + $0x5a0] sm:$0xff]
    %v346 = vld [vmem:[#allocation5 + $0x5a8] sm:$0xff]
    %v347 = vld [vmem:[#allocation5 + $0x5b0] sm:$0xff]
    %v348 = vld [vmem:[#allocation5 + $0x5b8] sm:$0xff]
    %v349 = vld [vmem:[#allocation5 + $0x5c0] sm:$0xff]
    %v350 = vld [vmem:[#allocation5 + $0x5c8] sm:$0xff]
    %v351 = vld [vmem:[#allocation5 + $0x5d0] sm:$0xff]
    %v352 = vld [vmem:[#allocation5 + $0x5d8] sm:$0xff]
    %v353 = vld [vmem:[#allocation5 + $0x5e0] sm:$0xff]
    %v354 = vld [vmem:[#allocation5 + $0x5e8] sm:$0xff]
    %v355 = vld [vmem:[#allocation5 + $0x5f0] sm:$0xff]
    %v356 = vld [vmem:[#allocation5 + $0x5f8] sm:$0xff]
    %v357 = vld [vmem:[#allocation7] sm:$0xff]
    %v358 = vld [vmem:[#allocation7 + $0x8] sm:$0xff]
    %v359 = vld [vmem:[#allocation7 + $0x10] sm:$0xff]
    %v363 = vlaneseq
    %v364 = vshrl.u32 %v363, 7
    %v365 = vsub.s32 0, %v364
    %v366 = vrot.slane %v357, %v365
    %v367 = vlaneseq
    %v368 = vshrl.u32 %v367, 7
    %v369 = vsub.s32 1, %v368
    %v370 = vrot.slane %v357, %v369
    %v371 = vlaneseq
    %v372 = vshrl.u32 %v371, 7
    %v373 = vsub.s32 2, %v372
    %v374 = vrot.slane %v357, %v373
    %v375 = vlaneseq
    %v376 = vshrl.u32 %v375, 7
    %v377 = vsub.s32 3, %v376
    %v378 = vrot.slane %v357, %v377
    %v379 = vlaneseq
    %v380 = vshrl.u32 %v379, 7
    %v381 = vsub.s32 4, %v380
    %v382 = vrot.slane %v357, %v381
    %v383 = vlaneseq
    %v384 = vshrl.u32 %v383, 7
    %v385 = vsub.s32 5, %v384
    %v386 = vrot.slane %v357, %v385
    %v387 = vlaneseq
    %v388 = vshrl.u32 %v387, 7
    %v389 = vsub.s32 6, %v388
    %v390 = vrot.slane %v357, %v389
    %v391 = vlaneseq
    %v392 = vshrl.u32 %v391, 7
    %v393 = vsub.s32 7, %v392
    %v394 = vrot.slane %v357, %v393
    %v395 = vlaneseq
    %v396 = vshrl.u32 %v395, 7
    %v397 = vsub.s32 0, %v396
    %v398 = vrot.slane %v358, %v397
    %v399 = vlaneseq
    %v400 = vshrl.u32 %v399, 7
    %v401 = vsub.s32 1, %v400
    %v402 = vrot.slane %v358, %v401
    %v403 = vlaneseq
    %v404 = vshrl.u32 %v403, 7
    %v405 = vsub.s32 2, %v404
    %v406 = vrot.slane %v358, %v405
    %v407 = vlaneseq
    %v408 = vshrl.u32 %v407, 7
    %v409 = vsub.s32 3, %v408
    %v410 = vrot.slane %v358, %v409
    %v411 = vlaneseq
    %v412 = vshrl.u32 %v411, 7
    %v413 = vsub.s32 4, %v412
    %v414 = vrot.slane %v358, %v413
    %v415 = vlaneseq
    %v416 = vshrl.u32 %v415, 7
    %v417 = vsub.s32 5, %v416
    %v418 = vrot.slane %v358, %v417
    %v419 = vlaneseq
    %v420 = vshrl.u32 %v419, 7
    %v421 = vsub.s32 6, %v420
    %v422 = vrot.slane %v358, %v421
    %v423 = vlaneseq
    %v424 = vshrl.u32 %v423, 7
    %v425 = vsub.s32 7, %v424
    %v426 = vrot.slane %v358, %v425
    %v427 = vlaneseq
    %v428 = vshrl.u32 %v427, 7
    %v429 = vsub.s32 0, %v428
    %v430 = vrot.slane %v359, %v429
    %v431 = vlaneseq
    %v432 = vshrl.u32 %v431, 7
    %v433 = vsub.s32 1, %v432
    %v434 = vrot.slane %v359, %v433
    %v435 = vlaneseq
    %v436 = vshrl.u32 %v435, 7
    %v437 = vsub.s32 2, %v436
    %v438 = vrot.slane %v359, %v437
    %v439 = vlaneseq
    %v440 = vshrl.u32 %v439, 7
    %v441 = vsub.s32 3, %v440
    %v442 = vrot.slane %v359, %v441
    %v443 = vlaneseq
    %v444 = vshrl.u32 %v443, 7
    %v445 = vsub.s32 4, %v444
    %v446 = vrot.slane %v359, %v445
    %v447 = vlaneseq
    %v448 = vshrl.u32 %v447, 7
    %v449 = vsub.s32 5, %v448
    %v450 = vrot.slane %v359, %v449
    %v451 = vlaneseq
    %v452 = vshrl.u32 %v451, 7
    %v453 = vsub.s32 6, %v452
    %v454 = vrot.slane %v359, %v453
    %v455 = vlaneseq
    %v456 = vshrl.u32 %v455, 7
    %v457 = vsub.s32 7, %v456
    %v458 = vrot.slane %v359, %v457
    %v675 = vunpack.c.l.b16 %v165
    %v676 = vunpack.c.h.b16 %v165
    %v677 = vunpack.c.l.b16 %v166
    %v678 = vunpack.c.h.b16 %v166
    %v679 = vunpack.c.l.b16 %v167
    %v680 = vunpack.c.h.b16 %v167
    %v681 = vunpack.c.l.b16 %v168
    %v682 = vunpack.c.h.b16 %v168
    %v683 = vunpack.c.l.b16 %v169
    %v684 = vunpack.c.h.b16 %v169
    %v685 = vunpack.c.l.b16 %v170
    %v686 = vunpack.c.h.b16 %v170
    %v687 = vunpack.c.l.b16 %v171
    %v688 = vunpack.c.h.b16 %v171
    %v689 = vunpack.c.l.b16 %v172
    %v690 = vunpack.c.h.b16 %v172
    %v691 = vunpack.c.l.b16 %v173
    %v692 = vunpack.c.h.b16 %v173
    %v693 = vunpack.c.l.b16 %v174
    %v694 = vunpack.c.h.b16 %v174
    %v695 = vunpack.c.l.b16 %v175
    %v696 = vunpack.c.h.b16 %v175
    %v697 = vunpack.c.l.b16 %v176
    %v698 = vunpack.c.h.b16 %v176
    %v699 = vunpack.c.l.b16 %v177
    %v700 = vunpack.c.h.b16 %v177
    %v701 = vunpack.c.l.b16 %v178
    %v702 = vunpack.c.h.b16 %v178
    %v703 = vunpack.c.l.b16 %v179
    %v704 = vunpack.c.h.b16 %v179
    %v705 = vunpack.c.l.b16 %v180
    %v706 = vunpack.c.h.b16 %v180
    %v707 = vunpack.c.l.b16 %v181
    %v708 = vunpack.c.h.b16 %v181
    %v709 = vunpack.c.l.b16 %v182
    %v710 = vunpack.c.h.b16 %v182
    %v711 = vunpack.c.l.b16 %v183
    %v712 = vunpack.c.h.b16 %v183
    %v713 = vunpack.c.l.b16 %v184
    %v714 = vunpack.c.h.b16 %v184
    %v715 = vunpack.c.l.b16 %v185
    %v716 = vunpack.c.h.b16 %v185
    %v717 = vunpack.c.l.b16 %v186
    %v718 = vunpack.c.h.b16 %v186
    %v719 = vunpack.c.l.b16 %v187
    %v720 = vunpack.c.h.b16 %v187
    %v721 = vunpack.c.l.b16 %v188
    %v722 = vunpack.c.h.b16 %v188
    %v723 = vunpack.c.l.b16 %v189
    %v724 = vunpack.c.h.b16 %v189
    %v725 = vunpack.c.l.b16 %v190
    %v726 = vunpack.c.h.b16 %v190
    %v727 = vunpack.c.l.b16 %v191
    %v728 = vunpack.c.h.b16 %v191
    %v729 = vunpack.c.l.b16 %v192
    %v730 = vunpack.c.h.b16 %v192
    %v731 = vunpack.c.l.b16 %v193
    %v732 = vunpack.c.h.b16 %v193
    %v733 = vunpack.c.l.b16 %v194
    %v734 = vunpack.c.h.b16 %v194
    %v735 = vunpack.c.l.b16 %v195
    %v736 = vunpack.c.h.b16 %v195
    %v737 = vunpack.c.l.b16 %v196
    %v738 = vunpack.c.h.b16 %v196
    %v739 = vunpack.c.l.b16 %v197
    %v740 = vunpack.c.h.b16 %v197
    %v741 = vunpack.c.l.b16 %v198
    %v742 = vunpack.c.h.b16 %v198
    %v743 = vunpack.c.l.b16 %v199
    %v744 = vunpack.c.h.b16 %v199
    %v745 = vunpack.c.l.b16 %v200
    %v746 = vunpack.c.h.b16 %v200
    %v747 = vunpack.c.l.b16 %v201
    %v748 = vunpack.c.h.b16 %v201
    %v749 = vunpack.c.l.b16 %v202
    %v750 = vunpack.c.h.b16 %v202
    %v751 = vunpack.c.l.b16 %v203
    %v752 = vunpack.c.h.b16 %v203
    %v753 = vunpack.c.l.b16 %v204
    %v754 = vunpack.c.h.b16 %v204
    %v755 = vunpack.c.l.b16 %v205
    %v756 = vunpack.c.h.b16 %v205
    %v757 = vunpack.c.l.b16 %v206
    %v758 = vunpack.c.h.b16 %v206
    %v759 = vunpack.c.l.b16 %v207
    %v760 = vunpack.c.h.b16 %v207
    %v761 = vunpack.c.l.b16 %v208
    %v762 = vunpack.c.h.b16 %v208
    %v763 = vunpack.c.l.b16 %v209
    %v764 = vunpack.c.h.b16 %v209
    %v765 = vunpack.c.l.b16 %v210
    %v766 = vunpack.c.h.b16 %v210
    %v767 = vunpack.c.l.b16 %v211
    %v768 = vunpack.c.h.b16 %v211
    %v769 = vunpack.c.l.b16 %v212
    %v770 = vunpack.c.h.b16 %v212
    %v771 = vunpack.c.l.b16 %v213
    %v772 = vunpack.c.h.b16 %v213
    %v773 = vunpack.c.l.b16 %v214
    %v774 = vunpack.c.h.b16 %v214
    %v775 = vunpack.c.l.b16 %v215
    %v776 = vunpack.c.h.b16 %v215
    %v777 = vunpack.c.l.b16 %v216
    %v778 = vunpack.c.h.b16 %v216
    %v779 = vunpack.c.l.b16 %v217
    %v780 = vunpack.c.h.b16 %v217
    %v781 = vunpack.c.l.b16 %v218
    %v782 = vunpack.c.h.b16 %v218
    %v783 = vunpack.c.l.b16 %v219
    %v784 = vunpack.c.h.b16 %v219
    %v785 = vunpack.c.l.b16 %v220
    %v786 = vunpack.c.h.b16 %v220
    %v787 = vunpack.c.l.b16 %v221
    %v788 = vunpack.c.h.b16 %v221
    %v789 = vunpack.c.l.b16 %v222
    %v790 = vunpack.c.h.b16 %v222
    %v791 = vunpack.c.l.b16 %v223
    %v792 = vunpack.c.h.b16 %v223
    %v793 = vunpack.c.l.b16 %v224
    %v794 = vunpack.c.h.b16 %v224
    %v795 = vunpack.c.l.b16 %v225
    %v796 = vunpack.c.h.b16 %v225
    %v797 = vunpack.c.l.b16 %v226
    %v798 = vunpack.c.h.b16 %v226
    %v799 = vunpack.c.l.b16 %v227
    %v800 = vunpack.c.h.b16 %v227
    %v801 = vunpack.c.l.b16 %v228
    %v802 = vunpack.c.h.b16 %v228
    %v803 = vunpack.c.l.b16 %v229
    %v804 = vunpack.c.h.b16 %v229
    %v805 = vunpack.c.l.b16 %v230
    %v806 = vunpack.c.h.b16 %v230
    %v807 = vunpack.c.l.b16 %v231
    %v808 = vunpack.c.h.b16 %v231
    %v809 = vunpack.c.l.b16 %v232
    %v810 = vunpack.c.h.b16 %v232
    %v811 = vunpack.c.l.b16 %v233
    %v812 = vunpack.c.h.b16 %v233
    %v813 = vunpack.c.l.b16 %v234
    %v814 = vunpack.c.h.b16 %v234
    %v815 = vunpack.c.l.b16 %v235
    %v816 = vunpack.c.h.b16 %v235
    %v817 = vunpack.c.l.b16 %v236
    %v818 = vunpack.c.h.b16 %v236
    %v819 = vunpack.c.l.b16 %v237
    %v820 = vunpack.c.h.b16 %v237
    %v821 = vunpack.c.l.b16 %v238
    %v822 = vunpack.c.h.b16 %v238
    %v823 = vunpack.c.l.b16 %v239
    %v824 = vunpack.c.h.b16 %v239
    %v825 = vunpack.c.l.b16 %v240
    %v826 = vunpack.c.h.b16 %v240
    %v827 = vunpack.c.l.b16 %v241
    %v828 = vunpack.c.h.b16 %v241
    %v829 = vunpack.c.l.b16 %v242
    %v830 = vunpack.c.h.b16 %v242
    %v831 = vunpack.c.l.b16 %v243
    %v832 = vunpack.c.h.b16 %v243
    %v833 = vunpack.c.l.b16 %v244
    %v834 = vunpack.c.h.b16 %v244
    %v835 = vunpack.c.l.b16 %v245
    %v836 = vunpack.c.h.b16 %v245
    %v837 = vunpack.c.l.b16 %v246
    %v838 = vunpack.c.h.b16 %v246
    %v839 = vunpack.c.l.b16 %v247
    %v840 = vunpack.c.h.b16 %v247
    %v841 = vunpack.c.l.b16 %v248
    %v842 = vunpack.c.h.b16 %v248
    %v843 = vunpack.c.l.b16 %v249
    %v844 = vunpack.c.h.b16 %v249
    %v845 = vunpack.c.l.b16 %v250
    %v846 = vunpack.c.h.b16 %v250
    %v847 = vunpack.c.l.b16 %v251
    %v848 = vunpack.c.h.b16 %v251
    %v849 = vunpack.c.l.b16 %v252
    %v850 = vunpack.c.h.b16 %v252
    %v851 = vunpack.c.l.b16 %v253
    %v852 = vunpack.c.h.b16 %v253
    %v853 = vunpack.c.l.b16 %v254
    %v854 = vunpack.c.h.b16 %v254
    %v855 = vunpack.c.l.b16 %v255
    %v856 = vunpack.c.h.b16 %v255
    %v857 = vunpack.c.l.b16 %v256
    %v858 = vunpack.c.h.b16 %v256
    %v859 = vunpack.c.l.b16 %v257
    %v860 = vunpack.c.h.b16 %v257
    %v861 = vunpack.c.l.b16 %v258
    %v862 = vunpack.c.h.b16 %v258
    %v863 = vunpack.c.l.b16 %v259
    %v864 = vunpack.c.h.b16 %v259
    %v865 = vunpack.c.l.b16 %v260
    %v866 = vunpack.c.h.b16 %v260
    %v867 = vunpack.c.l.b16 %v261
    %v868 = vunpack.c.h.b16 %v261
    %v869 = vunpack.c.l.b16 %v262
    %v870 = vunpack.c.h.b16 %v262
    %v871 = vunpack.c.l.b16 %v263
    %v872 = vunpack.c.h.b16 %v263
    %v873 = vunpack.c.l.b16 %v264
    %v874 = vunpack.c.h.b16 %v264
    %v875 = vunpack.c.l.b16 %v265
    %v876 = vunpack.c.h.b16 %v265
    %v877 = vunpack.c.l.b16 %v266
    %v878 = vunpack.c.h.b16 %v266
    %v879 = vunpack.c.l.b16 %v267
    %v880 = vunpack.c.h.b16 %v267
    %v881 = vunpack.c.l.b16 %v268
    %v882 = vunpack.c.h.b16 %v268
    %v883 = vunpack.c.l.b16 %v269
    %v884 = vunpack.c.h.b16 %v269
    %v885 = vunpack.c.l.b16 %v270
    %v886 = vunpack.c.h.b16 %v270
    %v887 = vunpack.c.l.b16 %v271
    %v888 = vunpack.c.h.b16 %v271
    %v889 = vunpack.c.l.b16 %v272
    %v890 = vunpack.c.h.b16 %v272
    %v891 = vunpack.c.l.b16 %v273
    %v892 = vunpack.c.h.b16 %v273
    %v893 = vunpack.c.l.b16 %v274
    %v894 = vunpack.c.h.b16 %v274
    %v895 = vunpack.c.l.b16 %v275
    %v896 = vunpack.c.h.b16 %v275
    %v897 = vunpack.c.l.b16 %v276
    %v898 = vunpack.c.h.b16 %v276
    %v899 = vunpack.c.l.b16 %v277
    %v900 = vunpack.c.h.b16 %v277
    %v901 = vunpack.c.l.b16 %v278
    %v902 = vunpack.c.h.b16 %v278
    %v903 = vunpack.c.l.b16 %v279
    %v904 = vunpack.c.h.b16 %v279
    %v905 = vunpack.c.l.b16 %v280
    %v906 = vunpack.c.h.b16 %v280
    %v907 = vunpack.c.l.b16 %v281
    %v908 = vunpack.c.h.b16 %v281
    %v909 = vunpack.c.l.b16 %v282
    %v910 = vunpack.c.h.b16 %v282
    %v911 = vunpack.c.l.b16 %v283
    %v912 = vunpack.c.h.b16 %v283
    %v913 = vunpack.c.l.b16 %v284
    %v914 = vunpack.c.h.b16 %v284
    %v915 = vunpack.c.l.b16 %v285
    %v916 = vunpack.c.h.b16 %v285
    %v917 = vunpack.c.l.b16 %v286
    %v918 = vunpack.c.h.b16 %v286
    %v919 = vunpack.c.l.b16 %v287
    %v920 = vunpack.c.h.b16 %v287
    %v921 = vunpack.c.l.b16 %v288
    %v922 = vunpack.c.h.b16 %v288
    %v923 = vunpack.c.l.b16 %v289
    %v924 = vunpack.c.h.b16 %v289
    %v925 = vunpack.c.l.b16 %v290
    %v926 = vunpack.c.h.b16 %v290
    %v927 = vunpack.c.l.b16 %v291
    %v928 = vunpack.c.h.b16 %v291
    %v929 = vunpack.c.l.b16 %v292
    %v930 = vunpack.c.h.b16 %v292
    %v931 = vunpack.c.l.b16 %v293
    %v932 = vunpack.c.h.b16 %v293
    %v933 = vunpack.c.l.b16 %v294
    %v934 = vunpack.c.h.b16 %v294
    %v935 = vunpack.c.l.b16 %v295
    %v936 = vunpack.c.h.b16 %v295
    %v937 = vunpack.c.l.b16 %v296
    %v938 = vunpack.c.h.b16 %v296
    %v939 = vunpack.c.l.b16 %v297
    %v940 = vunpack.c.h.b16 %v297
    %v941 = vunpack.c.l.b16 %v298
    %v942 = vunpack.c.h.b16 %v298
    %v943 = vunpack.c.l.b16 %v299
    %v944 = vunpack.c.h.b16 %v299
    %v945 = vunpack.c.l.b16 %v300
    %v946 = vunpack.c.h.b16 %v300
    %v947 = vunpack.c.l.b16 %v301
    %v948 = vunpack.c.h.b16 %v301
    %v949 = vunpack.c.l.b16 %v302
    %v950 = vunpack.c.h.b16 %v302
    %v951 = vunpack.c.l.b16 %v303
    %v952 = vunpack.c.h.b16 %v303
    %v953 = vunpack.c.l.b16 %v304
    %v954 = vunpack.c.h.b16 %v304
    %v955 = vunpack.c.l.b16 %v305
    %v956 = vunpack.c.h.b16 %v305
    %v957 = vunpack.c.l.b16 %v306
    %v958 = vunpack.c.h.b16 %v306
    %v959 = vunpack.c.l.b16 %v307
    %v960 = vunpack.c.h.b16 %v307
    %v961 = vunpack.c.l.b16 %v308
    %v962 = vunpack.c.h.b16 %v308
    %v963 = vunpack.c.l.b16 %v309
    %v964 = vunpack.c.h.b16 %v309
    %v965 = vunpack.c.l.b16 %v310
    %v966 = vunpack.c.h.b16 %v310
    %v967 = vunpack.c.l.b16 %v311
    %v968 = vunpack.c.h.b16 %v311
    %v969 = vunpack.c.l.b16 %v312
    %v970 = vunpack.c.h.b16 %v312
    %v971 = vunpack.c.l.b16 %v313
    %v972 = vunpack.c.h.b16 %v313
    %v973 = vunpack.c.l.b16 %v314
    %v974 = vunpack.c.h.b16 %v314
    %v975 = vunpack.c.l.b16 %v315
    %v976 = vunpack.c.h.b16 %v315
    %v977 = vunpack.c.l.b16 %v316
    %v978 = vunpack.c.h.b16 %v316
    %v979 = vunpack.c.l.b16 %v317
    %v980 = vunpack.c.h.b16 %v317
    %v981 = vunpack.c.l.b16 %v318
    %v982 = vunpack.c.h.b16 %v318
    %v983 = vunpack.c.l.b16 %v319
    %v984 = vunpack.c.h.b16 %v319
    %v985 = vunpack.c.l.b16 %v320
    %v986 = vunpack.c.h.b16 %v320
    %v987 = vunpack.c.l.b16 %v321
    %v988 = vunpack.c.h.b16 %v321
    %v989 = vunpack.c.l.b16 %v322
    %v990 = vunpack.c.h.b16 %v322
    %v991 = vunpack.c.l.b16 %v323
    %v992 = vunpack.c.h.b16 %v323
    %v993 = vunpack.c.l.b16 %v324
    %v994 = vunpack.c.h.b16 %v324
    %v995 = vunpack.c.l.b16 %v325
    %v996 = vunpack.c.h.b16 %v325
    %v997 = vunpack.c.l.b16 %v326
    %v998 = vunpack.c.h.b16 %v326
    %v999 = vunpack.c.l.b16 %v327
    %v1000 = vunpack.c.h.b16 %v327
    %v1001 = vunpack.c.l.b16 %v328
    %v1002 = vunpack.c.h.b16 %v328
    %v1003 = vunpack.c.l.b16 %v329
    %v1004 = vunpack.c.h.b16 %v329
    %v1005 = vunpack.c.l.b16 %v330
    %v1006 = vunpack.c.h.b16 %v330
    %v1007 = vunpack.c.l.b16 %v331
    %v1008 = vunpack.c.h.b16 %v331
    %v1009 = vunpack.c.l.b16 %v332
    %v1010 = vunpack.c.h.b16 %v332
    %v1011 = vunpack.c.l.b16 %v333
    %v1012 = vunpack.c.h.b16 %v333
    %v1013 = vunpack.c.l.b16 %v334
    %v1014 = vunpack.c.h.b16 %v334
    %v1015 = vunpack.c.l.b16 %v335
    %v1016 = vunpack.c.h.b16 %v335
    %v1017 = vunpack.c.l.b16 %v336
    %v1018 = vunpack.c.h.b16 %v336
    %v1019 = vunpack.c.l.b16 %v337
    %v1020 = vunpack.c.h.b16 %v337
    %v1021 = vunpack.c.l.b16 %v338
    %v1022 = vunpack.c.h.b16 %v338
    %v1023 = vunpack.c.l.b16 %v339
    %v1024 = vunpack.c.h.b16 %v339
    %v1025 = vunpack.c.l.b16 %v340
    %v1026 = vunpack.c.h.b16 %v340
    %v1027 = vunpack.c.l.b16 %v341
    %v1028 = vunpack.c.h.b16 %v341
    %v1029 = vunpack.c.l.b16 %v342
    %v1030 = vunpack.c.h.b16 %v342
    %v1031 = vunpack.c.l.b16 %v343
    %v1032 = vunpack.c.h.b16 %v343
    %v1033 = vunpack.c.l.b16 %v344
    %v1034 = vunpack.c.h.b16 %v344
    %v1035 = vunpack.c.l.b16 %v345
    %v1036 = vunpack.c.h.b16 %v345
    %v1037 = vunpack.c.l.b16 %v346
    %v1038 = vunpack.c.h.b16 %v346
    %v1039 = vunpack.c.l.b16 %v347
    %v1040 = vunpack.c.h.b16 %v347
    %v1041 = vunpack.c.l.b16 %v348
    %v1042 = vunpack.c.h.b16 %v348
    %v1043 = vunpack.c.l.b16 %v349
    %v1044 = vunpack.c.h.b16 %v349
    %v1045 = vunpack.c.l.b16 %v350
    %v1046 = vunpack.c.h.b16 %v350
    %v1047 = vunpack.c.l.b16 %v351
    %v1048 = vunpack.c.h.b16 %v351
    %v1049 = vunpack.c.l.b16 %v352
    %v1050 = vunpack.c.h.b16 %v352
    %v1051 = vunpack.c.l.b16 %v353
    %v1052 = vunpack.c.h.b16 %v353
    %v1053 = vunpack.c.l.b16 %v354
    %v1054 = vunpack.c.h.b16 %v354
    %v1055 = vunpack.c.l.b16 %v355
    %v1056 = vunpack.c.h.b16 %v355
    %v1057 = vunpack.c.l.b16 %v356
    %v1058 = vunpack.c.h.b16 %v356
    %v1059 = vpack.c.b16 %v699, %v675
    %v1060 = vpack.c.b16 %v700, %v676
    %v1061 = vpack.c.b16 %v701, %v677
    %v1062 = vpack.c.b16 %v702, %v678
    %v1063 = vpack.c.b16 %v703, %v679
    %v1064 = vpack.c.b16 %v704, %v680
    %v1065 = vpack.c.b16 %v705, %v681
    %v1066 = vpack.c.b16 %v706, %v682
    %v1067 = vpack.c.b16 %v707, %v683
    %v1068 = vpack.c.b16 %v708, %v684
    %v1069 = vpack.c.b16 %v709, %v685
    %v1070 = vpack.c.b16 %v710, %v686
    %v1071 = vpack.c.b16 %v711, %v687
    %v1072 = vpack.c.b16 %v712, %v688
    %v1073 = vpack.c.b16 %v713, %v689
    %v1074 = vpack.c.b16 %v714, %v690
    %v1075 = vpack.c.b16 %v715, %v691
    %v1076 = vpack.c.b16 %v716, %v692
    %v1077 = vpack.c.b16 %v717, %v693
    %v1078 = vpack.c.b16 %v718, %v694
    %v1079 = vpack.c.b16 %v719, %v695
    %v1080 = vpack.c.b16 %v720, %v696
    %v1081 = vpack.c.b16 %v721, %v697
    %v1082 = vpack.c.b16 %v722, %v698
    %v1083 = vpack.c.b16 %v747, %v723
    %v1084 = vpack.c.b16 %v748, %v724
    %v1085 = vpack.c.b16 %v749, %v725
    %v1086 = vpack.c.b16 %v750, %v726
    %v1087 = vpack.c.b16 %v751, %v727
    %v1088 = vpack.c.b16 %v752, %v728
    %v1089 = vpack.c.b16 %v753, %v729
    %v1090 = vpack.c.b16 %v754, %v730
    %v1091 = vpack.c.b16 %v755, %v731
    %v1092 = vpack.c.b16 %v756, %v732
    %v1093 = vpack.c.b16 %v757, %v733
    %v1094 = vpack.c.b16 %v758, %v734
    %v1095 = vpack.c.b16 %v759, %v735
    %v1096 = vpack.c.b16 %v760, %v736
    %v1097 = vpack.c.b16 %v761, %v737
    %v1098 = vpack.c.b16 %v762, %v738
    %v1099 = vpack.c.b16 %v763, %v739
    %v1100 = vpack.c.b16 %v764, %v740
    %v1101 = vpack.c.b16 %v765, %v741
    %v1102 = vpack.c.b16 %v766, %v742
    %v1103 = vpack.c.b16 %v767, %v743
    %v1104 = vpack.c.b16 %v768, %v744
    %v1105 = vpack.c.b16 %v769, %v745
    %v1106 = vpack.c.b16 %v770, %v746
    %v1107 = vpack.c.b16 %v795, %v771
    %v1108 = vpack.c.b16 %v796, %v772
    %v1109 = vpack.c.b16 %v797, %v773
    %v1110 = vpack.c.b16 %v798, %v774
    %v1111 = vpack.c.b16 %v799, %v775
    %v1112 = vpack.c.b16 %v800, %v776
    %v1113 = vpack.c.b16 %v801, %v777
    %v1114 = vpack.c.b16 %v802, %v778
    %v1115 = vpack.c.b16 %v803, %v779
    %v1116 = vpack.c.b16 %v804, %v780
    %v1117 = vpack.c.b16 %v805, %v781
    %v1118 = vpack.c.b16 %v806, %v782
    %v1119 = vpack.c.b16 %v807, %v783
    %v1120 = vpack.c.b16 %v808, %v784
    %v1121 = vpack.c.b16 %v809, %v785
    %v1122 = vpack.c.b16 %v810, %v786
    %v1123 = vpack.c.b16 %v811, %v787
    %v1124 = vpack.c.b16 %v812, %v788
    %v1125 = vpack.c.b16 %v813, %v789
    %v1126 = vpack.c.b16 %v814, %v790
    %v1127 = vpack.c.b16 %v815, %v791
    %v1128 = vpack.c.b16 %v816, %v792
    %v1129 = vpack.c.b16 %v817, %v793
    %v1130 = vpack.c.b16 %v818, %v794
    %v1131 = vpack.c.b16 %v843, %v819
    %v1132 = vpack.c.b16 %v844, %v820
    %v1133 = vpack.c.b16 %v845, %v821
    %v1134 = vpack.c.b16 %v846, %v822
    %v1135 = vpack.c.b16 %v847, %v823
    %v1136 = vpack.c.b16 %v848, %v824
    %v1137 = vpack.c.b16 %v849, %v825
    %v1138 = vpack.c.b16 %v850, %v826
    %v1139 = vpack.c.b16 %v851, %v827
    %v1140 = vpack.c.b16 %v852, %v828
    %v1141 = vpack.c.b16 %v853, %v829
    %v1142 = vpack.c.b16 %v854, %v830
    %v1143 = vpack.c.b16 %v855, %v831
    %v1144 = vpack.c.b16 %v856, %v832
    %v1145 = vpack.c.b16 %v857, %v833
    %v1146 = vpack.c.b16 %v858, %v834
    %v1147 = vpack.c.b16 %v859, %v835
    %v1148 = vpack.c.b16 %v860, %v836
    %v1149 = vpack.c.b16 %v861, %v837
    %v1150 = vpack.c.b16 %v862, %v838
    %v1151 = vpack.c.b16 %v863, %v839
    %v1152 = vpack.c.b16 %v864, %v840
    %v1153 = vpack.c.b16 %v865, %v841
    %v1154 = vpack.c.b16 %v866, %v842
    %v1155 = vpack.c.b16 %v891, %v867
    %v1156 = vpack.c.b16 %v892, %v868
    %v1157 = vpack.c.b16 %v893, %v869
    %v1158 = vpack.c.b16 %v894, %v870
    %v1159 = vpack.c.b16 %v895, %v871
    %v1160 = vpack.c.b16 %v896, %v872
    %v1161 = vpack.c.b16 %v897, %v873
    %v1162 = vpack.c.b16 %v898, %v874
    %v1163 = vpack.c.b16 %v899, %v875
    %v1164 = vpack.c.b16 %v900, %v876
    %v1165 = vpack.c.b16 %v901, %v877
    %v1166 = vpack.c.b16 %v902, %v878
    %v1167 = vpack.c.b16 %v903, %v879
    %v1168 = vpack.c.b16 %v904, %v880
    %v1169 = vpack.c.b16 %v905, %v881
    %v1170 = vpack.c.b16 %v906, %v882
    %v1171 = vpack.c.b16 %v907, %v883
    %v1172 = vpack.c.b16 %v908, %v884
    %v1173 = vpack.c.b16 %v909, %v885
    %v1174 = vpack.c.b16 %v910, %v886
    %v1175 = vpack.c.b16 %v911, %v887
    %v1176 = vpack.c.b16 %v912, %v888
    %v1177 = vpack.c.b16 %v913, %v889
    %v1178 = vpack.c.b16 %v914, %v890
    %v1179 = vpack.c.b16 %v939, %v915
    %v1180 = vpack.c.b16 %v940, %v916
    %v1181 = vpack.c.b16 %v941, %v917
    %v1182 = vpack.c.b16 %v942, %v918
    %v1183 = vpack.c.b16 %v943, %v919
    %v1184 = vpack.c.b16 %v944, %v920
    %v1185 = vpack.c.b16 %v945, %v921
    %v1186 = vpack.c.b16 %v946, %v922
    %v1187 = vpack.c.b16 %v947, %v923
    %v1188 = vpack.c.b16 %v948, %v924
    %v1189 = vpack.c.b16 %v949, %v925
    %v1190 = vpack.c.b16 %v950, %v926
    %v1191 = vpack.c.b16 %v951, %v927
    %v1192 = vpack.c.b16 %v952, %v928
    %v1193 = vpack.c.b16 %v953, %v929
    %v1194 = vpack.c.b16 %v954, %v930
    %v1195 = vpack.c.b16 %v955, %v931
    %v1196 = vpack.c.b16 %v956, %v932
    %v1197 = vpack.c.b16 %v957, %v933
    %v1198 = vpack.c.b16 %v958, %v934
    %v1199 = vpack.c.b16 %v959, %v935
    %v1200 = vpack.c.b16 %v960, %v936
    %v1201 = vpack.c.b16 %v961, %v937
    %v1202 = vpack.c.b16 %v962, %v938
    %v1203 = vpack.c.b16 %v987, %v963
    %v1204 = vpack.c.b16 %v988, %v964
    %v1205 = vpack.c.b16 %v989, %v965
    %v1206 = vpack.c.b16 %v990, %v966
    %v1207 = vpack.c.b16 %v991, %v967
    %v1208 = vpack.c.b16 %v992, %v968
    %v1209 = vpack.c.b16 %v993, %v969
    %v1210 = vpack.c.b16 %v994, %v970
    %v1211 = vpack.c.b16 %v995, %v971
    %v1212 = vpack.c.b16 %v996, %v972
    %v1213 = vpack.c.b16 %v997, %v973
    %v1214 = vpack.c.b16 %v998, %v974
    %v1215 = vpack.c.b16 %v999, %v975
    %v1216 = vpack.c.b16 %v1000, %v976
    %v1217 = vpack.c.b16 %v1001, %v977
    %v1218 = vpack.c.b16 %v1002, %v978
    %v1219 = vpack.c.b16 %v1003, %v979
    %v1220 = vpack.c.b16 %v1004, %v980
    %v1221 = vpack.c.b16 %v1005, %v981
    %v1222 = vpack.c.b16 %v1006, %v982
    %v1223 = vpack.c.b16 %v1007, %v983
    %v1224 = vpack.c.b16 %v1008, %v984
    %v1225 = vpack.c.b16 %v1009, %v985
    %v1226 = vpack.c.b16 %v1010, %v986
    %v1227 = vpack.c.b16 %v1035, %v1011
    %v1228 = vpack.c.b16 %v1036, %v1012
    %v1229 = vpack.c.b16 %v1037, %v1013
    %v1230 = vpack.c.b16 %v1038, %v1014
    %v1231 = vpack.c.b16 %v1039, %v1015
    %v1232 = vpack.c.b16 %v1040, %v1016
    %v1233 = vpack.c.b16 %v1041, %v1017
    %v1234 = vpack.c.b16 %v1042, %v1018
    %v1235 = vpack.c.b16 %v1043, %v1019
    %v1236 = vpack.c.b16 %v1044, %v1020
    %v1237 = vpack.c.b16 %v1045, %v1021
    %v1238 = vpack.c.b16 %v1046, %v1022
    %v1239 = vpack.c.b16 %v1047, %v1023
    %v1240 = vpack.c.b16 %v1048, %v1024
    %v1241 = vpack.c.b16 %v1049, %v1025
    %v1242 = vpack.c.b16 %v1050, %v1026
    %v1243 = vpack.c.b16 %v1051, %v1027
    %v1244 = vpack.c.b16 %v1052, %v1028
    %v1245 = vpack.c.b16 %v1053, %v1029
    %v1246 = vpack.c.b16 %v1054, %v1030
    %v1247 = vpack.c.b16 %v1055, %v1031
    %v1248 = vpack.c.b16 %v1056, %v1032
    %v1249 = vpack.c.b16 %v1057, %v1033
    %v1250 = vpack.c.b16 %v1058, %v1034
    %1443 = vmatprep.subr.bf16.mxu0 %v1228
    %1444 = vmatpush1.bf16.msra.mxu0 %v1227
    %1445 = vmatprep.subr.bf16.mxu0 %v1204
    %1446 = vmatpush1.bf16.msra.mxu0 %v1203
    %1447 = vmatprep.subr.bf16.mxu0 %v1180
    %1448 = vmatpush1.bf16.msra.mxu0 %v1179
    %1449 = vmatprep.subr.bf16.mxu0 %v1156
    %1450 = vmatpush1.bf16.msra.mxu0 %v1155
    %1451 = vmatprep.subr.bf16.mxu0 %v1132
    %1452 = vmatpush1.bf16.msra.mxu0 %v1131
    %1453 = vmatprep.subr.bf16.mxu0 %v1108
    %1454 = vmatpush1.bf16.msra.mxu0 %v1107
    %1455 = vmatprep.subr.bf16.mxu0 %v1084
    %1456 = vmatpush1.bf16.msra.mxu0 %v1083
    %1457 = vmatprep.subr.bf16.mxu0 %v1060
    %1458 = vmatpush1.bf16.msra.mxu0 %v1059
    %1459 = vmatprep.subr.bf16.mxu0 0
    %1460 = vmatpush2.bf16.msra.mxu0 0
    %1461 = vmatprep.subr.bf16.mxu0 0
    %1462 = vmatpush2.bf16.msra.mxu0 0
    %1463 = vmatprep.subr.bf16.mxu0 0
    %1464 = vmatpush2.bf16.msra.mxu0 0
    %1465 = vmatprep.subr.bf16.mxu0 0
    %1466 = vmatpush2.bf16.msra.mxu0 0
    %1467 = vmatprep.subr.bf16.mxu0 0
    %1468 = vmatpush2.bf16.msra.mxu0 0
    %1469 = vmatprep.subr.bf16.mxu0 0
    %1470 = vmatpush2.bf16.msra.mxu0 0
    %1471 = vmatprep.subr.bf16.mxu0 0
    %1472 = vmatpush2.bf16.msra.mxu0 0
    %1473 = vmatprep.subr.bf16.mxu0 0
    %1474 = vmatpush2.bf16.msra.mxu0 0
    %1475 = vmatprep.mubr.bf16.mxu0 0
    %1476 = vmatmul.mubr.bf16.gmra.mxu0 %v163
    %v1477 = vpop.f32.mrf.mxu0
    %v1478 = vadd.f32 %v366, %v1477
    %v1479 = vpop.f32.mrf.mxu0
    %v1480 = vadd.f32 %v370, %v1479
    %v1481 = vpop.f32.mrf.mxu0
    %v1482 = vadd.f32 %v366, %v1481
    %v1483 = vpop.f32.mrf.mxu0
    %v1484 = vadd.f32 %v370, %v1483
    %1485 = vmatprep.mubr.bf16.mxu0 0
    %1486 = vmatmul.mubr.bf16.gmra.mxu0 %v164
    %v1487 = vpop.f32.mrf.mxu0
    %v1488 = vadd.f32 %v366, %v1487
    %v1489 = vpop.f32.mrf.mxu0
    %v1490 = vadd.f32 %v370, %v1489
    %v1491 = vpop.f32.mrf.mxu0
    %v1492 = vadd.f32 %v366, %v1491
    %v1493 = vpop.f32.mrf.mxu0
    %v1494 = vadd.f32 %v370, %v1493
    %1495 = vdwg.mxu0
    %1496 = vmatprep.subr.bf16.mxu0 %v1230
    %1497 = vmatpush1.bf16.msra.mxu0 %v1229
    %1498 = vmatprep.subr.bf16.mxu0 %v1206
    %1499 = vmatpush1.bf16.msra.mxu0 %v1205
    %1500 = vmatprep.subr.bf16.mxu0 %v1182
    %1501 = vmatpush1.bf16.msra.mxu0 %v1181
    %1502 = vmatprep.subr.bf16.mxu0 %v1158
    %1503 = vmatpush1.bf16.msra.mxu0 %v1157
    %1504 = vmatprep.subr.bf16.mxu0 %v1134
    %1505 = vmatpush1.bf16.msra.mxu0 %v1133
    %1506 = vmatprep.subr.bf16.mxu0 %v1110
    %1507 = vmatpush1.bf16.msra.mxu0 %v1109
    %1508 = vmatprep.subr.bf16.mxu0 %v1086
    %1509 = vmatpush1.bf16.msra.mxu0 %v1085
    %1510 = vmatprep.subr.bf16.mxu0 %v1062
    %1511 = vmatpush1.bf16.msra.mxu0 %v1061
    %1512 = vmatprep.subr.bf16.mxu0 0
    %1513 = vmatpush2.bf16.msra.mxu0 0
    %1514 = vmatprep.subr.bf16.mxu0 0
    %1515 = vmatpush2.bf16.msra.mxu0 0
    %1516 = vmatprep.subr.bf16.mxu0 0
    %1517 = vmatpush2.bf16.msra.mxu0 0
    %1518 = vmatprep.subr.bf16.mxu0 0
    %1519 = vmatpush2.bf16.msra.mxu0 0
    %1520 = vmatprep.subr.bf16.mxu0 0
    %1521 = vmatpush2.bf16.msra.mxu0 0
    %1522 = vmatprep.subr.bf16.mxu0 0
    %1523 = vmatpush2.bf16.msra.mxu0 0
    %1524 = vmatprep.subr.bf16.mxu0 0
    %1525 = vmatpush2.bf16.msra.mxu0 0
    %1526 = vmatprep.subr.bf16.mxu0 0
    %1527 = vmatpush2.bf16.msra.mxu0 0
    %1528 = vmatprep.mubr.bf16.mxu0 0
    %1529 = vmatmul.mubr.bf16.gmra.mxu0 %v163
    %v1530 = vpop.f32.mrf.mxu0
    %v1531 = vadd.f32 %v374, %v1530
    %v1532 = vpop.f32.mrf.mxu0
    %v1533 = vadd.f32 %v378, %v1532
    %v1534 = vpop.f32.mrf.mxu0
    %v1535 = vadd.f32 %v374, %v1534
    %v1536 = vpop.f32.mrf.mxu0
    %v1537 = vadd.f32 %v378, %v1536
    %1538 = vmatprep.mubr.bf16.mxu0 0
    %1539 = vmatmul.mubr.bf16.gmra.mxu0 %v164
    %v1540 = vpop.f32.mrf.mxu0
    %v1541 = vadd.f32 %v374, %v1540
    %v1542 = vpop.f32.mrf.mxu0
    %v1543 = vadd.f32 %v378, %v1542
    %v1544 = vpop.f32.mrf.mxu0
    %v1545 = vadd.f32 %v374, %v1544
    %v1546 = vpop.f32.mrf.mxu0
    %v1547 = vadd.f32 %v378, %v1546
    %1548 = vdwg.mxu0
    %1549 = vmatprep.subr.bf16.mxu0 %v1232
    %1550 = vmatpush1.bf16.msra.mxu0 %v1231
    %1551 = vmatprep.subr.bf16.mxu0 %v1208
    %1552 = vmatpush1.bf16.msra.mxu0 %v1207
    %1553 = vmatprep.subr.bf16.mxu0 %v1184
    %1554 = vmatpush1.bf16.msra.mxu0 %v1183
    %1555 = vmatprep.subr.bf16.mxu0 %v1160
    %1556 = vmatpush1.bf16.msra.mxu0 %v1159
    %1557 = vmatprep.subr.bf16.mxu0 %v1136
    %1558 = vmatpush1.bf16.msra.mxu0 %v1135
    %1559 = vmatprep.subr.bf16.mxu0 %v1112
    %1560 = vmatpush1.bf16.msra.mxu0 %v1111
    %1561 = vmatprep.subr.bf16.mxu0 %v1088
    %1562 = vmatpush1.bf16.msra.mxu0 %v1087
    %1563 = vmatprep.subr.bf16.mxu0 %v1064
    %1564 = vmatpush1.bf16.msra.mxu0 %v1063
    %1565 = vmatprep.subr.bf16.mxu0 0
    %1566 = vmatpush2.bf16.msra.mxu0 0
    %1567 = vmatprep.subr.bf16.mxu0 0
    %1568 = vmatpush2.bf16.msra.mxu0 0
    %1569 = vmatprep.subr.bf16.mxu0 0
    %1570 = vmatpush2.bf16.msra.mxu0 0
    %1571 = vmatprep.subr.bf16.mxu0 0
    %1572 = vmatpush2.bf16.msra.mxu0 0
    %1573 = vmatprep.subr.bf16.mxu0 0
    %1574 = vmatpush2.bf16.msra.mxu0 0
    %1575 = vmatprep.subr.bf16.mxu0 0
    %1576 = vmatpush2.bf16.msra.mxu0 0
    %1577 = vmatprep.subr.bf16.mxu0 0
    %1578 = vmatpush2.bf16.msra.mxu0 0
    %1579 = vmatprep.subr.bf16.mxu0 0
    %1580 = vmatpush2.bf16.msra.mxu0 0
    %1581 = vmatprep.mubr.bf16.mxu0 0
    %1582 = vmatmul.mubr.bf16.gmra.mxu0 %v163
    %v1583 = vpop.f32.mrf.mxu0
    %v1584 = vadd.f32 %v382, %v1583
    %v1585 = vpop.f32.mrf.mxu0
    %v1586 = vadd.f32 %v386, %v1585
    %v1587 = vpop.f32.mrf.mxu0
    %v1588 = vadd.f32 %v382, %v1587
    %v1589 = vpop.f32.mrf.mxu0
    %v1590 = vadd.f32 %v386, %v1589
    %1591 = vmatprep.mubr.bf16.mxu0 0
    %1592 = vmatmul.mubr.bf16.gmra.mxu0 %v164
    %v1593 = vpop.f32.mrf.mxu0
    %v1594 = vadd.f32 %v382, %v1593
    %v1595 = vpop.f32.mrf.mxu0
    %v1596 = vadd.f32 %v386, %v1595
    %v1597 = vpop.f32.mrf.mxu0
    %v1598 = vadd.f32 %v382, %v1597
    %v1599 = vpop.f32.mrf.mxu0
    %v1600 = vadd.f32 %v386, %v1599
    %1601 = vdwg.mxu0
    %1602 = vmatprep.subr.bf16.mxu0 %v1234
    %1603 = vmatpush1.bf16.msra.mxu0 %v1233
    %1604 = vmatprep.subr.bf16.mxu0 %v1210
    %1605 = vmatpush1.bf16.msra.mxu0 %v1209
    %1606 = vmatprep.subr.bf16.mxu0 %v1186
    %1607 = vmatpush1.bf16.msra.mxu0 %v1185
    %1608 = vmatprep.subr.bf16.mxu0 %v1162
    %1609 = vmatpush1.bf16.msra.mxu0 %v1161
    %1610 = vmatprep.subr.bf16.mxu0 %v1138
    %1611 = vmatpush1.bf16.msra.mxu0 %v1137
    %1612 = vmatprep.subr.bf16.mxu0 %v1114
    %1613 = vmatpush1.bf16.msra.mxu0 %v1113
    %1614 = vmatprep.subr.bf16.mxu0 %v1090
    %1615 = vmatpush1.bf16.msra.mxu0 %v1089
    %1616 = vmatprep.subr.bf16.mxu0 %v1066
    %1617 = vmatpush1.bf16.msra.mxu0 %v1065
    %1618 = vmatprep.subr.bf16.mxu0 0
    %1619 = vmatpush2.bf16.msra.mxu0 0
    %1620 = vmatprep.subr.bf16.mxu0 0
    %1621 = vmatpush2.bf16.msra.mxu0 0
    %1622 = vmatprep.subr.bf16.mxu0 0
    %1623 = vmatpush2.bf16.msra.mxu0 0
    %1624 = vmatprep.subr.bf16.mxu0 0
    %1625 = vmatpush2.bf16.msra.mxu0 0
    %1626 = vmatprep.subr.bf16.mxu0 0
    %1627 = vmatpush2.bf16.msra.mxu0 0
    %1628 = vmatprep.subr.bf16.mxu0 0
    %1629 = vmatpush2.bf16.msra.mxu0 0
    %1630 = vmatprep.subr.bf16.mxu0 0
    %1631 = vmatpush2.bf16.msra.mxu0 0
    %1632 = vmatprep.subr.bf16.mxu0 0
    %1633 = vmatpush2.bf16.msra.mxu0 0
    %1634 = vmatprep.mubr.bf16.mxu0 0
    %1635 = vmatmul.mubr.bf16.gmra.mxu0 %v163
    %v1636 = vpop.f32.mrf.mxu0
    %v1637 = vadd.f32 %v390, %v1636
    %v1638 = vpop.f32.mrf.mxu0
    %v1639 = vadd.f32 %v394, %v1638
    %v1640 = vpop.f32.mrf.mxu0
    %v1641 = vadd.f32 %v390, %v1640
    %v1642 = vpop.f32.mrf.mxu0
    %v1643 = vadd.f32 %v394, %v1642
    %1644 = vmatprep.mubr.bf16.mxu0 0
    %1645 = vmatmul.mubr.bf16.gmra.mxu0 %v164
    %v1646 = vpop.f32.mrf.mxu0
    %v1647 = vadd.f32 %v390, %v1646
    %v1648 = vpop.f32.mrf.mxu0
    %v1649 = vadd.f32 %v394, %v1648
    %v1650 = vpop.f32.mrf.mxu0
    %v1651 = vadd.f32 %v390, %v1650
    %v1652 = vpop.f32.mrf.mxu0
    %v1653 = vadd.f32 %v394, %v1652
    %1654 = vdwg.mxu0
    %1655 = vmatprep.subr.bf16.mxu0 %v1236
    %1656 = vmatpush1.bf16.msra.mxu0 %v1235
    %1657 = vmatprep.subr.bf16.mxu0 %v1212
    %1658 = vmatpush1.bf16.msra.mxu0 %v1211
    %1659 = vmatprep.subr.bf16.mxu0 %v1188
    %1660 = vmatpush1.bf16.msra.mxu0 %v1187
    %1661 = vmatprep.subr.bf16.mxu0 %v1164
    %1662 = vmatpush1.bf16.msra.mxu0 %v1163
    %1663 = vmatprep.subr.bf16.mxu0 %v1140
    %1664 = vmatpush1.bf16.msra.mxu0 %v1139
    %1665 = vmatprep.subr.bf16.mxu0 %v1116
    %1666 = vmatpush1.bf16.msra.mxu0 %v1115
    %1667 = vmatprep.subr.bf16.mxu0 %v1092
    %1668 = vmatpush1.bf16.msra.mxu0 %v1091
    %1669 = vmatprep.subr.bf16.mxu0 %v1068
    %1670 = vmatpush1.bf16.msra.mxu0 %v1067
    %1671 = vmatprep.subr.bf16.mxu0 0
    %1672 = vmatpush2.bf16.msra.mxu0 0
    %1673 = vmatprep.subr.bf16.mxu0 0
    %1674 = vmatpush2.bf16.msra.mxu0 0
    %1675 = vmatprep.subr.bf16.mxu0 0
    %1676 = vmatpush2.bf16.msra.mxu0 0
    %1677 = vmatprep.subr.bf16.mxu0 0
    %1678 = vmatpush2.bf16.msra.mxu0 0
    %1679 = vmatprep.subr.bf16.mxu0 0
    %1680 = vmatpush2.bf16.msra.mxu0 0
    %1681 = vmatprep.subr.bf16.mxu0 0
    %1682 = vmatpush2.bf16.msra.mxu0 0
    %1683 = vmatprep.subr.bf16.mxu0 0
    %1684 = vmatpush2.bf16.msra.mxu0 0
    %1685 = vmatprep.subr.bf16.mxu0 0
    %1686 = vmatpush2.bf16.msra.mxu0 0
    %1687 = vmatprep.mubr.bf16.mxu0 0
    %1688 = vmatmul.mubr.bf16.gmra.mxu0 %v163
    %v1689 = vpop.f32.mrf.mxu0
    %v1690 = vadd.f32 %v398, %v1689
    %v1691 = vpop.f32.mrf.mxu0
    %v1692 = vadd.f32 %v402, %v1691
    %v1693 = vpop.f32.mrf.mxu0
    %v1694 = vadd.f32 %v398, %v1693
    %v1695 = vpop.f32.mrf.mxu0
    %v1696 = vadd.f32 %v402, %v1695
    %1697 = vmatprep.mubr.bf16.mxu0 0
    %1698 = vmatmul.mubr.bf16.gmra.mxu0 %v164
    %v1699 = vpop.f32.mrf.mxu0
    %v1700 = vadd.f32 %v398, %v1699
    %v1701 = vpop.f32.mrf.mxu0
    %v1702 = vadd.f32 %v402, %v1701
    %v1703 = vpop.f32.mrf.mxu0
    %v1704 = vadd.f32 %v398, %v1703
    %v1705 = vpop.f32.mrf.mxu0
    %v1706 = vadd.f32 %v402, %v1705
    %1707 = vdwg.mxu0
    %1708 = vmatprep.subr.bf16.mxu0 %v1238
    %1709 = vmatpush1.bf16.msra.mxu0 %v1237
    %1710 = vmatprep.subr.bf16.mxu0 %v1214
    %1711 = vmatpush1.bf16.msra.mxu0 %v1213
    %1712 = vmatprep.subr.bf16.mxu0 %v1190
    %1713 = vmatpush1.bf16.msra.mxu0 %v1189
    %1714 = vmatprep.subr.bf16.mxu0 %v1166
    %1715 = vmatpush1.bf16.msra.mxu0 %v1165
    %1716 = vmatprep.subr.bf16.mxu0 %v1142
    %1717 = vmatpush1.bf16.msra.mxu0 %v1141
    %1718 = vmatprep.subr.bf16.mxu0 %v1118
    %1719 = vmatpush1.bf16.msra.mxu0 %v1117
    %1720 = vmatprep.subr.bf16.mxu0 %v1094
    %1721 = vmatpush1.bf16.msra.mxu0 %v1093
    %1722 = vmatprep.subr.bf16.mxu0 %v1070
    %1723 = vmatpush1.bf16.msra.mxu0 %v1069
    %1724 = vmatprep.subr.bf16.mxu0 0
    %1725 = vmatpush2.bf16.msra.mxu0 0
    %1726 = vmatprep.subr.bf16.mxu0 0
    %1727 = vmatpush2.bf16.msra.mxu0 0
    %1728 = vmatprep.subr.bf16.mxu0 0
    %1729 = vmatpush2.bf16.msra.mxu0 0
    %1730 = vmatprep.subr.bf16.mxu0 0
    %1731 = vmatpush2.bf16.msra.mxu0 0
    %1732 = vmatprep.subr.bf16.mxu0 0
    %1733 = vmatpush2.bf16.msra.mxu0 0
    %1734 = vmatprep.subr.bf16.mxu0 0
    %1735 = vmatpush2.bf16.msra.mxu0 0
    %1736 = vmatprep.subr.bf16.mxu0 0
    %1737 = vmatpush2.bf16.msra.mxu0 0
    %1738 = vmatprep.subr.bf16.mxu0 0
    %1739 = vmatpush2.bf16.msra.mxu0 0
    %1740 = vmatprep.mubr.bf16.mxu0 0
    %1741 = vmatmul.mubr.bf16.gmra.mxu0 %v163
    %v1742 = vpop.f32.mrf.mxu0
    %v1743 = vadd.f32 %v406, %v1742
    %v1744 = vpop.f32.mrf.mxu0
    %v1745 = vadd.f32 %v410, %v1744
    %v1746 = vpop.f32.mrf.mxu0
    %v1747 = vadd.f32 %v406, %v1746
    %v1748 = vpop.f32.mrf.mxu0
    %v1749 = vadd.f32 %v410, %v1748
    %1750 = vmatprep.mubr.bf16.mxu0 0
    %1751 = vmatmul.mubr.bf16.gmra.mxu0 %v164
    %v1752 = vpop.f32.mrf.mxu0
    %v1753 = vadd.f32 %v406, %v1752
    %v1754 = vpop.f32.mrf.mxu0
    %v1755 = vadd.f32 %v410, %v1754
    %v1756 = vpop.f32.mrf.mxu0
    %v1757 = vadd.f32 %v406, %v1756
    %v1758 = vpop.f32.mrf.mxu0
    %v1759 = vadd.f32 %v410, %v1758
    %1760 = vdwg.mxu0
    %1761 = vmatprep.subr.bf16.mxu0 %v1240
    %1762 = vmatpush1.bf16.msra.mxu0 %v1239
    %1763 = vmatprep.subr.bf16.mxu0 %v1216
    %1764 = vmatpush1.bf16.msra.mxu0 %v1215
    %1765 = vmatprep.subr.bf16.mxu0 %v1192
    %1766 = vmatpush1.bf16.msra.mxu0 %v1191
    %1767 = vmatprep.subr.bf16.mxu0 %v1168
    %1768 = vmatpush1.bf16.msra.mxu0 %v1167
    %1769 = vmatprep.subr.bf16.mxu0 %v1144
    %1770 = vmatpush1.bf16.msra.mxu0 %v1143
    %1771 = vmatprep.subr.bf16.mxu0 %v1120
    %1772 = vmatpush1.bf16.msra.mxu0 %v1119
    %1773 = vmatprep.subr.bf16.mxu0 %v1096
    %1774 = vmatpush1.bf16.msra.mxu0 %v1095
    %1775 = vmatprep.subr.bf16.mxu0 %v1072
    %1776 = vmatpush1.bf16.msra.mxu0 %v1071
    %1777 = vmatprep.subr.bf16.mxu0 0
    %1778 = vmatpush2.bf16.msra.mxu0 0
    %1779 = vmatprep.subr.bf16.mxu0 0
    %1780 = vmatpush2.bf16.msra.mxu0 0
    %1781 = vmatprep.subr.bf16.mxu0 0
    %1782 = vmatpush2.bf16.msra.mxu0 0
    %1783 = vmatprep.subr.bf16.mxu0 0
    %1784 = vmatpush2.bf16.msra.mxu0 0
    %1785 = vmatprep.subr.bf16.mxu0 0
    %1786 = vmatpush2.bf16.msra.mxu0 0
    %1787 = vmatprep.subr.bf16.mxu0 0
    %1788 = vmatpush2.bf16.msra.mxu0 0
    %1789 = vmatprep.subr.bf16.mxu0 0
    %1790 = vmatpush2.bf16.msra.mxu0 0
    %1791 = vmatprep.subr.bf16.mxu0 0
    %1792 = vmatpush2.bf16.msra.mxu0 0
    %1793 = vmatprep.mubr.bf16.mxu0 0
    %1794 = vmatmul.mubr.bf16.gmra.mxu0 %v163
    %v1795 = vpop.f32.mrf.mxu0
    %v1796 = vadd.f32 %v414, %v1795
    %v1797 = vpop.f32.mrf.mxu0
    %v1798 = vadd.f32 %v418, %v1797
    %v1799 = vpop.f32.mrf.mxu0
    %v1800 = vadd.f32 %v414, %v1799
    %v1801 = vpop.f32.mrf.mxu0
    %v1802 = vadd.f32 %v418, %v1801
    %1803 = vmatprep.mubr.bf16.mxu0 0
    %1804 = vmatmul.mubr.bf16.gmra.mxu0 %v164
    %v1805 = vpop.f32.mrf.mxu0
    %v1806 = vadd.f32 %v414, %v1805
    %v1807 = vpop.f32.mrf.mxu0
    %v1808 = vadd.f32 %v418, %v1807
    %v1809 = vpop.f32.mrf.mxu0
    %v1810 = vadd.f32 %v414, %v1809
    %v1811 = vpop.f32.mrf.mxu0
    %v1812 = vadd.f32 %v418, %v1811
    %1813 = vdwg.mxu0
    %1814 = vmatprep.subr.bf16.mxu0 %v1242
    %1815 = vmatpush1.bf16.msra.mxu0 %v1241
    %1816 = vmatprep.subr.bf16.mxu0 %v1218
    %1817 = vmatpush1.bf16.msra.mxu0 %v1217
    %1818 = vmatprep.subr.bf16.mxu0 %v1194
    %1819 = vmatpush1.bf16.msra.mxu0 %v1193
    %1820 = vmatprep.subr.bf16.mxu0 %v1170
    %1821 = vmatpush1.bf16.msra.mxu0 %v1169
    %1822 = vmatprep.subr.bf16.mxu0 %v1146
    %1823 = vmatpush1.bf16.msra.mxu0 %v1145
    %1824 = vmatprep.subr.bf16.mxu0 %v1122
    %1825 = vmatpush1.bf16.msra.mxu0 %v1121
    %1826 = vmatprep.subr.bf16.mxu0 %v1098
    %1827 = vmatpush1.bf16.msra.mxu0 %v1097
    %1828 = vmatprep.subr.bf16.mxu0 %v1074
    %1829 = vmatpush1.bf16.msra.mxu0 %v1073
    %1830 = vmatprep.subr.bf16.mxu0 0
    %1831 = vmatpush2.bf16.msra.mxu0 0
    %1832 = vmatprep.subr.bf16.mxu0 0
    %1833 = vmatpush2.bf16.msra.mxu0 0
    %1834 = vmatprep.subr.bf16.mxu0 0
    %1835 = vmatpush2.bf16.msra.mxu0 0
    %1836 = vmatprep.subr.bf16.mxu0 0
    %1837 = vmatpush2.bf16.msra.mxu0 0
    %1838 = vmatprep.subr.bf16.mxu0 0
    %1839 = vmatpush2.bf16.msra.mxu0 0
    %1840 = vmatprep.subr.bf16.mxu0 0
    %1841 = vmatpush2.bf16.msra.mxu0 0
    %1842 = vmatprep.subr.bf16.mxu0 0
    %1843 = vmatpush2.bf16.msra.mxu0 0
    %1844 = vmatprep.subr.bf16.mxu0 0
    %1845 = vmatpush2.bf16.msra.mxu0 0
    %1846 = vmatprep.mubr.bf16.mxu0 0
    %1847 = vmatmul.mubr.bf16.gmra.mxu0 %v163
    %v1848 = vpop.f32.mrf.mxu0
    %v1849 = vadd.f32 %v422, %v1848
    %v1850 = vpop.f32.mrf.mxu0
    %v1851 = vadd.f32 %v426, %v1850
    %v1852 = vpop.f32.mrf.mxu0
    %v1853 = vadd.f32 %v422, %v1852
    %v1854 = vpop.f32.mrf.mxu0
    %v1855 = vadd.f32 %v426, %v1854
    %1856 = vmatprep.mubr.bf16.mxu0 0
    %1857 = vmatmul.mubr.bf16.gmra.mxu0 %v164
    %v1858 = vpop.f32.mrf.mxu0
    %v1859 = vadd.f32 %v422, %v1858
    %v1860 = vpop.f32.mrf.mxu0
    %v1861 = vadd.f32 %v426, %v1860
    %v1862 = vpop.f32.mrf.mxu0
    %v1863 = vadd.f32 %v422, %v1862
    %v1864 = vpop.f32.mrf.mxu0
    %v1865 = vadd.f32 %v426, %v1864
    %1866 = vdwg.mxu0
    %1867 = vmatprep.subr.bf16.mxu0 %v1244
    %1868 = vmatpush1.bf16.msra.mxu0 %v1243
    %1869 = vmatprep.subr.bf16.mxu0 %v1220
    %1870 = vmatpush1.bf16.msra.mxu0 %v1219
    %1871 = vmatprep.subr.bf16.mxu0 %v1196
    %1872 = vmatpush1.bf16.msra.mxu0 %v1195
    %1873 = vmatprep.subr.bf16.mxu0 %v1172
    %1874 = vmatpush1.bf16.msra.mxu0 %v1171
    %1875 = vmatprep.subr.bf16.mxu0 %v1148
    %1876 = vmatpush1.bf16.msra.mxu0 %v1147
    %1877 = vmatprep.subr.bf16.mxu0 %v1124
    %1878 = vmatpush1.bf16.msra.mxu0 %v1123
    %1879 = vmatprep.subr.bf16.mxu0 %v1100
    %1880 = vmatpush1.bf16.msra.mxu0 %v1099
    %1881 = vmatprep.subr.bf16.mxu0 %v1076
    %1882 = vmatpush1.bf16.msra.mxu0 %v1075
    %1883 = vmatprep.subr.bf16.mxu0 0
    %1884 = vmatpush2.bf16.msra.mxu0 0
    %1885 = vmatprep.subr.bf16.mxu0 0
    %1886 = vmatpush2.bf16.msra.mxu0 0
    %1887 = vmatprep.subr.bf16.mxu0 0
    %1888 = vmatpush2.bf16.msra.mxu0 0
    %1889 = vmatprep.subr.bf16.mxu0 0
    %1890 = vmatpush2.bf16.msra.mxu0 0
    %1891 = vmatprep.subr.bf16.mxu0 0
    %1892 = vmatpush2.bf16.msra.mxu0 0
    %1893 = vmatprep.subr.bf16.mxu0 0
    %1894 = vmatpush2.bf16.msra.mxu0 0
    %1895 = vmatprep.subr.bf16.mxu0 0
    %1896 = vmatpush2.bf16.msra.mxu0 0
    %1897 = vmatprep.subr.bf16.mxu0 0
    %1898 = vmatpush2.bf16.msra.mxu0 0
    %1899 = vmatprep.mubr.bf16.mxu0 0
    %1900 = vmatmul.mubr.bf16.gmra.mxu0 %v163
    %v1901 = vpop.f32.mrf.mxu0
    %v1902 = vadd.f32 %v430, %v1901
    %v1903 = vpop.f32.mrf.mxu0
    %v1904 = vadd.f32 %v434, %v1903
    %v1905 = vpop.f32.mrf.mxu0
    %v1906 = vadd.f32 %v430, %v1905
    %v1907 = vpop.f32.mrf.mxu0
    %v1908 = vadd.f32 %v434, %v1907
    %1909 = vmatprep.mubr.bf16.mxu0 0
    %1910 = vmatmul.mubr.bf16.gmra.mxu0 %v164
    %v1911 = vpop.f32.mrf.mxu0
    %v1912 = vadd.f32 %v430, %v1911
    %v1913 = vpop.f32.mrf.mxu0
    %v1914 = vadd.f32 %v434, %v1913
    %v1915 = vpop.f32.mrf.mxu0
    %v1916 = vadd.f32 %v430, %v1915
    %v1917 = vpop.f32.mrf.mxu0
    %v1918 = vadd.f32 %v434, %v1917
    %1919 = vdwg.mxu0
    %1920 = vmatprep.subr.bf16.mxu0 %v1246
    %1921 = vmatpush1.bf16.msra.mxu0 %v1245
    %1922 = vmatprep.subr.bf16.mxu0 %v1222
    %1923 = vmatpush1.bf16.msra.mxu0 %v1221
    %1924 = vmatprep.subr.bf16.mxu0 %v1198
    %1925 = vmatpush1.bf16.msra.mxu0 %v1197
    %1926 = vmatprep.subr.bf16.mxu0 %v1174
    %1927 = vmatpush1.bf16.msra.mxu0 %v1173
    %1928 = vmatprep.subr.bf16.mxu0 %v1150
    %1929 = vmatpush1.bf16.msra.mxu0 %v1149
    %1930 = vmatprep.subr.bf16.mxu0 %v1126
    %1931 = vmatpush1.bf16.msra.mxu0 %v1125
    %1932 = vmatprep.subr.bf16.mxu0 %v1102
    %1933 = vmatpush1.bf16.msra.mxu0 %v1101
    %1934 = vmatprep.subr.bf16.mxu0 %v1078
    %1935 = vmatpush1.bf16.msra.mxu0 %v1077
    %1936 = vmatprep.subr.bf16.mxu0 0
    %1937 = vmatpush2.bf16.msra.mxu0 0
    %1938 = vmatprep.subr.bf16.mxu0 0
    %1939 = vmatpush2.bf16.msra.mxu0 0
    %1940 = vmatprep.subr.bf16.mxu0 0
    %1941 = vmatpush2.bf16.msra.mxu0 0
    %1942 = vmatprep.subr.bf16.mxu0 0
    %1943 = vmatpush2.bf16.msra.mxu0 0
    %1944 = vmatprep.subr.bf16.mxu0 0
    %1945 = vmatpush2.bf16.msra.mxu0 0
    %1946 = vmatprep.subr.bf16.mxu0 0
    %1947 = vmatpush2.bf16.msra.mxu0 0
    %1948 = vmatprep.subr.bf16.mxu0 0
    %1949 = vmatpush2.bf16.msra.mxu0 0
    %1950 = vmatprep.subr.bf16.mxu0 0
    %1951 = vmatpush2.bf16.msra.mxu0 0
    %1952 = vmatprep.mubr.bf16.mxu0 0
    %1953 = vmatmul.mubr.bf16.gmra.mxu0 %v163
    %v1954 = vpop.f32.mrf.mxu0
    %v1955 = vadd.f32 %v438, %v1954
    %v1956 = vpop.f32.mrf.mxu0
    %v1957 = vadd.f32 %v442, %v1956
    %v1958 = vpop.f32.mrf.mxu0
    %v1959 = vadd.f32 %v438, %v1958
    %v1960 = vpop.f32.mrf.mxu0
    %v1961 = vadd.f32 %v442, %v1960
    %1962 = vmatprep.mubr.bf16.mxu0 0
    %1963 = vmatmul.mubr.bf16.gmra.mxu0 %v164
    %v1964 = vpop.f32.mrf.mxu0
    %v1965 = vadd.f32 %v438, %v1964
    %v1966 = vpop.f32.mrf.mxu0
    %v1967 = vadd.f32 %v442, %v1966
    %v1968 = vpop.f32.mrf.mxu0
    %v1969 = vadd.f32 %v438, %v1968
    %v1970 = vpop.f32.mrf.mxu0
    %v1971 = vadd.f32 %v442, %v1970
    %1972 = vdwg.mxu0
    %1973 = vmatprep.subr.bf16.mxu0 %v1248
    %1974 = vmatpush1.bf16.msra.mxu0 %v1247
    %1975 = vmatprep.subr.bf16.mxu0 %v1224
    %1976 = vmatpush1.bf16.msra.mxu0 %v1223
    %1977 = vmatprep.subr.bf16.mxu0 %v1200
    %1978 = vmatpush1.bf16.msra.mxu0 %v1199
    %1979 = vmatprep.subr.bf16.mxu0 %v1176
    %1980 = vmatpush1.bf16.msra.mxu0 %v1175
    %1981 = vmatprep.subr.bf16.mxu0 %v1152
    %1982 = vmatpush1.bf16.msra.mxu0 %v1151
    %1983 = vmatprep.subr.bf16.mxu0 %v1128
    %1984 = vmatpush1.bf16.msra.mxu0 %v1127
    %1985 = vmatprep.subr.bf16.mxu0 %v1104
    %1986 = vmatpush1.bf16.msra.mxu0 %v1103
    %1987 = vmatprep.subr.bf16.mxu0 %v1080
    %1988 = vmatpush1.bf16.msra.mxu0 %v1079
    %1989 = vmatprep.subr.bf16.mxu0 0
    %1990 = vmatpush2.bf16.msra.mxu0 0
    %1991 = vmatprep.subr.bf16.mxu0 0
    %1992 = vmatpush2.bf16.msra.mxu0 0
    %1993 = vmatprep.subr.bf16.mxu0 0
    %1994 = vmatpush2.bf16.msra.mxu0 0
    %1995 = vmatprep.subr.bf16.mxu0 0
    %1996 = vmatpush2.bf16.msra.mxu0 0
    %1997 = vmatprep.subr.bf16.mxu0 0
    %1998 = vmatpush2.bf16.msra.mxu0 0
    %1999 = vmatprep.subr.bf16.mxu0 0
    %2000 = vmatpush2.bf16.msra.mxu0 0
    %2001 = vmatprep.subr.bf16.mxu0 0
    %2002 = vmatpush2.bf16.msra.mxu0 0
    %2003 = vmatprep.subr.bf16.mxu0 0
    %2004 = vmatpush2.bf16.msra.mxu0 0
    %2005 = vmatprep.mubr.bf16.mxu0 0
    %2006 = vmatmul.mubr.bf16.gmra.mxu0 %v163
    %v2007 = vpop.f32.mrf.mxu0
    %v2008 = vadd.f32 %v446, %v2007
    %v2009 = vpop.f32.mrf.mxu0
    %v2010 = vadd.f32 %v450, %v2009
    %v2011 = vpop.f32.mrf.mxu0
    %v2012 = vadd.f32 %v446, %v2011
    %v2013 = vpop.f32.mrf.mxu0
    %v2014 = vadd.f32 %v450, %v2013
    %2015 = vmatprep.mubr.bf16.mxu0 0
    %2016 = vmatmul.mubr.bf16.gmra.mxu0 %v164
    %v2017 = vpop.f32.mrf.mxu0
    %v2018 = vadd.f32 %v446, %v2017
    %v2019 = vpop.f32.mrf.mxu0
    %v2020 = vadd.f32 %v450, %v2019
    %v2021 = vpop.f32.mrf.mxu0
    %v2022 = vadd.f32 %v446, %v2021
    %v2023 = vpop.f32.mrf.mxu0
    %v2024 = vadd.f32 %v450, %v2023
    %2025 = vdwg.mxu0
    %2026 = vmatprep.subr.bf16.mxu0 %v1250
    %2027 = vmatpush1.bf16.msra.mxu0 %v1249
    %2028 = vmatprep.subr.bf16.mxu0 %v1226
    %2029 = vmatpush1.bf16.msra.mxu0 %v1225
    %2030 = vmatprep.subr.bf16.mxu0 %v1202
    %2031 = vmatpush1.bf16.msra.mxu0 %v1201
    %2032 = vmatprep.subr.bf16.mxu0 %v1178
    %2033 = vmatpush1.bf16.msra.mxu0 %v1177
    %2034 = vmatprep.subr.bf16.mxu0 %v1154
    %2035 = vmatpush1.bf16.msra.mxu0 %v1153
    %2036 = vmatprep.subr.bf16.mxu0 %v1130
    %2037 = vmatpush1.bf16.msra.mxu0 %v1129
    %2038 = vmatprep.subr.bf16.mxu0 %v1106
    %2039 = vmatpush1.bf16.msra.mxu0 %v1105
    %2040 = vmatprep.subr.bf16.mxu0 %v1082
    %2041 = vmatpush1.bf16.msra.mxu0 %v1081
    %2042 = vmatprep.subr.bf16.mxu0 0
    %2043 = vmatpush2.bf16.msra.mxu0 0
    %2044 = vmatprep.subr.bf16.mxu0 0
    %2045 = vmatpush2.bf16.msra.mxu0 0
    %2046 = vmatprep.subr.bf16.mxu0 0
    %2047 = vmatpush2.bf16.msra.mxu0 0
    %2048 = vmatprep.subr.bf16.mxu0 0
    %2049 = vmatpush2.bf16.msra.mxu0 0
    %2050 = vmatprep.subr.bf16.mxu0 0
    %2051 = vmatpush2.bf16.msra.mxu0 0
    %2052 = vmatprep.subr.bf16.mxu0 0
    %2053 = vmatpush2.bf16.msra.mxu0 0
    %2054 = vmatprep.subr.bf16.mxu0 0
    %2055 = vmatpush2.bf16.msra.mxu0 0
    %2056 = vmatprep.subr.bf16.mxu0 0
    %2057 = vmatpush2.bf16.msra.mxu0 0
    %2058 = vmatprep.mubr.bf16.mxu0 0
    %2059 = vmatmul.mubr.bf16.gmra.mxu0 %v163
    %v2060 = vpop.f32.mrf.mxu0
    %v2061 = vadd.f32 %v454, %v2060
    %v2062 = vpop.f32.mrf.mxu0
    %v2063 = vadd.f32 %v458, %v2062
    %v2064 = vpop.f32.mrf.mxu0
    %v2065 = vadd.f32 %v454, %v2064
    %v2066 = vpop.f32.mrf.mxu0
    %v2067 = vadd.f32 %v458, %v2066
    %2068 = vmatprep.mubr.bf16.mxu0 0
    %2069 = vmatmul.mubr.bf16.gmra.mxu0 %v164
    %v2070 = vpop.f32.mrf.mxu0
    %v2071 = vadd.f32 %v454, %v2070
    %v2072 = vpop.f32.mrf.mxu0
    %v2073 = vadd.f32 %v458, %v2072
    %v2074 = vpop.f32.mrf.mxu0
    %v2075 = vadd.f32 %v454, %v2074
    %v2076 = vpop.f32.mrf.mxu0
    %v2077 = vadd.f32 %v458, %v2076
    %2078 = vdwg.mxu0
    %v2079 = vmul.f32 %v1478, 0.5
    %v2080 = vmul.f32 %v1480, 0.5
    %v2081 = vmul.f32 %v1531, 0.5
    %v2082 = vmul.f32 %v1533, 0.5
    %v2083 = vmul.f32 %v1584, 0.5
    %v2084 = vmul.f32 %v1586, 0.5
    %v2085 = vmul.f32 %v1637, 0.5
    %v2086 = vmul.f32 %v1639, 0.5
    %v2087 = vmul.f32 %v1690, 0.5
    %v2088 = vmul.f32 %v1692, 0.5
    %v2089 = vmul.f32 %v1743, 0.5
    %v2090 = vmul.f32 %v1745, 0.5
    %v2091 = vmul.f32 %v1796, 0.5
    %v2092 = vmul.f32 %v1798, 0.5
    %v2093 = vmul.f32 %v1849, 0.5
    %v2094 = vmul.f32 %v1851, 0.5
    %v2095 = vmul.f32 %v1902, 0.5
    %v2096 = vmul.f32 %v1904, 0.5
    %v2097 = vmul.f32 %v1955, 0.5
    %v2098 = vmul.f32 %v1957, 0.5
    %v2099 = vmul.f32 %v2008, 0.5
    %v2100 = vmul.f32 %v2010, 0.5
    %v2101 = vmul.f32 %v2061, 0.5
    %v2102 = vmul.f32 %v2063, 0.5
    %v2103 = vmul.f32 %v1482, 0.5
    %v2104 = vmul.f32 %v1484, 0.5
    %v2105 = vmul.f32 %v1535, 0.5
    %v2106 = vmul.f32 %v1537, 0.5
    %v2107 = vmul.f32 %v1588, 0.5
    %v2108 = vmul.f32 %v1590, 0.5
    %v2109 = vmul.f32 %v1641, 0.5
    %v2110 = vmul.f32 %v1643, 0.5
    %v2111 = vmul.f32 %v1694, 0.5
    %v2112 = vmul.f32 %v1696, 0.5
    %v2113 = vmul.f32 %v1747, 0.5
    %v2114 = vmul.f32 %v1749, 0.5
    %v2115 = vmul.f32 %v1800, 0.5
    %v2116 = vmul.f32 %v1802, 0.5
    %v2117 = vmul.f32 %v1853, 0.5
    %v2118 = vmul.f32 %v1855, 0.5
    %v2119 = vmul.f32 %v1906, 0.5
    %v2120 = vmul.f32 %v1908, 0.5
    %v2121 = vmul.f32 %v1959, 0.5
    %v2122 = vmul.f32 %v1961, 0.5
    %v2123 = vmul.f32 %v2012, 0.5
    %v2124 = vmul.f32 %v2014, 0.5
    %v2125 = vmul.f32 %v2065, 0.5
    %v2126 = vmul.f32 %v2067, 0.5
    %v2127 = vmul.f32 %v1488, 0.5
    %v2128 = vmul.f32 %v1490, 0.5
    %v2129 = vmul.f32 %v1541, 0.5
    %v2130 = vmul.f32 %v1543, 0.5
    %v2131 = vmul.f32 %v1594, 0.5
    %v2132 = vmul.f32 %v1596, 0.5
    %v2133 = vmul.f32 %v1647, 0.5
    %v2134 = vmul.f32 %v1649, 0.5
    %v2135 = vmul.f32 %v1700, 0.5
    %v2136 = vmul.f32 %v1702, 0.5
    %v2137 = vmul.f32 %v1753, 0.5
    %v2138 = vmul.f32 %v1755, 0.5
    %v2139 = vmul.f32 %v1806, 0.5
    %v2140 = vmul.f32 %v1808, 0.5
    %v2141 = vmul.f32 %v1859, 0.5
    %v2142 = vmul.f32 %v1861, 0.5
    %v2143 = vmul.f32 %v1912, 0.5
    %v2144 = vmul.f32 %v1914, 0.5
    %v2145 = vmul.f32 %v1965, 0.5
    %v2146 = vmul.f32 %v1967, 0.5
    %v2147 = vmul.f32 %v2018, 0.5
    %v2148 = vmul.f32 %v2020, 0.5
    %v2149 = vmul.f32 %v2071, 0.5
    %v2150 = vmul.f32 %v2073, 0.5
    %v2151 = vmul.f32 %v1492, 0.5
    %v2152 = vmul.f32 %v1494, 0.5
    %v2153 = vmul.f32 %v1545, 0.5
    %v2154 = vmul.f32 %v1547, 0.5
    %v2155 = vmul.f32 %v1598, 0.5
    %v2156 = vmul.f32 %v1600, 0.5
    %v2157 = vmul.f32 %v1651, 0.5
    %v2158 = vmul.f32 %v1653, 0.5
    %v2159 = vmul.f32 %v1704, 0.5
    %v2160 = vmul.f32 %v1706, 0.5
    %v2161 = vmul.f32 %v1757, 0.5
    %v2162 = vmul.f32 %v1759, 0.5
    %v2163 = vmul.f32 %v1810, 0.5
    %v2164 = vmul.f32 %v1812, 0.5
    %v2165 = vmul.f32 %v1863, 0.5
    %v2166 = vmul.f32 %v1865, 0.5
    %v2167 = vmul.f32 %v1916, 0.5
    %v2168 = vmul.f32 %v1918, 0.5
    %v2169 = vmul.f32 %v1969, 0.5
    %v2170 = vmul.f32 %v1971, 0.5
    %v2171 = vmul.f32 %v2022, 0.5
    %v2172 = vmul.f32 %v2024, 0.5
    %v2173 = vmul.f32 %v2075, 0.5
    %v2174 = vmul.f32 %v2077, 0.5
    %v2175 = vmul.f32 %v1478, 0.044715
    %v2176 = vmul.f32 %v1480, 0.044715
    %v2177 = vmul.f32 %v1531, 0.044715
    %v2178 = vmul.f32 %v1533, 0.044715
    %v2179 = vmul.f32 %v1584, 0.044715
    %v2180 = vmul.f32 %v1586, 0.044715
    %v2181 = vmul.f32 %v1637, 0.044715
    %v2182 = vmul.f32 %v1639, 0.044715
    %v2183 = vmul.f32 %v1690, 0.044715
    %v2184 = vmul.f32 %v1692, 0.044715
    %v2185 = vmul.f32 %v1743, 0.044715
    %v2186 = vmul.f32 %v1745, 0.044715
    %v2187 = vmul.f32 %v1796, 0.044715
    %v2188 = vmul.f32 %v1798, 0.044715
    %v2189 = vmul.f32 %v1849, 0.044715
    %v2190 = vmul.f32 %v1851, 0.044715
    %v2191 = vmul.f32 %v1902, 0.044715
    %v2192 = vmul.f32 %v1904, 0.044715
    %v2193 = vmul.f32 %v1955, 0.044715
    %v2194 = vmul.f32 %v1957, 0.044715
    %v2195 = vmul.f32 %v2008, 0.044715
    %v2196 = vmul.f32 %v2010, 0.044715
    %v2197 = vmul.f32 %v2061, 0.044715
    %v2198 = vmul.f32 %v2063, 0.044715
    %v2199 = vmul.f32 %v1482, 0.044715
    %v2200 = vmul.f32 %v1484, 0.044715
    %v2201 = vmul.f32 %v1535, 0.044715
    %v2202 = vmul.f32 %v1537, 0.044715
    %v2203 = vmul.f32 %v1588, 0.044715
    %v2204 = vmul.f32 %v1590, 0.044715
    %v2205 = vmul.f32 %v1641, 0.044715
    %v2206 = vmul.f32 %v1643, 0.044715
    %v2207 = vmul.f32 %v1694, 0.044715
    %v2208 = vmul.f32 %v1696, 0.044715
    %v2209 = vmul.f32 %v1747, 0.044715
    %v2210 = vmul.f32 %v1749, 0.044715
    %v2211 = vmul.f32 %v1800, 0.044715
    %v2212 = vmul.f32 %v1802, 0.044715
    %v2213 = vmul.f32 %v1853, 0.044715
    %v2214 = vmul.f32 %v1855, 0.044715
    %v2215 = vmul.f32 %v1906, 0.044715
    %v2216 = vmul.f32 %v1908, 0.044715
    %v2217 = vmul.f32 %v1959, 0.044715
    %v2218 = vmul.f32 %v1961, 0.044715
    %v2219 = vmul.f32 %v2012, 0.044715
    %v2220 = vmul.f32 %v2014, 0.044715
    %v2221 = vmul.f32 %v2065, 0.044715
    %v2222 = vmul.f32 %v2067, 0.044715
    %v2223 = vmul.f32 %v1488, 0.044715
    %v2224 = vmul.f32 %v1490, 0.044715
    %v2225 = vmul.f32 %v1541, 0.044715
    %v2226 = vmul.f32 %v1543, 0.044715
    %v2227 = vmul.f32 %v1594, 0.044715
    %v2228 = vmul.f32 %v1596, 0.044715
    %v2229 = vmul.f32 %v1647, 0.044715
    %v2230 = vmul.f32 %v1649, 0.044715
    %v2231 = vmul.f32 %v1700, 0.044715
    %v2232 = vmul.f32 %v1702, 0.044715
    %v2233 = vmul.f32 %v1753, 0.044715
    %v2234 = vmul.f32 %v1755, 0.044715
    %v2235 = vmul.f32 %v1806, 0.044715
    %v2236 = vmul.f32 %v1808, 0.044715
    %v2237 = vmul.f32 %v1859, 0.044715
    %v2238 = vmul.f32 %v1861, 0.044715
    %v2239 = vmul.f32 %v1912, 0.044715
    %v2240 = vmul.f32 %v1914, 0.044715
    %v2241 = vmul.f32 %v1965, 0.044715
    %v2242 = vmul.f32 %v1967, 0.044715
    %v2243 = vmul.f32 %v2018, 0.044715
    %v2244 = vmul.f32 %v2020, 0.044715
    %v2245 = vmul.f32 %v2071, 0.044715
    %v2246 = vmul.f32 %v2073, 0.044715
    %v2247 = vmul.f32 %v1492, 0.044715
    %v2248 = vmul.f32 %v1494, 0.044715
    %v2249 = vmul.f32 %v1545, 0.044715
    %v2250 = vmul.f32 %v1547, 0.044715
    %v2251 = vmul.f32 %v1598, 0.044715
    %v2252 = vmul.f32 %v1600, 0.044715
    %v2253 = vmul.f32 %v1651, 0.044715
    %v2254 = vmul.f32 %v1653, 0.044715
    %v2255 = vmul.f32 %v1704, 0.044715
    %v2256 = vmul.f32 %v1706, 0.044715
    %v2257 = vmul.f32 %v1757, 0.044715
    %v2258 = vmul.f32 %v1759, 0.044715
    %v2259 = vmul.f32 %v1810, 0.044715
    %v2260 = vmul.f32 %v1812, 0.044715
    %v2261 = vmul.f32 %v1863, 0.044715
    %v2262 = vmul.f32 %v1865, 0.044715
    %v2263 = vmul.f32 %v1916, 0.044715
    %v2264 = vmul.f32 %v1918, 0.044715
    %v2265 = vmul.f32 %v1969, 0.044715
    %v2266 = vmul.f32 %v1971, 0.044715
    %v2267 = vmul.f32 %v2022, 0.044715
    %v2268 = vmul.f32 %v2024, 0.044715
    %v2269 = vmul.f32 %v2075, 0.044715
    %v2270 = vmul.f32 %v2077, 0.044715
    %v2271 = vmul.f32 %v2175, %v1478
    %v2272 = vmul.f32 %v2176, %v1480
    %v2273 = vmul.f32 %v2177, %v1531
    %v2274 = vmul.f32 %v2178, %v1533
    %v2275 = vmul.f32 %v2179, %v1584
    %v2276 = vmul.f32 %v2180, %v1586
    %v2277 = vmul.f32 %v2181, %v1637
    %v2278 = vmul.f32 %v2182, %v1639
    %v2279 = vmul.f32 %v2183, %v1690
    %v2280 = vmul.f32 %v2184, %v1692
    %v2281 = vmul.f32 %v2185, %v1743
    %v2282 = vmul.f32 %v2186, %v1745
    %v2283 = vmul.f32 %v2187, %v1796
    %v2284 = vmul.f32 %v2188, %v1798
    %v2285 = vmul.f32 %v2189, %v1849
    %v2286 = vmul.f32 %v2190, %v1851
    %v2287 = vmul.f32 %v2191, %v1902
    %v2288 = vmul.f32 %v2192, %v1904
    %v2289 = vmul.f32 %v2193, %v1955
    %v2290 = vmul.f32 %v2194, %v1957
    %v2291 = vmul.f32 %v2195, %v2008
    %v2292 = vmul.f32 %v2196, %v2010
    %v2293 = vmul.f32 %v2197, %v2061
    %v2294 = vmul.f32 %v2198, %v2063
    %v2295 = vmul.f32 %v2199, %v1482
    %v2296 = vmul.f32 %v2200, %v1484
    %v2297 = vmul.f32 %v2201, %v1535
    %v2298 = vmul.f32 %v2202, %v1537
    %v2299 = vmul.f32 %v2203, %v1588
    %v2300 = vmul.f32 %v2204, %v1590
    %v2301 = vmul.f32 %v2205, %v1641
    %v2302 = vmul.f32 %v2206, %v1643
    %v2303 = vmul.f32 %v2207, %v1694
    %v2304 = vmul.f32 %v2208, %v1696
    %v2305 = vmul.f32 %v2209, %v1747
    %v2306 = vmul.f32 %v2210, %v1749
    %v2307 = vmul.f32 %v2211, %v1800
    %v2308 = vmul.f32 %v2212, %v1802
    %v2309 = vmul.f32 %v2213, %v1853
    %v2310 = vmul.f32 %v2214, %v1855
    %v2311 = vmul.f32 %v2215, %v1906
    %v2312 = vmul.f32 %v2216, %v1908
    %v2313 = vmul.f32 %v2217, %v1959
    %v2314 = vmul.f32 %v2218, %v1961
    %v2315 = vmul.f32 %v2219, %v2012
    %v2316 = vmul.f32 %v2220, %v2014
    %v2317 = vmul.f32 %v2221, %v2065
    %v2318 = vmul.f32 %v2222, %v2067
    %v2319 = vmul.f32 %v2223, %v1488
    %v2320 = vmul.f32 %v2224, %v1490
    %v2321 = vmul.f32 %v2225, %v1541
    %v2322 = vmul.f32 %v2226, %v1543
    %v2323 = vmul.f32 %v2227, %v1594
    %v2324 = vmul.f32 %v2228, %v1596
    %v2325 = vmul.f32 %v2229, %v1647
    %v2326 = vmul.f32 %v2230, %v1649
    %v2327 = vmul.f32 %v2231, %v1700
    %v2328 = vmul.f32 %v2232, %v1702
    %v2329 = vmul.f32 %v2233, %v1753
    %v2330 = vmul.f32 %v2234, %v1755
    %v2331 = vmul.f32 %v2235, %v1806
    %v2332 = vmul.f32 %v2236, %v1808
    %v2333 = vmul.f32 %v2237, %v1859
    %v2334 = vmul.f32 %v2238, %v1861
    %v2335 = vmul.f32 %v2239, %v1912
    %v2336 = vmul.f32 %v2240, %v1914
    %v2337 = vmul.f32 %v2241, %v1965
    %v2338 = vmul.f32 %v2242, %v1967
    %v2339 = vmul.f32 %v2243, %v2018
    %v2340 = vmul.f32 %v2244, %v2020
    %v2341 = vmul.f32 %v2245, %v2071
    %v2342 = vmul.f32 %v2246, %v2073
    %v2343 = vmul.f32 %v2247, %v1492
    %v2344 = vmul.f32 %v2248, %v1494
    %v2345 = vmul.f32 %v2249, %v1545
    %v2346 = vmul.f32 %v2250, %v1547
    %v2347 = vmul.f32 %v2251, %v1598
    %v2348 = vmul.f32 %v2252, %v1600
    %v2349 = vmul.f32 %v2253, %v1651
    %v2350 = vmul.f32 %v2254, %v1653
    %v2351 = vmul.f32 %v2255, %v1704
    %v2352 = vmul.f32 %v2256, %v1706
    %v2353 = vmul.f32 %v2257, %v1757
    %v2354 = vmul.f32 %v2258, %v1759
    %v2355 = vmul.f32 %v2259, %v1810
    %v2356 = vmul.f32 %v2260, %v1812
    %v2357 = vmul.f32 %v2261, %v1863
    %v2358 = vmul.f32 %v2262, %v1865
    %v2359 = vmul.f32 %v2263, %v1916
    %v2360 = vmul.f32 %v2264, %v1918
    %v2361 = vmul.f32 %v2265, %v1969
    %v2362 = vmul.f32 %v2266, %v1971
    %v2363 = vmul.f32 %v2267, %v2022
    %v2364 = vmul.f32 %v2268, %v2024
    %v2365 = vmul.f32 %v2269, %v2075
    %v2366 = vmul.f32 %v2270, %v2077
    %v2367 = vmul.f32 %v2271, %v1478
    %v2368 = vmul.f32 %v2272, %v1480
    %v2369 = vmul.f32 %v2273, %v1531
    %v2370 = vmul.f32 %v2274, %v1533
    %v2371 = vmul.f32 %v2275, %v1584
    %v2372 = vmul.f32 %v2276, %v1586
    %v2373 = vmul.f32 %v2277, %v1637
    %v2374 = vmul.f32 %v2278, %v1639
    %v2375 = vmul.f32 %v2279, %v1690
    %v2376 = vmul.f32 %v2280, %v1692
    %v2377 = vmul.f32 %v2281, %v1743
    %v2378 = vmul.f32 %v2282, %v1745
    %v2379 = vmul.f32 %v2283, %v1796
    %v2380 = vmul.f32 %v2284, %v1798
    %v2381 = vmul.f32 %v2285, %v1849
    %v2382 = vmul.f32 %v2286, %v1851
    %v2383 = vmul.f32 %v2287, %v1902
    %v2384 = vmul.f32 %v2288, %v1904
    %v2385 = vmul.f32 %v2289, %v1955
    %v2386 = vmul.f32 %v2290, %v1957
    %v2387 = vmul.f32 %v2291, %v2008
    %v2388 = vmul.f32 %v2292, %v2010
    %v2389 = vmul.f32 %v2293, %v2061
    %v2390 = vmul.f32 %v2294, %v2063
    %v2391 = vmul.f32 %v2295, %v1482
    %v2392 = vmul.f32 %v2296, %v1484
    %v2393 = vmul.f32 %v2297, %v1535
    %v2394 = vmul.f32 %v2298, %v1537
    %v2395 = vmul.f32 %v2299, %v1588
    %v2396 = vmul.f32 %v2300, %v1590
    %v2397 = vmul.f32 %v2301, %v1641
    %v2398 = vmul.f32 %v2302, %v1643
    %v2399 = vmul.f32 %v2303, %v1694
    %v2400 = vmul.f32 %v2304, %v1696
    %v2401 = vmul.f32 %v2305, %v1747
    %v2402 = vmul.f32 %v2306, %v1749
    %v2403 = vmul.f32 %v2307, %v1800
    %v2404 = vmul.f32 %v2308, %v1802
    %v2405 = vmul.f32 %v2309, %v1853
    %v2406 = vmul.f32 %v2310, %v1855
    %v2407 = vmul.f32 %v2311, %v1906
    %v2408 = vmul.f32 %v2312, %v1908
    %v2409 = vmul.f32 %v2313, %v1959
    %v2410 = vmul.f32 %v2314, %v1961
    %v2411 = vmul.f32 %v2315, %v2012
    %v2412 = vmul.f32 %v2316, %v2014
    %v2413 = vmul.f32 %v2317, %v2065
    %v2414 = vmul.f32 %v2318, %v2067
    %v2415 = vmul.f32 %v2319, %v1488
    %v2416 = vmul.f32 %v2320, %v1490
    %v2417 = vmul.f32 %v2321, %v1541
    %v2418 = vmul.f32 %v2322, %v1543
    %v2419 = vmul.f32 %v2323, %v1594
    %v2420 = vmul.f32 %v2324, %v1596
    %v2421 = vmul.f32 %v2325, %v1647
    %v2422 = vmul.f32 %v2326, %v1649
    %v2423 = vmul.f32 %v2327, %v1700
    %v2424 = vmul.f32 %v2328, %v1702
    %v2425 = vmul.f32 %v2329, %v1753
    %v2426 = vmul.f32 %v2330, %v1755
    %v2427 = vmul.f32 %v2331, %v1806
    %v2428 = vmul.f32 %v2332, %v1808
    %v2429 = vmul.f32 %v2333, %v1859
    %v2430 = vmul.f32 %v2334, %v1861
    %v2431 = vmul.f32 %v2335, %v1912
    %v2432 = vmul.f32 %v2336, %v1914
    %v2433 = vmul.f32 %v2337, %v1965
    %v2434 = vmul.f32 %v2338, %v1967
    %v2435 = vmul.f32 %v2339, %v2018
    %v2436 = vmul.f32 %v2340, %v2020
    %v2437 = vmul.f32 %v2341, %v2071
    %v2438 = vmul.f32 %v2342, %v2073
    %v2439 = vmul.f32 %v2343, %v1492
    %v2440 = vmul.f32 %v2344, %v1494
    %v2441 = vmul.f32 %v2345, %v1545
    %v2442 = vmul.f32 %v2346, %v1547
    %v2443 = vmul.f32 %v2347, %v1598
    %v2444 = vmul.f32 %v2348, %v1600
    %v2445 = vmul.f32 %v2349, %v1651
    %v2446 = vmul.f32 %v2350, %v1653
    %v2447 = vmul.f32 %v2351, %v1704
    %v2448 = vmul.f32 %v2352, %v1706
    %v2449 = vmul.f32 %v2353, %v1757
    %v2450 = vmul.f32 %v2354, %v1759
    %v2451 = vmul.f32 %v2355, %v1810
    %v2452 = vmul.f32 %v2356, %v1812
    %v2453 = vmul.f32 %v2357, %v1863
    %v2454 = vmul.f32 %v2358, %v1865
    %v2455 = vmul.f32 %v2359, %v1916
    %v2456 = vmul.f32 %v2360, %v1918
    %v2457 = vmul.f32 %v2361, %v1969
    %v2458 = vmul.f32 %v2362, %v1971
    %v2459 = vmul.f32 %v2363, %v2022
    %v2460 = vmul.f32 %v2364, %v2024
    %v2461 = vmul.f32 %v2365, %v2075
    %v2462 = vmul.f32 %v2366, %v2077
    %v2463 = vadd.f32 %v1478, %v2367
    %v2464 = vadd.f32 %v1480, %v2368
    %v2465 = vadd.f32 %v1531, %v2369
    %v2466 = vadd.f32 %v1533, %v2370
    %v2467 = vadd.f32 %v1584, %v2371
    %v2468 = vadd.f32 %v1586, %v2372
    %v2469 = vadd.f32 %v1637, %v2373
    %v2470 = vadd.f32 %v1639, %v2374
    %v2471 = vadd.f32 %v1690, %v2375
    %v2472 = vadd.f32 %v1692, %v2376
    %v2473 = vadd.f32 %v1743, %v2377
    %v2474 = vadd.f32 %v1745, %v2378
    %v2475 = vadd.f32 %v1796, %v2379
    %v2476 = vadd.f32 %v1798, %v2380
    %v2477 = vadd.f32 %v1849, %v2381
    %v2478 = vadd.f32 %v1851, %v2382
    %v2479 = vadd.f32 %v1902, %v2383
    %v2480 = vadd.f32 %v1904, %v2384
    %v2481 = vadd.f32 %v1955, %v2385
    %v2482 = vadd.f32 %v1957, %v2386
    %v2483 = vadd.f32 %v2008, %v2387
    %v2484 = vadd.f32 %v2010, %v2388
    %v2485 = vadd.f32 %v2061, %v2389
    %v2486 = vadd.f32 %v2063, %v2390
    %v2487 = vadd.f32 %v1482, %v2391
    %v2488 = vadd.f32 %v1484, %v2392
    %v2489 = vadd.f32 %v1535, %v2393
    %v2490 = vadd.f32 %v1537, %v2394
    %v2491 = vadd.f32 %v1588, %v2395
    %v2492 = vadd.f32 %v1590, %v2396
    %v2493 = vadd.f32 %v1641, %v2397
    %v2494 = vadd.f32 %v1643, %v2398
    %v2495 = vadd.f32 %v1694, %v2399
    %v2496 = vadd.f32 %v1696, %v2400
    %v2497 = vadd.f32 %v1747, %v2401
    %v2498 = vadd.f32 %v1749, %v2402
    %v2499 = vadd.f32 %v1800, %v2403
    %v2500 = vadd.f32 %v1802, %v2404
    %v2501 = vadd.f32 %v1853, %v2405
    %v2502 = vadd.f32 %v1855, %v2406
    %v2503 = vadd.f32 %v1906, %v2407
    %v2504 = vadd.f32 %v1908, %v2408
    %v2505 = vadd.f32 %v1959, %v2409
    %v2506 = vadd.f32 %v1961, %v2410
    %v2507 = vadd.f32 %v2012, %v2411
    %v2508 = vadd.f32 %v2014, %v2412
    %v2509 = vadd.f32 %v2065, %v2413
    %v2510 = vadd.f32 %v2067, %v2414
    %v2511 = vadd.f32 %v1488, %v2415
    %v2512 = vadd.f32 %v1490, %v2416
    %v2513 = vadd.f32 %v1541, %v2417
    %v2514 = vadd.f32 %v1543, %v2418
    %v2515 = vadd.f32 %v1594, %v2419
    %v2516 = vadd.f32 %v1596, %v2420
    %v2517 = vadd.f32 %v1647, %v2421
    %v2518 = vadd.f32 %v1649, %v2422
    %v2519 = vadd.f32 %v1700, %v2423
    %v2520 = vadd.f32 %v1702, %v2424
    %v2521 = vadd.f32 %v1753, %v2425
    %v2522 = vadd.f32 %v1755, %v2426
    %v2523 = vadd.f32 %v1806, %v2427
    %v2524 = vadd.f32 %v1808, %v2428
    %v2525 = vadd.f32 %v1859, %v2429
    %v2526 = vadd.f32 %v1861, %v2430
    %v2527 = vadd.f32 %v1912, %v2431
    %v2528 = vadd.f32 %v1914, %v2432
    %v2529 = vadd.f32 %v1965, %v2433
    %v2530 = vadd.f32 %v1967, %v2434
    %v2531 = vadd.f32 %v2018, %v2435
    %v2532 = vadd.f32 %v2020, %v2436
    %v2533 = vadd.f32 %v2071, %v2437
    %v2534 = vadd.f32 %v2073, %v2438
    %v2535 = vadd.f32 %v1492, %v2439
    %v2536 = vadd.f32 %v1494, %v2440
    %v2537 = vadd.f32 %v1545, %v2441
    %v2538 = vadd.f32 %v1547, %v2442
    %v2539 = vadd.f32 %v1598, %v2443
    %v2540 = vadd.f32 %v1600, %v2444
    %v2541 = vadd.f32 %v1651, %v2445
    %v2542 = vadd.f32 %v1653, %v2446
    %v2543 = vadd.f32 %v1704, %v2447
    %v2544 = vadd.f32 %v1706, %v2448
    %v2545 = vadd.f32 %v1757, %v2449
    %v2546 = vadd.f32 %v1759, %v2450
    %v2547 = vadd.f32 %v1810, %v2451
    %v2548 = vadd.f32 %v1812, %v2452
    %v2549 = vadd.f32 %v1863, %v2453
    %v2550 = vadd.f32 %v1865, %v2454
    %v2551 = vadd.f32 %v1916, %v2455
    %v2552 = vadd.f32 %v1918, %v2456
    %v2553 = vadd.f32 %v1969, %v2457
    %v2554 = vadd.f32 %v1971, %v2458
    %v2555 = vadd.f32 %v2022, %v2459
    %v2556 = vadd.f32 %v2024, %v2460
    %v2557 = vadd.f32 %v2075, %v2461
    %v2558 = vadd.f32 %v2077, %v2462
    %v2559 = vmul.f32 %v2463, 0.7978846
    %v2560 = vmul.f32 %v2464, 0.7978846
    %v2561 = vmul.f32 %v2465, 0.7978846
    %v2562 = vmul.f32 %v2466, 0.7978846
    %v2563 = vmul.f32 %v2467, 0.7978846
    %v2564 = vmul.f32 %v2468, 0.7978846
    %v2565 = vmul.f32 %v2469, 0.7978846
    %v2566 = vmul.f32 %v2470, 0.7978846
    %v2567 = vmul.f32 %v2471, 0.7978846
    %v2568 = vmul.f32 %v2472, 0.7978846
    %v2569 = vmul.f32 %v2473, 0.7978846
    %v2570 = vmul.f32 %v2474, 0.7978846
    %v2571 = vmul.f32 %v2475, 0.7978846
    %v2572 = vmul.f32 %v2476, 0.7978846
    %v2573 = vmul.f32 %v2477, 0.7978846
    %v2574 = vmul.f32 %v2478, 0.7978846
    %v2575 = vmul.f32 %v2479, 0.7978846
    %v2576 = vmul.f32 %v2480, 0.7978846
    %v2577 = vmul.f32 %v2481, 0.7978846
    %v2578 = vmul.f32 %v2482, 0.7978846
    %v2579 = vmul.f32 %v2483, 0.7978846
    %v2580 = vmul.f32 %v2484, 0.7978846
    %v2581 = vmul.f32 %v2485, 0.7978846
    %v2582 = vmul.f32 %v2486, 0.7978846
    %v2583 = vmul.f32 %v2487, 0.7978846
    %v2584 = vmul.f32 %v2488, 0.7978846
    %v2585 = vmul.f32 %v2489, 0.7978846
    %v2586 = vmul.f32 %v2490, 0.7978846
    %v2587 = vmul.f32 %v2491, 0.7978846
    %v2588 = vmul.f32 %v2492, 0.7978846
    %v2589 = vmul.f32 %v2493, 0.7978846
    %v2590 = vmul.f32 %v2494, 0.7978846
    %v2591 = vmul.f32 %v2495, 0.7978846
    %v2592 = vmul.f32 %v2496, 0.7978846
    %v2593 = vmul.f32 %v2497, 0.7978846
    %v2594 = vmul.f32 %v2498, 0.7978846
    %v2595 = vmul.f32 %v2499, 0.7978846
    %v2596 = vmul.f32 %v2500, 0.7978846
    %v2597 = vmul.f32 %v2501, 0.7978846
    %v2598 = vmul.f32 %v2502, 0.7978846
    %v2599 = vmul.f32 %v2503, 0.7978846
    %v2600 = vmul.f32 %v2504, 0.7978846
    %v2601 = vmul.f32 %v2505, 0.7978846
    %v2602 = vmul.f32 %v2506, 0.7978846
    %v2603 = vmul.f32 %v2507, 0.7978846
    %v2604 = vmul.f32 %v2508, 0.7978846
    %v2605 = vmul.f32 %v2509, 0.7978846
    %v2606 = vmul.f32 %v2510, 0.7978846
    %v2607 = vmul.f32 %v2511, 0.7978846
    %v2608 = vmul.f32 %v2512, 0.7978846
    %v2609 = vmul.f32 %v2513, 0.7978846
    %v2610 = vmul.f32 %v2514, 0.7978846
    %v2611 = vmul.f32 %v2515, 0.7978846
    %v2612 = vmul.f32 %v2516, 0.7978846
    %v2613 = vmul.f32 %v2517, 0.7978846
    %v2614 = vmul.f32 %v2518, 0.7978846
    %v2615 = vmul.f32 %v2519, 0.7978846
    %v2616 = vmul.f32 %v2520, 0.7978846
    %v2617 = vmul.f32 %v2521, 0.7978846
    %v2618 = vmul.f32 %v2522, 0.7978846
    %v2619 = vmul.f32 %v2523, 0.7978846
    %v2620 = vmul.f32 %v2524, 0.7978846
    %v2621 = vmul.f32 %v2525, 0.7978846
    %v2622 = vmul.f32 %v2526, 0.7978846
    %v2623 = vmul.f32 %v2527, 0.7978846
    %v2624 = vmul.f32 %v2528, 0.7978846
    %v2625 = vmul.f32 %v2529, 0.7978846
    %v2626 = vmul.f32 %v2530, 0.7978846
    %v2627 = vmul.f32 %v2531, 0.7978846
    %v2628 = vmul.f32 %v2532, 0.7978846
    %v2629 = vmul.f32 %v2533, 0.7978846
    %v2630 = vmul.f32 %v2534, 0.7978846
    %v2631 = vmul.f32 %v2535, 0.7978846
    %v2632 = vmul.f32 %v2536, 0.7978846
    %v2633 = vmul.f32 %v2537, 0.7978846
    %v2634 = vmul.f32 %v2538, 0.7978846
    %v2635 = vmul.f32 %v2539, 0.7978846
    %v2636 = vmul.f32 %v2540, 0.7978846
    %v2637 = vmul.f32 %v2541, 0.7978846
    %v2638 = vmul.f32 %v2542, 0.7978846
    %v2639 = vmul.f32 %v2543, 0.7978846
    %v2640 = vmul.f32 %v2544, 0.7978846
    %v2641 = vmul.f32 %v2545, 0.7978846
    %v2642 = vmul.f32 %v2546, 0.7978846
    %v2643 = vmul.f32 %v2547, 0.7978846
    %v2644 = vmul.f32 %v2548, 0.7978846
    %v2645 = vmul.f32 %v2549, 0.7978846
    %v2646 = vmul.f32 %v2550, 0.7978846
    %v2647 = vmul.f32 %v2551, 0.7978846
    %v2648 = vmul.f32 %v2552, 0.7978846
    %v2649 = vmul.f32 %v2553, 0.7978846
    %v2650 = vmul.f32 %v2554, 0.7978846
    %v2651 = vmul.f32 %v2555, 0.7978846
    %v2652 = vmul.f32 %v2556, 0.7978846
    %v2653 = vmul.f32 %v2557, 0.7978846
    %v2654 = vmul.f32 %v2558, 0.7978846
    %v2655 = vtanh.pop %v2559
    %v2656 = vtanh.pop %v2560
    %v2657 = vtanh.pop %v2561
    %v2658 = vtanh.pop %v2562
    %v2659 = vtanh.pop %v2563
    %v2660 = vtanh.pop %v2564
    %v2661 = vtanh.pop %v2565
    %v2662 = vtanh.pop %v2566
    %v2663 = vtanh.pop %v2567
    %v2664 = vtanh.pop %v2568
    %v2665 = vtanh.pop %v2569
    %v2666 = vtanh.pop %v2570
    %v2667 = vtanh.pop %v2571
    %v2668 = vtanh.pop %v2572
    %v2669 = vtanh.pop %v2573
    %v2670 = vtanh.pop %v2574
    %v2671 = vtanh.pop %v2575
    %v2672 = vtanh.pop %v2576
    %v2673 = vtanh.pop %v2577
    %v2674 = vtanh.pop %v2578
    %v2675 = vtanh.pop %v2579
    %v2676 = vtanh.pop %v2580
    %v2677 = vtanh.pop %v2581
    %v2678 = vtanh.pop %v2582
    %v2679 = vtanh.pop %v2583
    %v2680 = vtanh.pop %v2584
    %v2681 = vtanh.pop %v2585
    %v2682 = vtanh.pop %v2586
    %v2683 = vtanh.pop %v2587
    %v2684 = vtanh.pop %v2588
    %v2685 = vtanh.pop %v2589
    %v2686 = vtanh.pop %v2590
    %v2687 = vtanh.pop %v2591
    %v2688 = vtanh.pop %v2592
    %v2689 = vtanh.pop %v2593
    %v2690 = vtanh.pop %v2594
    %v2691 = vtanh.pop %v2595
    %v2692 = vtanh.pop %v2596
    %v2693 = vtanh.pop %v2597
    %v2694 = vtanh.pop %v2598
    %v2695 = vtanh.pop %v2599
    %v2696 = vtanh.pop %v2600
    %v2697 = vtanh.pop %v2601
    %v2698 = vtanh.pop %v2602
    %v2699 = vtanh.pop %v2603
    %v2700 = vtanh.pop %v2604
    %v2701 = vtanh.pop %v2605
    %v2702 = vtanh.pop %v2606
    %v2703 = vtanh.pop %v2607
    %v2704 = vtanh.pop %v2608
    %v2705 = vtanh.pop %v2609
    %v2706 = vtanh.pop %v2610
    %v2707 = vtanh.pop %v2611
    %v2708 = vtanh.pop %v2612
    %v2709 = vtanh.pop %v2613
    %v2710 = vtanh.pop %v2614
    %v2711 = vtanh.pop %v2615
    %v2712 = vtanh.pop %v2616
    %v2713 = vtanh.pop %v2617
    %v2714 = vtanh.pop %v2618
    %v2715 = vtanh.pop %v2619
    %v2716 = vtanh.pop %v2620
    %v2717 = vtanh.pop %v2621
    %v2718 = vtanh.pop %v2622
    %v2719 = vtanh.pop %v2623
    %v2720 = vtanh.pop %v2624
    %v2721 = vtanh.pop %v2625
    %v2722 = vtanh.pop %v2626
    %v2723 = vtanh.pop %v2627
    %v2724 = vtanh.pop %v2628
    %v2725 = vtanh.pop %v2629
    %v2726 = vtanh.pop %v2630
    %v2727 = vtanh.pop %v2631
    %v2728 = vtanh.pop %v2632
    %v2729 = vtanh.pop %v2633
    %v2730 = vtanh.pop %v2634
    %v2731 = vtanh.pop %v2635
    %v2732 = vtanh.pop %v2636
    %v2733 = vtanh.pop %v2637
    %v2734 = vtanh.pop %v2638
    %v2735 = vtanh.pop %v2639
    %v2736 = vtanh.pop %v2640
    %v2737 = vtanh.pop %v2641
    %v2738 = vtanh.pop %v2642
    %v2739 = vtanh.pop %v2643
    %v2740 = vtanh.pop %v2644
    %v2741 = vtanh.pop %v2645
    %v2742 = vtanh.pop %v2646
    %v2743 = vtanh.pop %v2647
    %v2744 = vtanh.pop %v2648
    %v2745 = vtanh.pop %v2649
    %v2746 = vtanh.pop %v2650
    %v2747 = vtanh.pop %v2651
    %v2748 = vtanh.pop %v2652
    %v2749 = vtanh.pop %v2653
    %v2750 = vtanh.pop %v2654
    %v2751 = vadd.f32 %v2655, 1.0
    %v2752 = vadd.f32 %v2656, 1.0
    %v2753 = vadd.f32 %v2657, 1.0
    %v2754 = vadd.f32 %v2658, 1.0
    %v2755 = vadd.f32 %v2659, 1.0
    %v2756 = vadd.f32 %v2660, 1.0
    %v2757 = vadd.f32 %v2661, 1.0
    %v2758 = vadd.f32 %v2662, 1.0
    %v2759 = vadd.f32 %v2663, 1.0
    %v2760 = vadd.f32 %v2664, 1.0
    %v2761 = vadd.f32 %v2665, 1.0
    %v2762 = vadd.f32 %v2666, 1.0
    %v2763 = vadd.f32 %v2667, 1.0
    %v2764 = vadd.f32 %v2668, 1.0
    %v2765 = vadd.f32 %v2669, 1.0
    %v2766 = vadd.f32 %v2670, 1.0
    %v2767 = vadd.f32 %v2671, 1.0
    %v2768 = vadd.f32 %v2672, 1.0
    %v2769 = vadd.f32 %v2673, 1.0
    %v2770 = vadd.f32 %v2674, 1.0
    %v2771 = vadd.f32 %v2675, 1.0
    %v2772 = vadd.f32 %v2676, 1.0
    %v2773 = vadd.f32 %v2677, 1.0
    %v2774 = vadd.f32 %v2678, 1.0
    %v2775 = vadd.f32 %v2679, 1.0
    %v2776 = vadd.f32 %v2680, 1.0
    %v2777 = vadd.f32 %v2681, 1.0
    %v2778 = vadd.f32 %v2682, 1.0
    %v2779 = vadd.f32 %v2683, 1.0
    %v2780 = vadd.f32 %v2684, 1.0
    %v2781 = vadd.f32 %v2685, 1.0
    %v2782 = vadd.f32 %v2686, 1.0
    %v2783 = vadd.f32 %v2687, 1.0
    %v2784 = vadd.f32 %v2688, 1.0
    %v2785 = vadd.f32 %v2689, 1.0
    %v2786 = vadd.f32 %v2690, 1.0
    %v2787 = vadd.f32 %v2691, 1.0
    %v2788 = vadd.f32 %v2692, 1.0
    %v2789 = vadd.f32 %v2693, 1.0
    %v2790 = vadd.f32 %v2694, 1.0
    %v2791 = vadd.f32 %v2695, 1.0
    %v2792 = vadd.f32 %v2696, 1.0
    %v2793 = vadd.f32 %v2697, 1.0
    %v2794 = vadd.f32 %v2698, 1.0
    %v2795 = vadd.f32 %v2699, 1.0
    %v2796 = vadd.f32 %v2700, 1.0
    %v2797 = vadd.f32 %v2701, 1.0
    %v2798 = vadd.f32 %v2702, 1.0
    %v2799 = vadd.f32 %v2703, 1.0
    %v2800 = vadd.f32 %v2704, 1.0
    %v2801 = vadd.f32 %v2705, 1.0
    %v2802 = vadd.f32 %v2706, 1.0
    %v2803 = vadd.f32 %v2707, 1.0
    %v2804 = vadd.f32 %v2708, 1.0
    %v2805 = vadd.f32 %v2709, 1.0
    %v2806 = vadd.f32 %v2710, 1.0
    %v2807 = vadd.f32 %v2711, 1.0
    %v2808 = vadd.f32 %v2712, 1.0
    %v2809 = vadd.f32 %v2713, 1.0
    %v2810 = vadd.f32 %v2714, 1.0
    %v2811 = vadd.f32 %v2715, 1.0
    %v2812 = vadd.f32 %v2716, 1.0
    %v2813 = vadd.f32 %v2717, 1.0
    %v2814 = vadd.f32 %v2718, 1.0
    %v2815 = vadd.f32 %v2719, 1.0
    %v2816 = vadd.f32 %v2720, 1.0
    %v2817 = vadd.f32 %v2721, 1.0
    %v2818 = vadd.f32 %v2722, 1.0
    %v2819 = vadd.f32 %v2723, 1.0
    %v2820 = vadd.f32 %v2724, 1.0
    %v2821 = vadd.f32 %v2725, 1.0
    %v2822 = vadd.f32 %v2726, 1.0
    %v2823 = vadd.f32 %v2727, 1.0
    %v2824 = vadd.f32 %v2728, 1.0
    %v2825 = vadd.f32 %v2729, 1.0
    %v2826 = vadd.f32 %v2730, 1.0
    %v2827 = vadd.f32 %v2731, 1.0
    %v2828 = vadd.f32 %v2732, 1.0
    %v2829 = vadd.f32 %v2733, 1.0
    %v2830 = vadd.f32 %v2734, 1.0
    %v2831 = vadd.f32 %v2735, 1.0
    %v2832 = vadd.f32 %v2736, 1.0
    %v2833 = vadd.f32 %v2737, 1.0
    %v2834 = vadd.f32 %v2738, 1.0
    %v2835 = vadd.f32 %v2739, 1.0
    %v2836 = vadd.f32 %v2740, 1.0
    %v2837 = vadd.f32 %v2741, 1.0
    %v2838 = vadd.f32 %v2742, 1.0
    %v2839 = vadd.f32 %v2743, 1.0
    %v2840 = vadd.f32 %v2744, 1.0
    %v2841 = vadd.f32 %v2745, 1.0
    %v2842 = vadd.f32 %v2746, 1.0
    %v2843 = vadd.f32 %v2747, 1.0
    %v2844 = vadd.f32 %v2748, 1.0
    %v2845 = vadd.f32 %v2749, 1.0
    %v2846 = vadd.f32 %v2750, 1.0
    %v2847 = vmul.f32 %v2079, %v2751
    %v2848 = vmul.f32 %v2080, %v2752
    %v2849 = vmul.f32 %v2081, %v2753
    %v2850 = vmul.f32 %v2082, %v2754
    %v2851 = vmul.f32 %v2083, %v2755
    %v2852 = vmul.f32 %v2084, %v2756
    %v2853 = vmul.f32 %v2085, %v2757
    %v2854 = vmul.f32 %v2086, %v2758
    %v2855 = vmul.f32 %v2087, %v2759
    %v2856 = vmul.f32 %v2088, %v2760
    %v2857 = vmul.f32 %v2089, %v2761
    %v2858 = vmul.f32 %v2090, %v2762
    %v2859 = vmul.f32 %v2091, %v2763
    %v2860 = vmul.f32 %v2092, %v2764
    %v2861 = vmul.f32 %v2093, %v2765
    %v2862 = vmul.f32 %v2094, %v2766
    %v2863 = vmul.f32 %v2095, %v2767
    %v2864 = vmul.f32 %v2096, %v2768
    %v2865 = vmul.f32 %v2097, %v2769
    %v2866 = vmul.f32 %v2098, %v2770
    %v2867 = vmul.f32 %v2099, %v2771
    %v2868 = vmul.f32 %v2100, %v2772
    %v2869 = vmul.f32 %v2101, %v2773
    %v2870 = vmul.f32 %v2102, %v2774
    %v2871 = vmul.f32 %v2103, %v2775
    %v2872 = vmul.f32 %v2104, %v2776
    %v2873 = vmul.f32 %v2105, %v2777
    %v2874 = vmul.f32 %v2106, %v2778
    %v2875 = vmul.f32 %v2107, %v2779
    %v2876 = vmul.f32 %v2108, %v2780
    %v2877 = vmul.f32 %v2109, %v2781
    %v2878 = vmul.f32 %v2110, %v2782
    %v2879 = vmul.f32 %v2111, %v2783
    %v2880 = vmul.f32 %v2112, %v2784
    %v2881 = vmul.f32 %v2113, %v2785
    %v2882 = vmul.f32 %v2114, %v2786
    %v2883 = vmul.f32 %v2115, %v2787
    %v2884 = vmul.f32 %v2116, %v2788
    %v2885 = vmul.f32 %v2117, %v2789
    %v2886 = vmul.f32 %v2118, %v2790
    %v2887 = vmul.f32 %v2119, %v2791
    %v2888 = vmul.f32 %v2120, %v2792
    %v2889 = vmul.f32 %v2121, %v2793
    %v2890 = vmul.f32 %v2122, %v2794
    %v2891 = vmul.f32 %v2123, %v2795
    %v2892 = vmul.f32 %v2124, %v2796
    %v2893 = vmul.f32 %v2125, %v2797
    %v2894 = vmul.f32 %v2126, %v2798
    %v2895 = vmul.f32 %v2127, %v2799
    %v2896 = vmul.f32 %v2128, %v2800
    %v2897 = vmul.f32 %v2129, %v2801
    %v2898 = vmul.f32 %v2130, %v2802
    %v2899 = vmul.f32 %v2131, %v2803
    %v2900 = vmul.f32 %v2132, %v2804
    %v2901 = vmul.f32 %v2133, %v2805
    %v2902 = vmul.f32 %v2134, %v2806
    %v2903 = vmul.f32 %v2135, %v2807
    %v2904 = vmul.f32 %v2136, %v2808
    %v2905 = vmul.f32 %v2137, %v2809
    %v2906 = vmul.f32 %v2138, %v2810
    %v2907 = vmul.f32 %v2139, %v2811
    %v2908 = vmul.f32 %v2140, %v2812
    %v2909 = vmul.f32 %v2141, %v2813
    %v2910 = vmul.f32 %v2142, %v2814
    %v2911 = vmul.f32 %v2143, %v2815
    %v2912 = vmul.f32 %v2144, %v2816
    %v2913 = vmul.f32 %v2145, %v2817
    %v2914 = vmul.f32 %v2146, %v2818
    %v2915 = vmul.f32 %v2147, %v2819
    %v2916 = vmul.f32 %v2148, %v2820
    %v2917 = vmul.f32 %v2149, %v2821
    %v2918 = vmul.f32 %v2150, %v2822
    %v2919 = vmul.f32 %v2151, %v2823
    %v2920 = vmul.f32 %v2152, %v2824
    %v2921 = vmul.f32 %v2153, %v2825
    %v2922 = vmul.f32 %v2154, %v2826
    %v2923 = vmul.f32 %v2155, %v2827
    %v2924 = vmul.f32 %v2156, %v2828
    %v2925 = vmul.f32 %v2157, %v2829
    %v2926 = vmul.f32 %v2158, %v2830
    %v2927 = vmul.f32 %v2159, %v2831
    %v2928 = vmul.f32 %v2160, %v2832
    %v2929 = vmul.f32 %v2161, %v2833
    %v2930 = vmul.f32 %v2162, %v2834
    %v2931 = vmul.f32 %v2163, %v2835
    %v2932 = vmul.f32 %v2164, %v2836
    %v2933 = vmul.f32 %v2165, %v2837
    %v2934 = vmul.f32 %v2166, %v2838
    %v2935 = vmul.f32 %v2167, %v2839
    %v2936 = vmul.f32 %v2168, %v2840
    %v2937 = vmul.f32 %v2169, %v2841
    %v2938 = vmul.f32 %v2170, %v2842
    %v2939 = vmul.f32 %v2171, %v2843
    %v2940 = vmul.f32 %v2172, %v2844
    %v2941 = vmul.f32 %v2173, %v2845
    %v2942 = vmul.f32 %v2174, %v2846
    %v2943 = vpack.c.bf16 %v2871, %v2847
    %v2944 = vpack.c.bf16 %v2872, %v2848
    %v2945 = vpack.c.bf16 %v2873, %v2849
    %v2946 = vpack.c.bf16 %v2874, %v2850
    %v2947 = vpack.c.bf16 %v2875, %v2851
    %v2948 = vpack.c.bf16 %v2876, %v2852
    %v2949 = vpack.c.bf16 %v2877, %v2853
    %v2950 = vpack.c.bf16 %v2878, %v2854
    %v2951 = vpack.c.bf16 %v2879, %v2855
    %v2952 = vpack.c.bf16 %v2880, %v2856
    %v2953 = vpack.c.bf16 %v2881, %v2857
    %v2954 = vpack.c.bf16 %v2882, %v2858
    %v2955 = vpack.c.bf16 %v2883, %v2859
    %v2956 = vpack.c.bf16 %v2884, %v2860
    %v2957 = vpack.c.bf16 %v2885, %v2861
    %v2958 = vpack.c.bf16 %v2886, %v2862
    %v2959 = vpack.c.bf16 %v2887, %v2863
    %v2960 = vpack.c.bf16 %v2888, %v2864
    %v2961 = vpack.c.bf16 %v2889, %v2865
    %v2962 = vpack.c.bf16 %v2890, %v2866
    %v2963 = vpack.c.bf16 %v2891, %v2867
    %v2964 = vpack.c.bf16 %v2892, %v2868
    %v2965 = vpack.c.bf16 %v2893, %v2869
    %v2966 = vpack.c.bf16 %v2894, %v2870
    %v2967 = vpack.c.bf16 %v2919, %v2895
    %v2968 = vpack.c.bf16 %v2920, %v2896
    %v2969 = vpack.c.bf16 %v2921, %v2897
    %v2970 = vpack.c.bf16 %v2922, %v2898
    %v2971 = vpack.c.bf16 %v2923, %v2899
    %v2972 = vpack.c.bf16 %v2924, %v2900
    %v2973 = vpack.c.bf16 %v2925, %v2901
    %v2974 = vpack.c.bf16 %v2926, %v2902
    %v2975 = vpack.c.bf16 %v2927, %v2903
    %v2976 = vpack.c.bf16 %v2928, %v2904
    %v2977 = vpack.c.bf16 %v2929, %v2905
    %v2978 = vpack.c.bf16 %v2930, %v2906
    %v2979 = vpack.c.bf16 %v2931, %v2907
    %v2980 = vpack.c.bf16 %v2932, %v2908
    %v2981 = vpack.c.bf16 %v2933, %v2909
    %v2982 = vpack.c.bf16 %v2934, %v2910
    %v2983 = vpack.c.bf16 %v2935, %v2911
    %v2984 = vpack.c.bf16 %v2936, %v2912
    %v2985 = vpack.c.bf16 %v2937, %v2913
    %v2986 = vpack.c.bf16 %v2938, %v2914
    %v2987 = vpack.c.bf16 %v2939, %v2915
    %v2988 = vpack.c.bf16 %v2940, %v2916
    %v2989 = vpack.c.bf16 %v2941, %v2917
    %v2990 = vpack.c.bf16 %v2942, %v2918
    %v2991 = vld [vmem:[#allocation8] sm:$0xf]
    %v2992 = vld [vmem:[#allocation8 + $0x4] sm:$0xf]
    %v2993 = vld [vmem:[#allocation8 + $0x8] sm:$0xf]
    %v2994 = vld [vmem:[#allocation8 + $0xc] sm:$0xf]
    %v2995 = vld [vmem:[#allocation8 + $0x10] sm:$0xf]
    %v2996 = vld [vmem:[#allocation8 + $0x14] sm:$0xf]
    %v2997 = vld [vmem:[#allocation8 + $0x18] sm:$0xf]
    %v2998 = vld [vmem:[#allocation8 + $0x1c] sm:$0xf]
    %v2999 = vld [vmem:[#allocation8 + $0x20] sm:$0xf]
    %v3000 = vld [vmem:[#allocation8 + $0x24] sm:$0xf]
    %v3001 = vld [vmem:[#allocation8 + $0x28] sm:$0xf]
    %v3002 = vld [vmem:[#allocation8 + $0x2c] sm:$0xf]
    %v3003 = vld [vmem:[#allocation8 + $0x30] sm:$0xf]
    %v3004 = vld [vmem:[#allocation8 + $0x34] sm:$0xf]
    %v3005 = vld [vmem:[#allocation8 + $0x38] sm:$0xf]
    %v3006 = vld [vmem:[#allocation8 + $0x3c] sm:$0xf]
    %v3007 = vld [vmem:[#allocation8 + $0x40] sm:$0xf]
    %v3008 = vld [vmem:[#allocation8 + $0x44] sm:$0xf]
    %v3009 = vld [vmem:[#allocation8 + $0x48] sm:$0xf]
    %v3010 = vld [vmem:[#allocation8 + $0x4c] sm:$0xf]
    %v3011 = vld [vmem:[#allocation8 + $0x50] sm:$0xf]
    %v3012 = vld [vmem:[#allocation8 + $0x54] sm:$0xf]
    %v3013 = vld [vmem:[#allocation8 + $0x58] sm:$0xf]
    %v3014 = vld [vmem:[#allocation8 + $0x5c] sm:$0xf]
    %v3015 = vld [vmem:[#allocation8 + $0x60] sm:$0xf]
    %v3016 = vld [vmem:[#allocation8 + $0x64] sm:$0xf]
    %v3017 = vld [vmem:[#allocation8 + $0x68] sm:$0xf]
    %v3018 = vld [vmem:[#allocation8 + $0x6c] sm:$0xf]
    %v3019 = vld [vmem:[#allocation8 + $0x70] sm:$0xf]
    %v3020 = vld [vmem:[#allocation8 + $0x74] sm:$0xf]
    %v3021 = vld [vmem:[#allocation8 + $0x78] sm:$0xf]
    %v3022 = vld [vmem:[#allocation8 + $0x7c] sm:$0xf]
    %v3023 = vld [vmem:[#allocation8 + $0x80] sm:$0xf]
    %v3024 = vld [vmem:[#allocation8 + $0x84] sm:$0xf]
    %v3025 = vld [vmem:[#allocation8 + $0x88] sm:$0xf]
    %v3026 = vld [vmem:[#allocation8 + $0x8c] sm:$0xf]
    %v3027 = vld [vmem:[#allocation8 + $0x90] sm:$0xf]
    %v3028 = vld [vmem:[#allocation8 + $0x94] sm:$0xf]
    %v3029 = vld [vmem:[#allocation8 + $0x98] sm:$0xf]
    %v3030 = vld [vmem:[#allocation8 + $0x9c] sm:$0xf]
    %v3031 = vld [vmem:[#allocation8 + $0xa0] sm:$0xf]
    %v3032 = vld [vmem:[#allocation8 + $0xa4] sm:$0xf]
    %v3033 = vld [vmem:[#allocation8 + $0xa8] sm:$0xf]
    %v3034 = vld [vmem:[#allocation8 + $0xac] sm:$0xf]
    %v3035 = vld [vmem:[#allocation8 + $0xb0] sm:$0xf]
    %v3036 = vld [vmem:[#allocation8 + $0xb4] sm:$0xf]
    %v3037 = vld [vmem:[#allocation8 + $0xb8] sm:$0xf]
    %v3038 = vld [vmem:[#allocation8 + $0xbc] sm:$0xf]
    %v3039 = vld [vmem:[#allocation8 + $0xc0] sm:$0xf]
    %v3040 = vld [vmem:[#allocation8 + $0xc4] sm:$0xf]
    %v3041 = vld [vmem:[#allocation8 + $0xc8] sm:$0xf]
    %v3042 = vld [vmem:[#allocation8 + $0xcc] sm:$0xf]
    %v3043 = vld [vmem:[#allocation8 + $0xd0] sm:$0xf]
    %v3044 = vld [vmem:[#allocation8 + $0xd4] sm:$0xf]
    %v3045 = vld [vmem:[#allocation8 + $0xd8] sm:$0xf]
    %v3046 = vld [vmem:[#allocation8 + $0xdc] sm:$0xf]
    %v3047 = vld [vmem:[#allocation8 + $0xe0] sm:$0xf]
    %v3048 = vld [vmem:[#allocation8 + $0xe4] sm:$0xf]
    %v3049 = vld [vmem:[#allocation8 + $0xe8] sm:$0xf]
    %v3050 = vld [vmem:[#allocation8 + $0xec] sm:$0xf]
    %v3051 = vld [vmem:[#allocation8 + $0xf0] sm:$0xf]
    %v3052 = vld [vmem:[#allocation8 + $0xf4] sm:$0xf]
    %v3053 = vld [vmem:[#allocation8 + $0xf8] sm:$0xf]
    %v3054 = vld [vmem:[#allocation8 + $0xfc] sm:$0xf]
    %v3055 = vld [vmem:[#allocation8 + $0x100] sm:$0xf]
    %v3056 = vld [vmem:[#allocation8 + $0x104] sm:$0xf]
    %v3057 = vld [vmem:[#allocation8 + $0x108] sm:$0xf]
    %v3058 = vld [vmem:[#allocation8 + $0x10c] sm:$0xf]
    %v3059 = vld [vmem:[#allocation8 + $0x110] sm:$0xf]
    %v3060 = vld [vmem:[#allocation8 + $0x114] sm:$0xf]
    %v3061 = vld [vmem:[#allocation8 + $0x118] sm:$0xf]
    %v3062 = vld [vmem:[#allocation8 + $0x11c] sm:$0xf]
    %v3063 = vld [vmem:[#allocation8 + $0x120] sm:$0xf]
    %v3064 = vld [vmem:[#allocation8 + $0x124] sm:$0xf]
    %v3065 = vld [vmem:[#allocation8 + $0x128] sm:$0xf]
    %v3066 = vld [vmem:[#allocation8 + $0x12c] sm:$0xf]
    %v3067 = vld [vmem:[#allocation8 + $0x130] sm:$0xf]
    %v3068 = vld [vmem:[#allocation8 + $0x134] sm:$0xf]
    %v3069 = vld [vmem:[#allocation8 + $0x138] sm:$0xf]
    %v3070 = vld [vmem:[#allocation8 + $0x13c] sm:$0xf]
    %v3071 = vld [vmem:[#allocation8 + $0x140] sm:$0xf]
    %v3072 = vld [vmem:[#allocation8 + $0x144] sm:$0xf]
    %v3073 = vld [vmem:[#allocation8 + $0x148] sm:$0xf]
    %v3074 = vld [vmem:[#allocation8 + $0x14c] sm:$0xf]
    %v3075 = vld [vmem:[#allocation8 + $0x150] sm:$0xf]
    %v3076 = vld [vmem:[#allocation8 + $0x154] sm:$0xf]
    %v3077 = vld [vmem:[#allocation8 + $0x158] sm:$0xf]
    %v3078 = vld [vmem:[#allocation8 + $0x15c] sm:$0xf]
    %v3079 = vld [vmem:[#allocation8 + $0x160] sm:$0xf]
    %v3080 = vld [vmem:[#allocation8 + $0x164] sm:$0xf]
    %v3081 = vld [vmem:[#allocation8 + $0x168] sm:$0xf]
    %v3082 = vld [vmem:[#allocation8 + $0x16c] sm:$0xf]
    %v3083 = vld [vmem:[#allocation8 + $0x170] sm:$0xf]
    %v3084 = vld [vmem:[#allocation8 + $0x174] sm:$0xf]
    %v3085 = vld [vmem:[#allocation8 + $0x178] sm:$0xf]
    %v3086 = vld [vmem:[#allocation8 + $0x17c] sm:$0xf]
    %v3087 = vld [vmem:[#allocation8 + $0x180] sm:$0xf]
    %v3088 = vld [vmem:[#allocation8 + $0x184] sm:$0xf]
    %v3089 = vld [vmem:[#allocation8 + $0x188] sm:$0xf]
    %v3090 = vld [vmem:[#allocation8 + $0x18c] sm:$0xf]
    %v3091 = vld [vmem:[#allocation8 + $0x190] sm:$0xf]
    %v3092 = vld [vmem:[#allocation8 + $0x194] sm:$0xf]
    %v3093 = vld [vmem:[#allocation8 + $0x198] sm:$0xf]
    %v3094 = vld [vmem:[#allocation8 + $0x19c] sm:$0xf]
    %v3095 = vld [vmem:[#allocation8 + $0x1a0] sm:$0xf]
    %v3096 = vld [vmem:[#allocation8 + $0x1a4] sm:$0xf]
    %v3097 = vld [vmem:[#allocation8 + $0x1a8] sm:$0xf]
    %v3098 = vld [vmem:[#allocation8 + $0x1ac] sm:$0xf]
    %v3099 = vld [vmem:[#allocation8 + $0x1b0] sm:$0xf]
    %v3100 = vld [vmem:[#allocation8 + $0x1b4] sm:$0xf]
    %v3101 = vld [vmem:[#allocation8 + $0x1b8] sm:$0xf]
    %v3102 = vld [vmem:[#allocation8 + $0x1bc] sm:$0xf]
    %v3103 = vld [vmem:[#allocation8 + $0x1c0] sm:$0xf]
    %v3104 = vld [vmem:[#allocation8 + $0x1c4] sm:$0xf]
    %v3105 = vld [vmem:[#allocation8 + $0x1c8] sm:$0xf]
    %v3106 = vld [vmem:[#allocation8 + $0x1cc] sm:$0xf]
    %v3107 = vld [vmem:[#allocation8 + $0x1d0] sm:$0xf]
    %v3108 = vld [vmem:[#allocation8 + $0x1d4] sm:$0xf]
    %v3109 = vld [vmem:[#allocation8 + $0x1d8] sm:$0xf]
    %v3110 = vld [vmem:[#allocation8 + $0x1dc] sm:$0xf]
    %v3111 = vld [vmem:[#allocation8 + $0x1e0] sm:$0xf]
    %v3112 = vld [vmem:[#allocation8 + $0x1e4] sm:$0xf]
    %v3113 = vld [vmem:[#allocation8 + $0x1e8] sm:$0xf]
    %v3114 = vld [vmem:[#allocation8 + $0x1ec] sm:$0xf]
    %v3115 = vld [vmem:[#allocation8 + $0x1f0] sm:$0xf]
    %v3116 = vld [vmem:[#allocation8 + $0x1f4] sm:$0xf]
    %v3117 = vld [vmem:[#allocation8 + $0x1f8] sm:$0xf]
    %v3118 = vld [vmem:[#allocation8 + $0x1fc] sm:$0xf]
    %v3119 = vld [vmem:[#allocation8 + $0x200] sm:$0xf]
    %v3120 = vld [vmem:[#allocation8 + $0x204] sm:$0xf]
    %v3121 = vld [vmem:[#allocation8 + $0x208] sm:$0xf]
    %v3122 = vld [vmem:[#allocation8 + $0x20c] sm:$0xf]
    %v3123 = vld [vmem:[#allocation8 + $0x210] sm:$0xf]
    %v3124 = vld [vmem:[#allocation8 + $0x214] sm:$0xf]
    %v3125 = vld [vmem:[#allocation8 + $0x218] sm:$0xf]
    %v3126 = vld [vmem:[#allocation8 + $0x21c] sm:$0xf]
    %v3127 = vld [vmem:[#allocation8 + $0x220] sm:$0xf]
    %v3128 = vld [vmem:[#allocation8 + $0x224] sm:$0xf]
    %v3129 = vld [vmem:[#allocation8 + $0x228] sm:$0xf]
    %v3130 = vld [vmem:[#allocation8 + $0x22c] sm:$0xf]
    %v3131 = vld [vmem:[#allocation8 + $0x230] sm:$0xf]
    %v3132 = vld [vmem:[#allocation8 + $0x234] sm:$0xf]
    %v3133 = vld [vmem:[#allocation8 + $0x238] sm:$0xf]
    %v3134 = vld [vmem:[#allocation8 + $0x23c] sm:$0xf]
    %v3135 = vld [vmem:[#allocation8 + $0x240] sm:$0xf]
    %v3136 = vld [vmem:[#allocation8 + $0x244] sm:$0xf]
    %v3137 = vld [vmem:[#allocation8 + $0x248] sm:$0xf]
    %v3138 = vld [vmem:[#allocation8 + $0x24c] sm:$0xf]
    %v3139 = vld [vmem:[#allocation8 + $0x250] sm:$0xf]
    %v3140 = vld [vmem:[#allocation8 + $0x254] sm:$0xf]
    %v3141 = vld [vmem:[#allocation8 + $0x258] sm:$0xf]
    %v3142 = vld [vmem:[#allocation8 + $0x25c] sm:$0xf]
    %v3143 = vld [vmem:[#allocation8 + $0x260] sm:$0xf]
    %v3144 = vld [vmem:[#allocation8 + $0x264] sm:$0xf]
    %v3145 = vld [vmem:[#allocation8 + $0x268] sm:$0xf]
    %v3146 = vld [vmem:[#allocation8 + $0x26c] sm:$0xf]
    %v3147 = vld [vmem:[#allocation8 + $0x270] sm:$0xf]
    %v3148 = vld [vmem:[#allocation8 + $0x274] sm:$0xf]
    %v3149 = vld [vmem:[#allocation8 + $0x278] sm:$0xf]
    %v3150 = vld [vmem:[#allocation8 + $0x27c] sm:$0xf]
    %v3151 = vld [vmem:[#allocation8 + $0x280] sm:$0xf]
    %v3152 = vld [vmem:[#allocation8 + $0x284] sm:$0xf]
    %v3153 = vld [vmem:[#allocation8 + $0x288] sm:$0xf]
    %v3154 = vld [vmem:[#allocation8 + $0x28c] sm:$0xf]
    %v3155 = vld [vmem:[#allocation8 + $0x290] sm:$0xf]
    %v3156 = vld [vmem:[#allocation8 + $0x294] sm:$0xf]
    %v3157 = vld [vmem:[#allocation8 + $0x298] sm:$0xf]
    %v3158 = vld [vmem:[#allocation8 + $0x29c] sm:$0xf]
    %v3159 = vld [vmem:[#allocation8 + $0x2a0] sm:$0xf]
    %v3160 = vld [vmem:[#allocation8 + $0x2a4] sm:$0xf]
    %v3161 = vld [vmem:[#allocation8 + $0x2a8] sm:$0xf]
    %v3162 = vld [vmem:[#allocation8 + $0x2ac] sm:$0xf]
    %v3163 = vld [vmem:[#allocation8 + $0x2b0] sm:$0xf]
    %v3164 = vld [vmem:[#allocation8 + $0x2b4] sm:$0xf]
    %v3165 = vld [vmem:[#allocation8 + $0x2b8] sm:$0xf]
    %v3166 = vld [vmem:[#allocation8 + $0x2bc] sm:$0xf]
    %v3167 = vld [vmem:[#allocation8 + $0x2c0] sm:$0xf]
    %v3168 = vld [vmem:[#allocation8 + $0x2c4] sm:$0xf]
    %v3169 = vld [vmem:[#allocation8 + $0x2c8] sm:$0xf]
    %v3170 = vld [vmem:[#allocation8 + $0x2cc] sm:$0xf]
    %v3171 = vld [vmem:[#allocation8 + $0x2d0] sm:$0xf]
    %v3172 = vld [vmem:[#allocation8 + $0x2d4] sm:$0xf]
    %v3173 = vld [vmem:[#allocation8 + $0x2d8] sm:$0xf]
    %v3174 = vld [vmem:[#allocation8 + $0x2dc] sm:$0xf]
    %v3175 = vld [vmem:[#allocation8 + $0x2e0] sm:$0xf]
    %v3176 = vld [vmem:[#allocation8 + $0x2e4] sm:$0xf]
    %v3177 = vld [vmem:[#allocation8 + $0x2e8] sm:$0xf]
    %v3178 = vld [vmem:[#allocation8 + $0x2ec] sm:$0xf]
    %v3179 = vld [vmem:[#allocation8 + $0x2f0] sm:$0xf]
    %v3180 = vld [vmem:[#allocation8 + $0x2f4] sm:$0xf]
    %v3181 = vld [vmem:[#allocation8 + $0x2f8] sm:$0xf]
    %v3182 = vld [vmem:[#allocation8 + $0x2fc] sm:$0xf]
    %v3183 = vld [vmem:[#allocation8 + $0x300] sm:$0xf]
    %v3184 = vld [vmem:[#allocation8 + $0x304] sm:$0xf]
    %v3185 = vld [vmem:[#allocation8 + $0x308] sm:$0xf]
    %v3186 = vld [vmem:[#allocation8 + $0x30c] sm:$0xf]
    %v3187 = vld [vmem:[#allocation8 + $0x310] sm:$0xf]
    %v3188 = vld [vmem:[#allocation8 + $0x314] sm:$0xf]
    %v3189 = vld [vmem:[#allocation8 + $0x318] sm:$0xf]
    %v3190 = vld [vmem:[#allocation8 + $0x31c] sm:$0xf]
    %v3191 = vld [vmem:[#allocation8 + $0x320] sm:$0xf]
    %v3192 = vld [vmem:[#allocation8 + $0x324] sm:$0xf]
    %v3193 = vld [vmem:[#allocation8 + $0x328] sm:$0xf]
    %v3194 = vld [vmem:[#allocation8 + $0x32c] sm:$0xf]
    %v3195 = vld [vmem:[#allocation8 + $0x330] sm:$0xf]
    %v3196 = vld [vmem:[#allocation8 + $0x334] sm:$0xf]
    %v3197 = vld [vmem:[#allocation8 + $0x338] sm:$0xf]
    %v3198 = vld [vmem:[#allocation8 + $0x33c] sm:$0xf]
    %v3199 = vld [vmem:[#allocation8 + $0x340] sm:$0xf]
    %v3200 = vld [vmem:[#allocation8 + $0x344] sm:$0xf]
    %v3201 = vld [vmem:[#allocation8 + $0x348] sm:$0xf]
    %v3202 = vld [vmem:[#allocation8 + $0x34c] sm:$0xf]
    %v3203 = vld [vmem:[#allocation8 + $0x350] sm:$0xf]
    %v3204 = vld [vmem:[#allocation8 + $0x354] sm:$0xf]
    %v3205 = vld [vmem:[#allocation8 + $0x358] sm:$0xf]
    %v3206 = vld [vmem:[#allocation8 + $0x35c] sm:$0xf]
    %v3207 = vld [vmem:[#allocation8 + $0x360] sm:$0xf]
    %v3208 = vld [vmem:[#allocation8 + $0x364] sm:$0xf]
    %v3209 = vld [vmem:[#allocation8 + $0x368] sm:$0xf]
    %v3210 = vld [vmem:[#allocation8 + $0x36c] sm:$0xf]
    %v3211 = vld [vmem:[#allocation8 + $0x370] sm:$0xf]
    %v3212 = vld [vmem:[#allocation8 + $0x374] sm:$0xf]
    %v3213 = vld [vmem:[#allocation8 + $0x378] sm:$0xf]
    %v3214 = vld [vmem:[#allocation8 + $0x37c] sm:$0xf]
    %v3215 = vld [vmem:[#allocation8 + $0x380] sm:$0xf]
    %v3216 = vld [vmem:[#allocation8 + $0x384] sm:$0xf]
    %v3217 = vld [vmem:[#allocation8 + $0x388] sm:$0xf]
    %v3218 = vld [vmem:[#allocation8 + $0x38c] sm:$0xf]
    %v3219 = vld [vmem:[#allocation8 + $0x390] sm:$0xf]
    %v3220 = vld [vmem:[#allocation8 + $0x394] sm:$0xf]
    %v3221 = vld [vmem:[#allocation8 + $0x398] sm:$0xf]
    %v3222 = vld [vmem:[#allocation8 + $0x39c] sm:$0xf]
    %v3223 = vld [vmem:[#allocation8 + $0x3a0] sm:$0xf]
    %v3224 = vld [vmem:[#allocation8 + $0x3a4] sm:$0xf]
    %v3225 = vld [vmem:[#allocation8 + $0x3a8] sm:$0xf]
    %v3226 = vld [vmem:[#allocation8 + $0x3ac] sm:$0xf]
    %v3227 = vld [vmem:[#allocation8 + $0x3b0] sm:$0xf]
    %v3228 = vld [vmem:[#allocation8 + $0x3b4] sm:$0xf]
    %v3229 = vld [vmem:[#allocation8 + $0x3b8] sm:$0xf]
    %v3230 = vld [vmem:[#allocation8 + $0x3bc] sm:$0xf]
    %v3231 = vld [vmem:[#allocation8 + $0x3c0] sm:$0xf]
    %v3232 = vld [vmem:[#allocation8 + $0x3c4] sm:$0xf]
    %v3233 = vld [vmem:[#allocation8 + $0x3c8] sm:$0xf]
    %v3234 = vld [vmem:[#allocation8 + $0x3cc] sm:$0xf]
    %v3235 = vld [vmem:[#allocation8 + $0x3d0] sm:$0xf]
    %v3236 = vld [vmem:[#allocation8 + $0x3d4] sm:$0xf]
    %v3237 = vld [vmem:[#allocation8 + $0x3d8] sm:$0xf]
    %v3238 = vld [vmem:[#allocation8 + $0x3dc] sm:$0xf]
    %v3239 = vld [vmem:[#allocation8 + $0x3e0] sm:$0xf]
    %v3240 = vld [vmem:[#allocation8 + $0x3e4] sm:$0xf]
    %v3241 = vld [vmem:[#allocation8 + $0x3e8] sm:$0xf]
    %v3242 = vld [vmem:[#allocation8 + $0x3ec] sm:$0xf]
    %v3243 = vld [vmem:[#allocation8 + $0x3f0] sm:$0xf]
    %v3244 = vld [vmem:[#allocation8 + $0x3f4] sm:$0xf]
    %v3245 = vld [vmem:[#allocation8 + $0x3f8] sm:$0xf]
    %v3246 = vld [vmem:[#allocation8 + $0x3fc] sm:$0xf]
    %v3247 = vld [vmem:[#allocation8 + $0x400] sm:$0xf]
    %v3248 = vld [vmem:[#allocation8 + $0x404] sm:$0xf]
    %v3249 = vld [vmem:[#allocation8 + $0x408] sm:$0xf]
    %v3250 = vld [vmem:[#allocation8 + $0x40c] sm:$0xf]
    %v3251 = vld [vmem:[#allocation8 + $0x410] sm:$0xf]
    %v3252 = vld [vmem:[#allocation8 + $0x414] sm:$0xf]
    %v3253 = vld [vmem:[#allocation8 + $0x418] sm:$0xf]
    %v3254 = vld [vmem:[#allocation8 + $0x41c] sm:$0xf]
    %v3255 = vld [vmem:[#allocation8 + $0x420] sm:$0xf]
    %v3256 = vld [vmem:[#allocation8 + $0x424] sm:$0xf]
    %v3257 = vld [vmem:[#allocation8 + $0x428] sm:$0xf]
    %v3258 = vld [vmem:[#allocation8 + $0x42c] sm:$0xf]
    %v3259 = vld [vmem:[#allocation8 + $0x430] sm:$0xf]
    %v3260 = vld [vmem:[#allocation8 + $0x434] sm:$0xf]
    %v3261 = vld [vmem:[#allocation8 + $0x438] sm:$0xf]
    %v3262 = vld [vmem:[#allocation8 + $0x43c] sm:$0xf]
    %v3263 = vld [vmem:[#allocation8 + $0x440] sm:$0xf]
    %v3264 = vld [vmem:[#allocation8 + $0x444] sm:$0xf]
    %v3265 = vld [vmem:[#allocation8 + $0x448] sm:$0xf]
    %v3266 = vld [vmem:[#allocation8 + $0x44c] sm:$0xf]
    %v3267 = vld [vmem:[#allocation8 + $0x450] sm:$0xf]
    %v3268 = vld [vmem:[#allocation8 + $0x454] sm:$0xf]
    %v3269 = vld [vmem:[#allocation8 + $0x458] sm:$0xf]
    %v3270 = vld [vmem:[#allocation8 + $0x45c] sm:$0xf]
    %v3271 = vld [vmem:[#allocation8 + $0x460] sm:$0xf]
    %v3272 = vld [vmem:[#allocation8 + $0x464] sm:$0xf]
    %v3273 = vld [vmem:[#allocation8 + $0x468] sm:$0xf]
    %v3274 = vld [vmem:[#allocation8 + $0x46c] sm:$0xf]
    %v3275 = vld [vmem:[#allocation8 + $0x470] sm:$0xf]
    %v3276 = vld [vmem:[#allocation8 + $0x474] sm:$0xf]
    %v3277 = vld [vmem:[#allocation8 + $0x478] sm:$0xf]
    %v3278 = vld [vmem:[#allocation8 + $0x47c] sm:$0xf]
    %v3279 = vld [vmem:[#allocation8 + $0x480] sm:$0xf]
    %v3280 = vld [vmem:[#allocation8 + $0x484] sm:$0xf]
    %v3281 = vld [vmem:[#allocation8 + $0x488] sm:$0xf]
    %v3282 = vld [vmem:[#allocation8 + $0x48c] sm:$0xf]
    %v3283 = vld [vmem:[#allocation8 + $0x490] sm:$0xf]
    %v3284 = vld [vmem:[#allocation8 + $0x494] sm:$0xf]
    %v3285 = vld [vmem:[#allocation8 + $0x498] sm:$0xf]
    %v3286 = vld [vmem:[#allocation8 + $0x49c] sm:$0xf]
    %v3287 = vld [vmem:[#allocation8 + $0x4a0] sm:$0xf]
    %v3288 = vld [vmem:[#allocation8 + $0x4a4] sm:$0xf]
    %v3289 = vld [vmem:[#allocation8 + $0x4a8] sm:$0xf]
    %v3290 = vld [vmem:[#allocation8 + $0x4ac] sm:$0xf]
    %v3291 = vld [vmem:[#allocation8 + $0x4b0] sm:$0xf]
    %v3292 = vld [vmem:[#allocation8 + $0x4b4] sm:$0xf]
    %v3293 = vld [vmem:[#allocation8 + $0x4b8] sm:$0xf]
    %v3294 = vld [vmem:[#allocation8 + $0x4bc] sm:$0xf]
    %v3295 = vld [vmem:[#allocation8 + $0x4c0] sm:$0xf]
    %v3296 = vld [vmem:[#allocation8 + $0x4c4] sm:$0xf]
    %v3297 = vld [vmem:[#allocation8 + $0x4c8] sm:$0xf]
    %v3298 = vld [vmem:[#allocation8 + $0x4cc] sm:$0xf]
    %v3299 = vld [vmem:[#allocation8 + $0x4d0] sm:$0xf]
    %v3300 = vld [vmem:[#allocation8 + $0x4d4] sm:$0xf]
    %v3301 = vld [vmem:[#allocation8 + $0x4d8] sm:$0xf]
    %v3302 = vld [vmem:[#allocation8 + $0x4dc] sm:$0xf]
    %v3303 = vld [vmem:[#allocation8 + $0x4e0] sm:$0xf]
    %v3304 = vld [vmem:[#allocation8 + $0x4e4] sm:$0xf]
    %v3305 = vld [vmem:[#allocation8 + $0x4e8] sm:$0xf]
    %v3306 = vld [vmem:[#allocation8 + $0x4ec] sm:$0xf]
    %v3307 = vld [vmem:[#allocation8 + $0x4f0] sm:$0xf]
    %v3308 = vld [vmem:[#allocation8 + $0x4f4] sm:$0xf]
    %v3309 = vld [vmem:[#allocation8 + $0x4f8] sm:$0xf]
    %v3310 = vld [vmem:[#allocation8 + $0x4fc] sm:$0xf]
    %v3311 = vld [vmem:[#allocation8 + $0x500] sm:$0xf]
    %v3312 = vld [vmem:[#allocation8 + $0x504] sm:$0xf]
    %v3313 = vld [vmem:[#allocation8 + $0x508] sm:$0xf]
    %v3314 = vld [vmem:[#allocation8 + $0x50c] sm:$0xf]
    %v3315 = vld [vmem:[#allocation8 + $0x510] sm:$0xf]
    %v3316 = vld [vmem:[#allocation8 + $0x514] sm:$0xf]
    %v3317 = vld [vmem:[#allocation8 + $0x518] sm:$0xf]
    %v3318 = vld [vmem:[#allocation8 + $0x51c] sm:$0xf]
    %v3319 = vld [vmem:[#allocation8 + $0x520] sm:$0xf]
    %v3320 = vld [vmem:[#allocation8 + $0x524] sm:$0xf]
    %v3321 = vld [vmem:[#allocation8 + $0x528] sm:$0xf]
    %v3322 = vld [vmem:[#allocation8 + $0x52c] sm:$0xf]
    %v3323 = vld [vmem:[#allocation8 + $0x530] sm:$0xf]
    %v3324 = vld [vmem:[#allocation8 + $0x534] sm:$0xf]
    %v3325 = vld [vmem:[#allocation8 + $0x538] sm:$0xf]
    %v3326 = vld [vmem:[#allocation8 + $0x53c] sm:$0xf]
    %v3327 = vld [vmem:[#allocation8 + $0x540] sm:$0xf]
    %v3328 = vld [vmem:[#allocation8 + $0x544] sm:$0xf]
    %v3329 = vld [vmem:[#allocation8 + $0x548] sm:$0xf]
    %v3330 = vld [vmem:[#allocation8 + $0x54c] sm:$0xf]
    %v3331 = vld [vmem:[#allocation8 + $0x550] sm:$0xf]
    %v3332 = vld [vmem:[#allocation8 + $0x554] sm:$0xf]
    %v3333 = vld [vmem:[#allocation8 + $0x558] sm:$0xf]
    %v3334 = vld [vmem:[#allocation8 + $0x55c] sm:$0xf]
    %v3335 = vld [vmem:[#allocation8 + $0x560] sm:$0xf]
    %v3336 = vld [vmem:[#allocation8 + $0x564] sm:$0xf]
    %v3337 = vld [vmem:[#allocation8 + $0x568] sm:$0xf]
    %v3338 = vld [vmem:[#allocation8 + $0x56c] sm:$0xf]
    %v3339 = vld [vmem:[#allocation8 + $0x570] sm:$0xf]
    %v3340 = vld [vmem:[#allocation8 + $0x574] sm:$0xf]
    %v3341 = vld [vmem:[#allocation8 + $0x578] sm:$0xf]
    %v3342 = vld [vmem:[#allocation8 + $0x57c] sm:$0xf]
    %v3343 = vld [vmem:[#allocation8 + $0x580] sm:$0xf]
    %v3344 = vld [vmem:[#allocation8 + $0x584] sm:$0xf]
    %v3345 = vld [vmem:[#allocation8 + $0x588] sm:$0xf]
    %v3346 = vld [vmem:[#allocation8 + $0x58c] sm:$0xf]
    %v3347 = vld [vmem:[#allocation8 + $0x590] sm:$0xf]
    %v3348 = vld [vmem:[#allocation8 + $0x594] sm:$0xf]
    %v3349 = vld [vmem:[#allocation8 + $0x598] sm:$0xf]
    %v3350 = vld [vmem:[#allocation8 + $0x59c] sm:$0xf]
    %v3351 = vld [vmem:[#allocation8 + $0x5a0] sm:$0xf]
    %v3352 = vld [vmem:[#allocation8 + $0x5a4] sm:$0xf]
    %v3353 = vld [vmem:[#allocation8 + $0x5a8] sm:$0xf]
    %v3354 = vld [vmem:[#allocation8 + $0x5ac] sm:$0xf]
    %v3355 = vld [vmem:[#allocation8 + $0x5b0] sm:$0xf]
    %v3356 = vld [vmem:[#allocation8 + $0x5b4] sm:$0xf]
    %v3357 = vld [vmem:[#allocation8 + $0x5b8] sm:$0xf]
    %v3358 = vld [vmem:[#allocation8 + $0x5bc] sm:$0xf]
    %v3359 = vld [vmem:[#allocation8 + $0x5c0] sm:$0xf]
    %v3360 = vld [vmem:[#allocation8 + $0x5c4] sm:$0xf]
    %v3361 = vld [vmem:[#allocation8 + $0x5c8] sm:$0xf]
    %v3362 = vld [vmem:[#allocation8 + $0x5cc] sm:$0xf]
    %v3363 = vld [vmem:[#allocation8 + $0x5d0] sm:$0xf]
    %v3364 = vld [vmem:[#allocation8 + $0x5d4] sm:$0xf]
    %v3365 = vld [vmem:[#allocation8 + $0x5d8] sm:$0xf]
    %v3366 = vld [vmem:[#allocation8 + $0x5dc] sm:$0xf]
    %v3367 = vld [vmem:[#allocation8 + $0x5e0] sm:$0xf]
    %v3368 = vld [vmem:[#allocation8 + $0x5e4] sm:$0xf]
    %v3369 = vld [vmem:[#allocation8 + $0x5e8] sm:$0xf]
    %v3370 = vld [vmem:[#allocation8 + $0x5ec] sm:$0xf]
    %v3371 = vld [vmem:[#allocation8 + $0x5f0] sm:$0xf]
    %v3372 = vld [vmem:[#allocation8 + $0x5f4] sm:$0xf]
    %v3373 = vld [vmem:[#allocation8 + $0x5f8] sm:$0xf]
    %v3374 = vld [vmem:[#allocation8 + $0x5fc] sm:$0xf]
    %v3375 = vld [vmem:[%s6] sm:$0x1]
    %v3377 = vlaneseq
    %v3378 = vshrl.u32 %v3377, 7
    %v3379 = vsub.s32 0, %v3378
    %v3380 = vrot.slane %v3375, %v3379
    %v3766 = vunpack.c.l.b16 %v2991
    %v3767 = vunpack.c.l.b16 %v2992
    %v3768 = vunpack.c.l.b16 %v2993
    %v3769 = vunpack.c.l.b16 %v2994
    %v3770 = vunpack.c.l.b16 %v2995
    %v3771 = vunpack.c.l.b16 %v2996
    %v3772 = vunpack.c.l.b16 %v2997
    %v3773 = vunpack.c.l.b16 %v2998
    %v3774 = vunpack.c.l.b16 %v2999
    %v3775 = vunpack.c.l.b16 %v3000
    %v3776 = vunpack.c.l.b16 %v3001
    %v3777 = vunpack.c.l.b16 %v3002
    %v3778 = vunpack.c.l.b16 %v3003
    %v3779 = vunpack.c.l.b16 %v3004
    %v3780 = vunpack.c.l.b16 %v3005
    %v3781 = vunpack.c.l.b16 %v3006
    %v3782 = vunpack.c.l.b16 %v3007
    %v3783 = vunpack.c.l.b16 %v3008
    %v3784 = vunpack.c.l.b16 %v3009
    %v3785 = vunpack.c.l.b16 %v3010
    %v3786 = vunpack.c.l.b16 %v3011
    %v3787 = vunpack.c.l.b16 %v3012
    %v3788 = vunpack.c.l.b16 %v3013
    %v3789 = vunpack.c.l.b16 %v3014
    %v3790 = vunpack.c.l.b16 %v3015
    %v3791 = vunpack.c.l.b16 %v3016
    %v3792 = vunpack.c.l.b16 %v3017
    %v3793 = vunpack.c.l.b16 %v3018
    %v3794 = vunpack.c.l.b16 %v3019
    %v3795 = vunpack.c.l.b16 %v3020
    %v3796 = vunpack.c.l.b16 %v3021
    %v3797 = vunpack.c.l.b16 %v3022
    %v3798 = vunpack.c.l.b16 %v3023
    %v3799 = vunpack.c.l.b16 %v3024
    %v3800 = vunpack.c.l.b16 %v3025
    %v3801 = vunpack.c.l.b16 %v3026
    %v3802 = vunpack.c.l.b16 %v3027
    %v3803 = vunpack.c.l.b16 %v3028
    %v3804 = vunpack.c.l.b16 %v3029
    %v3805 = vunpack.c.l.b16 %v3030
    %v3806 = vunpack.c.l.b16 %v3031
    %v3807 = vunpack.c.l.b16 %v3032
    %v3808 = vunpack.c.l.b16 %v3033
    %v3809 = vunpack.c.l.b16 %v3034
    %v3810 = vunpack.c.l.b16 %v3035
    %v3811 = vunpack.c.l.b16 %v3036
    %v3812 = vunpack.c.l.b16 %v3037
    %v3813 = vunpack.c.l.b16 %v3038
    %v3814 = vunpack.c.l.b16 %v3039
    %v3815 = vunpack.c.l.b16 %v3040
    %v3816 = vunpack.c.l.b16 %v3041
    %v3817 = vunpack.c.l.b16 %v3042
    %v3818 = vunpack.c.l.b16 %v3043
    %v3819 = vunpack.c.l.b16 %v3044
    %v3820 = vunpack.c.l.b16 %v3045
    %v3821 = vunpack.c.l.b16 %v3046
    %v3822 = vunpack.c.l.b16 %v3047
    %v3823 = vunpack.c.l.b16 %v3048
    %v3824 = vunpack.c.l.b16 %v3049
    %v3825 = vunpack.c.l.b16 %v3050
    %v3826 = vunpack.c.l.b16 %v3051
    %v3827 = vunpack.c.l.b16 %v3052
    %v3828 = vunpack.c.l.b16 %v3053
    %v3829 = vunpack.c.l.b16 %v3054
    %v3830 = vunpack.c.l.b16 %v3055
    %v3831 = vunpack.c.l.b16 %v3056
    %v3832 = vunpack.c.l.b16 %v3057
    %v3833 = vunpack.c.l.b16 %v3058
    %v3834 = vunpack.c.l.b16 %v3059
    %v3835 = vunpack.c.l.b16 %v3060
    %v3836 = vunpack.c.l.b16 %v3061
    %v3837 = vunpack.c.l.b16 %v3062
    %v3838 = vunpack.c.l.b16 %v3063
    %v3839 = vunpack.c.l.b16 %v3064
    %v3840 = vunpack.c.l.b16 %v3065
    %v3841 = vunpack.c.l.b16 %v3066
    %v3842 = vunpack.c.l.b16 %v3067
    %v3843 = vunpack.c.l.b16 %v3068
    %v3844 = vunpack.c.l.b16 %v3069
    %v3845 = vunpack.c.l.b16 %v3070
    %v3846 = vunpack.c.l.b16 %v3071
    %v3847 = vunpack.c.l.b16 %v3072
    %v3848 = vunpack.c.l.b16 %v3073
    %v3849 = vunpack.c.l.b16 %v3074
    %v3850 = vunpack.c.l.b16 %v3075
    %v3851 = vunpack.c.l.b16 %v3076
    %v3852 = vunpack.c.l.b16 %v3077
    %v3853 = vunpack.c.l.b16 %v3078
    %v3854 = vunpack.c.l.b16 %v3079
    %v3855 = vunpack.c.l.b16 %v3080
    %v3856 = vunpack.c.l.b16 %v3081
    %v3857 = vunpack.c.l.b16 %v3082
    %v3858 = vunpack.c.l.b16 %v3083
    %v3859 = vunpack.c.l.b16 %v3084
    %v3860 = vunpack.c.l.b16 %v3085
    %v3861 = vunpack.c.l.b16 %v3086
    %v3862 = vunpack.c.l.b16 %v3087
    %v3863 = vunpack.c.l.b16 %v3088
    %v3864 = vunpack.c.l.b16 %v3089
    %v3865 = vunpack.c.l.b16 %v3090
    %v3866 = vunpack.c.l.b16 %v3091
    %v3867 = vunpack.c.l.b16 %v3092
    %v3868 = vunpack.c.l.b16 %v3093
    %v3869 = vunpack.c.l.b16 %v3094
    %v3870 = vunpack.c.l.b16 %v3095
    %v3871 = vunpack.c.l.b16 %v3096
    %v3872 = vunpack.c.l.b16 %v3097
    %v3873 = vunpack.c.l.b16 %v3098
    %v3874 = vunpack.c.l.b16 %v3099
    %v3875 = vunpack.c.l.b16 %v3100
    %v3876 = vunpack.c.l.b16 %v3101
    %v3877 = vunpack.c.l.b16 %v3102
    %v3878 = vunpack.c.l.b16 %v3103
    %v3879 = vunpack.c.l.b16 %v3104
    %v3880 = vunpack.c.l.b16 %v3105
    %v3881 = vunpack.c.l.b16 %v3106
    %v3882 = vunpack.c.l.b16 %v3107
    %v3883 = vunpack.c.l.b16 %v3108
    %v3884 = vunpack.c.l.b16 %v3109
    %v3885 = vunpack.c.l.b16 %v3110
    %v3886 = vunpack.c.l.b16 %v3111
    %v3887 = vunpack.c.l.b16 %v3112
    %v3888 = vunpack.c.l.b16 %v3113
    %v3889 = vunpack.c.l.b16 %v3114
    %v3890 = vunpack.c.l.b16 %v3115
    %v3891 = vunpack.c.l.b16 %v3116
    %v3892 = vunpack.c.l.b16 %v3117
    %v3893 = vunpack.c.l.b16 %v3118
    %v3894 = vunpack.c.l.b16 %v3119
    %v3895 = vunpack.c.l.b16 %v3120
    %v3896 = vunpack.c.l.b16 %v3121
    %v3897 = vunpack.c.l.b16 %v3122
    %v3898 = vunpack.c.l.b16 %v3123
    %v3899 = vunpack.c.l.b16 %v3124
    %v3900 = vunpack.c.l.b16 %v3125
    %v3901 = vunpack.c.l.b16 %v3126
    %v3902 = vunpack.c.l.b16 %v3127
    %v3903 = vunpack.c.l.b16 %v3128
    %v3904 = vunpack.c.l.b16 %v3129
    %v3905 = vunpack.c.l.b16 %v3130
    %v3906 = vunpack.c.l.b16 %v3131
    %v3907 = vunpack.c.l.b16 %v3132
    %v3908 = vunpack.c.l.b16 %v3133
    %v3909 = vunpack.c.l.b16 %v3134
    %v3910 = vunpack.c.l.b16 %v3135
    %v3911 = vunpack.c.l.b16 %v3136
    %v3912 = vunpack.c.l.b16 %v3137
    %v3913 = vunpack.c.l.b16 %v3138
    %v3914 = vunpack.c.l.b16 %v3139
    %v3915 = vunpack.c.l.b16 %v3140
    %v3916 = vunpack.c.l.b16 %v3141
    %v3917 = vunpack.c.l.b16 %v3142
    %v3918 = vunpack.c.l.b16 %v3143
    %v3919 = vunpack.c.l.b16 %v3144
    %v3920 = vunpack.c.l.b16 %v3145
    %v3921 = vunpack.c.l.b16 %v3146
    %v3922 = vunpack.c.l.b16 %v3147
    %v3923 = vunpack.c.l.b16 %v3148
    %v3924 = vunpack.c.l.b16 %v3149
    %v3925 = vunpack.c.l.b16 %v3150
    %v3926 = vunpack.c.l.b16 %v3151
    %v3927 = vunpack.c.l.b16 %v3152
    %v3928 = vunpack.c.l.b16 %v3153
    %v3929 = vunpack.c.l.b16 %v3154
    %v3930 = vunpack.c.l.b16 %v3155
    %v3931 = vunpack.c.l.b16 %v3156
    %v3932 = vunpack.c.l.b16 %v3157
    %v3933 = vunpack.c.l.b16 %v3158
    %v3934 = vunpack.c.l.b16 %v3159
    %v3935 = vunpack.c.l.b16 %v3160
    %v3936 = vunpack.c.l.b16 %v3161
    %v3937 = vunpack.c.l.b16 %v3162
    %v3938 = vunpack.c.l.b16 %v3163
    %v3939 = vunpack.c.l.b16 %v3164
    %v3940 = vunpack.c.l.b16 %v3165
    %v3941 = vunpack.c.l.b16 %v3166
    %v3942 = vunpack.c.l.b16 %v3167
    %v3943 = vunpack.c.l.b16 %v3168
    %v3944 = vunpack.c.l.b16 %v3169
    %v3945 = vunpack.c.l.b16 %v3170
    %v3946 = vunpack.c.l.b16 %v3171
    %v3947 = vunpack.c.l.b16 %v3172
    %v3948 = vunpack.c.l.b16 %v3173
    %v3949 = vunpack.c.l.b16 %v3174
    %v3950 = vunpack.c.l.b16 %v3175
    %v3951 = vunpack.c.l.b16 %v3176
    %v3952 = vunpack.c.l.b16 %v3177
    %v3953 = vunpack.c.l.b16 %v3178
    %v3954 = vunpack.c.l.b16 %v3179
    %v3955 = vunpack.c.l.b16 %v3180
    %v3956 = vunpack.c.l.b16 %v3181
    %v3957 = vunpack.c.l.b16 %v3182
    %v3958 = vunpack.c.l.b16 %v3183
    %v3959 = vunpack.c.l.b16 %v3184
    %v3960 = vunpack.c.l.b16 %v3185
    %v3961 = vunpack.c.l.b16 %v3186
    %v3962 = vunpack.c.l.b16 %v3187
    %v3963 = vunpack.c.l.b16 %v3188
    %v3964 = vunpack.c.l.b16 %v3189
    %v3965 = vunpack.c.l.b16 %v3190
    %v3966 = vunpack.c.l.b16 %v3191
    %v3967 = vunpack.c.l.b16 %v3192
    %v3968 = vunpack.c.l.b16 %v3193
    %v3969 = vunpack.c.l.b16 %v3194
    %v3970 = vunpack.c.l.b16 %v3195
    %v3971 = vunpack.c.l.b16 %v3196
    %v3972 = vunpack.c.l.b16 %v3197
    %v3973 = vunpack.c.l.b16 %v3198
    %v3974 = vunpack.c.l.b16 %v3199
    %v3975 = vunpack.c.l.b16 %v3200
    %v3976 = vunpack.c.l.b16 %v3201
    %v3977 = vunpack.c.l.b16 %v3202
    %v3978 = vunpack.c.l.b16 %v3203
    %v3979 = vunpack.c.l.b16 %v3204
    %v3980 = vunpack.c.l.b16 %v3205
    %v3981 = vunpack.c.l.b16 %v3206
    %v3982 = vunpack.c.l.b16 %v3207
    %v3983 = vunpack.c.l.b16 %v3208
    %v3984 = vunpack.c.l.b16 %v3209
    %v3985 = vunpack.c.l.b16 %v3210
    %v3986 = vunpack.c.l.b16 %v3211
    %v3987 = vunpack.c.l.b16 %v3212
    %v3988 = vunpack.c.l.b16 %v3213
    %v3989 = vunpack.c.l.b16 %v3214
    %v3990 = vunpack.c.l.b16 %v3215
    %v3991 = vunpack.c.l.b16 %v3216
    %v3992 = vunpack.c.l.b16 %v3217
    %v3993 = vunpack.c.l.b16 %v3218
    %v3994 = vunpack.c.l.b16 %v3219
    %v3995 = vunpack.c.l.b16 %v3220
    %v3996 = vunpack.c.l.b16 %v3221
    %v3997 = vunpack.c.l.b16 %v3222
    %v3998 = vunpack.c.l.b16 %v3223
    %v3999 = vunpack.c.l.b16 %v3224
    %v4000 = vunpack.c.l.b16 %v3225
    %v4001 = vunpack.c.l.b16 %v3226
    %v4002 = vunpack.c.l.b16 %v3227
    %v4003 = vunpack.c.l.b16 %v3228
    %v4004 = vunpack.c.l.b16 %v3229
    %v4005 = vunpack.c.l.b16 %v3230
    %v4006 = vunpack.c.l.b16 %v3231
    %v4007 = vunpack.c.l.b16 %v3232
    %v4008 = vunpack.c.l.b16 %v3233
    %v4009 = vunpack.c.l.b16 %v3234
    %v4010 = vunpack.c.l.b16 %v3235
    %v4011 = vunpack.c.l.b16 %v3236
    %v4012 = vunpack.c.l.b16 %v3237
    %v4013 = vunpack.c.l.b16 %v3238
    %v4014 = vunpack.c.l.b16 %v3239
    %v4015 = vunpack.c.l.b16 %v3240
    %v4016 = vunpack.c.l.b16 %v3241
    %v4017 = vunpack.c.l.b16 %v3242
    %v4018 = vunpack.c.l.b16 %v3243
    %v4019 = vunpack.c.l.b16 %v3244
    %v4020 = vunpack.c.l.b16 %v3245
    %v4021 = vunpack.c.l.b16 %v3246
    %v4022 = vunpack.c.l.b16 %v3247
    %v4023 = vunpack.c.l.b16 %v3248
    %v4024 = vunpack.c.l.b16 %v3249
    %v4025 = vunpack.c.l.b16 %v3250
    %v4026 = vunpack.c.l.b16 %v3251
    %v4027 = vunpack.c.l.b16 %v3252
    %v4028 = vunpack.c.l.b16 %v3253
    %v4029 = vunpack.c.l.b16 %v3254
    %v4030 = vunpack.c.l.b16 %v3255
    %v4031 = vunpack.c.l.b16 %v3256
    %v4032 = vunpack.c.l.b16 %v3257
    %v4033 = vunpack.c.l.b16 %v3258
    %v4034 = vunpack.c.l.b16 %v3259
    %v4035 = vunpack.c.l.b16 %v3260
    %v4036 = vunpack.c.l.b16 %v3261
    %v4037 = vunpack.c.l.b16 %v3262
    %v4038 = vunpack.c.l.b16 %v3263
    %v4039 = vunpack.c.l.b16 %v3264
    %v4040 = vunpack.c.l.b16 %v3265
    %v4041 = vunpack.c.l.b16 %v3266
    %v4042 = vunpack.c.l.b16 %v3267
    %v4043 = vunpack.c.l.b16 %v3268
    %v4044 = vunpack.c.l.b16 %v3269
    %v4045 = vunpack.c.l.b16 %v3270
    %v4046 = vunpack.c.l.b16 %v3271
    %v4047 = vunpack.c.l.b16 %v3272
    %v4048 = vunpack.c.l.b16 %v3273
    %v4049 = vunpack.c.l.b16 %v3274
    %v4050 = vunpack.c.l.b16 %v3275
    %v4051 = vunpack.c.l.b16 %v3276
    %v4052 = vunpack.c.l.b16 %v3277
    %v4053 = vunpack.c.l.b16 %v3278
    %v4054 = vunpack.c.l.b16 %v3279
    %v4055 = vunpack.c.l.b16 %v3280
    %v4056 = vunpack.c.l.b16 %v3281
    %v4057 = vunpack.c.l.b16 %v3282
    %v4058 = vunpack.c.l.b16 %v3283
    %v4059 = vunpack.c.l.b16 %v3284
    %v4060 = vunpack.c.l.b16 %v3285
    %v4061 = vunpack.c.l.b16 %v3286
    %v4062 = vunpack.c.l.b16 %v3287
    %v4063 = vunpack.c.l.b16 %v3288
    %v4064 = vunpack.c.l.b16 %v3289
    %v4065 = vunpack.c.l.b16 %v3290
    %v4066 = vunpack.c.l.b16 %v3291
    %v4067 = vunpack.c.l.b16 %v3292
    %v4068 = vunpack.c.l.b16 %v3293
    %v4069 = vunpack.c.l.b16 %v3294
    %v4070 = vunpack.c.l.b16 %v3295
    %v4071 = vunpack.c.l.b16 %v3296
    %v4072 = vunpack.c.l.b16 %v3297
    %v4073 = vunpack.c.l.b16 %v3298
    %v4074 = vunpack.c.l.b16 %v3299
    %v4075 = vunpack.c.l.b16 %v3300
    %v4076 = vunpack.c.l.b16 %v3301
    %v4077 = vunpack.c.l.b16 %v3302
    %v4078 = vunpack.c.l.b16 %v3303
    %v4079 = vunpack.c.l.b16 %v3304
    %v4080 = vunpack.c.l.b16 %v3305
    %v4081 = vunpack.c.l.b16 %v3306
    %v4082 = vunpack.c.l.b16 %v3307
    %v4083 = vunpack.c.l.b16 %v3308
    %v4084 = vunpack.c.l.b16 %v3309
    %v4085 = vunpack.c.l.b16 %v3310
    %v4086 = vunpack.c.l.b16 %v3311
    %v4087 = vunpack.c.l.b16 %v3312
    %v4088 = vunpack.c.l.b16 %v3313
    %v4089 = vunpack.c.l.b16 %v3314
    %v4090 = vunpack.c.l.b16 %v3315
    %v4091 = vunpack.c.l.b16 %v3316
    %v4092 = vunpack.c.l.b16 %v3317
    %v4093 = vunpack.c.l.b16 %v3318
    %v4094 = vunpack.c.l.b16 %v3319
    %v4095 = vunpack.c.l.b16 %v3320
    %v4096 = vunpack.c.l.b16 %v3321
    %v4097 = vunpack.c.l.b16 %v3322
    %v4098 = vunpack.c.l.b16 %v3323
    %v4099 = vunpack.c.l.b16 %v3324
    %v4100 = vunpack.c.l.b16 %v3325
    %v4101 = vunpack.c.l.b16 %v3326
    %v4102 = vunpack.c.l.b16 %v3327
    %v4103 = vunpack.c.l.b16 %v3328
    %v4104 = vunpack.c.l.b16 %v3329
    %v4105 = vunpack.c.l.b16 %v3330
    %v4106 = vunpack.c.l.b16 %v3331
    %v4107 = vunpack.c.l.b16 %v3332
    %v4108 = vunpack.c.l.b16 %v3333
    %v4109 = vunpack.c.l.b16 %v3334
    %v4110 = vunpack.c.l.b16 %v3335
    %v4111 = vunpack.c.l.b16 %v3336
    %v4112 = vunpack.c.l.b16 %v3337
    %v4113 = vunpack.c.l.b16 %v3338
    %v4114 = vunpack.c.l.b16 %v3339
    %v4115 = vunpack.c.l.b16 %v3340
    %v4116 = vunpack.c.l.b16 %v3341
    %v4117 = vunpack.c.l.b16 %v3342
    %v4118 = vunpack.c.l.b16 %v3343
    %v4119 = vunpack.c.l.b16 %v3344
    %v4120 = vunpack.c.l.b16 %v3345
    %v4121 = vunpack.c.l.b16 %v3346
    %v4122 = vunpack.c.l.b16 %v3347
    %v4123 = vunpack.c.l.b16 %v3348
    %v4124 = vunpack.c.l.b16 %v3349
    %v4125 = vunpack.c.l.b16 %v3350
    %v4126 = vunpack.c.l.b16 %v3351
    %v4127 = vunpack.c.l.b16 %v3352
    %v4128 = vunpack.c.l.b16 %v3353
    %v4129 = vunpack.c.l.b16 %v3354
    %v4130 = vunpack.c.l.b16 %v3355
    %v4131 = vunpack.c.l.b16 %v3356
    %v4132 = vunpack.c.l.b16 %v3357
    %v4133 = vunpack.c.l.b16 %v3358
    %v4134 = vunpack.c.l.b16 %v3359
    %v4135 = vunpack.c.l.b16 %v3360
    %v4136 = vunpack.c.l.b16 %v3361
    %v4137 = vunpack.c.l.b16 %v3362
    %v4138 = vunpack.c.l.b16 %v3363
    %v4139 = vunpack.c.l.b16 %v3364
    %v4140 = vunpack.c.l.b16 %v3365
    %v4141 = vunpack.c.l.b16 %v3366
    %v4142 = vunpack.c.l.b16 %v3367
    %v4143 = vunpack.c.l.b16 %v3368
    %v4144 = vunpack.c.l.b16 %v3369
    %v4145 = vunpack.c.l.b16 %v3370
    %v4146 = vunpack.c.l.b16 %v3371
    %v4147 = vunpack.c.l.b16 %v3372
    %v4148 = vunpack.c.l.b16 %v3373
    %v4149 = vunpack.c.l.b16 %v3374
    %v4150 = vpack.c.b16 %v3767, %v3766
    %v4151 = vpack.c.b16 %v3769, %v3768
    %v4152 = vpack.c.b16 %v3771, %v3770
    %v4153 = vpack.c.b16 %v3773, %v3772
    %v4154 = vpack.c.b16 %v3775, %v3774
    %v4155 = vpack.c.b16 %v3777, %v3776
    %v4156 = vpack.c.b16 %v3779, %v3778
    %v4157 = vpack.c.b16 %v3781, %v3780
    %v4158 = vpack.c.b16 %v3783, %v3782
    %v4159 = vpack.c.b16 %v3785, %v3784
    %v4160 = vpack.c.b16 %v3787, %v3786
    %v4161 = vpack.c.b16 %v3789, %v3788
    %v4162 = vpack.c.b16 %v3791, %v3790
    %v4163 = vpack.c.b16 %v3793, %v3792
    %v4164 = vpack.c.b16 %v3795, %v3794
    %v4165 = vpack.c.b16 %v3797, %v3796
    %v4166 = vpack.c.b16 %v3799, %v3798
    %v4167 = vpack.c.b16 %v3801, %v3800
    %v4168 = vpack.c.b16 %v3803, %v3802
    %v4169 = vpack.c.b16 %v3805, %v3804
    %v4170 = vpack.c.b16 %v3807, %v3806
    %v4171 = vpack.c.b16 %v3809, %v3808
    %v4172 = vpack.c.b16 %v3811, %v3810
    %v4173 = vpack.c.b16 %v3813, %v3812
    %v4174 = vpack.c.b16 %v3815, %v3814
    %v4175 = vpack.c.b16 %v3817, %v3816
    %v4176 = vpack.c.b16 %v3819, %v3818
    %v4177 = vpack.c.b16 %v3821, %v3820
    %v4178 = vpack.c.b16 %v3823, %v3822
    %v4179 = vpack.c.b16 %v3825, %v3824
    %v4180 = vpack.c.b16 %v3827, %v3826
    %v4181 = vpack.c.b16 %v3829, %v3828
    %v4182 = vpack.c.b16 %v3831, %v3830
    %v4183 = vpack.c.b16 %v3833, %v3832
    %v4184 = vpack.c.b16 %v3835, %v3834
    %v4185 = vpack.c.b16 %v3837, %v3836
    %v4186 = vpack.c.b16 %v3839, %v3838
    %v4187 = vpack.c.b16 %v3841, %v3840
    %v4188 = vpack.c.b16 %v3843, %v3842
    %v4189 = vpack.c.b16 %v3845, %v3844
    %v4190 = vpack.c.b16 %v3847, %v3846
    %v4191 = vpack.c.b16 %v3849, %v3848
    %v4192 = vpack.c.b16 %v3851, %v3850
    %v4193 = vpack.c.b16 %v3853, %v3852
    %v4194 = vpack.c.b16 %v3855, %v3854
    %v4195 = vpack.c.b16 %v3857, %v3856
    %v4196 = vpack.c.b16 %v3859, %v3858
    %v4197 = vpack.c.b16 %v3861, %v3860
    %v4198 = vpack.c.b16 %v3863, %v3862
    %v4199 = vpack.c.b16 %v3865, %v3864
    %v4200 = vpack.c.b16 %v3867, %v3866
    %v4201 = vpack.c.b16 %v3869, %v3868
    %v4202 = vpack.c.b16 %v3871, %v3870
    %v4203 = vpack.c.b16 %v3873, %v3872
    %v4204 = vpack.c.b16 %v3875, %v3874
    %v4205 = vpack.c.b16 %v3877, %v3876
    %v4206 = vpack.c.b16 %v3879, %v3878
    %v4207 = vpack.c.b16 %v3881, %v3880
    %v4208 = vpack.c.b16 %v3883, %v3882
    %v4209 = vpack.c.b16 %v3885, %v3884
    %v4210 = vpack.c.b16 %v3887, %v3886
    %v4211 = vpack.c.b16 %v3889, %v3888
    %v4212 = vpack.c.b16 %v3891, %v3890
    %v4213 = vpack.c.b16 %v3893, %v3892
    %v4214 = vpack.c.b16 %v3895, %v3894
    %v4215 = vpack.c.b16 %v3897, %v3896
    %v4216 = vpack.c.b16 %v3899, %v3898
    %v4217 = vpack.c.b16 %v3901, %v3900
    %v4218 = vpack.c.b16 %v3903, %v3902
    %v4219 = vpack.c.b16 %v3905, %v3904
    %v4220 = vpack.c.b16 %v3907, %v3906
    %v4221 = vpack.c.b16 %v3909, %v3908
    %v4222 = vpack.c.b16 %v3911, %v3910
    %v4223 = vpack.c.b16 %v3913, %v3912
    %v4224 = vpack.c.b16 %v3915, %v3914
    %v4225 = vpack.c.b16 %v3917, %v3916
    %v4226 = vpack.c.b16 %v3919, %v3918
    %v4227 = vpack.c.b16 %v3921, %v3920
    %v4228 = vpack.c.b16 %v3923, %v3922
    %v4229 = vpack.c.b16 %v3925, %v3924
    %v4230 = vpack.c.b16 %v3927, %v3926
    %v4231 = vpack.c.b16 %v3929, %v3928
    %v4232 = vpack.c.b16 %v3931, %v3930
    %v4233 = vpack.c.b16 %v3933, %v3932
    %v4234 = vpack.c.b16 %v3935, %v3934
    %v4235 = vpack.c.b16 %v3937, %v3936
    %v4236 = vpack.c.b16 %v3939, %v3938
    %v4237 = vpack.c.b16 %v3941, %v3940
    %v4238 = vpack.c.b16 %v3943, %v3942
    %v4239 = vpack.c.b16 %v3945, %v3944
    %v4240 = vpack.c.b16 %v3947, %v3946
    %v4241 = vpack.c.b16 %v3949, %v3948
    %v4242 = vpack.c.b16 %v3951, %v3950
    %v4243 = vpack.c.b16 %v3953, %v3952
    %v4244 = vpack.c.b16 %v3955, %v3954
    %v4245 = vpack.c.b16 %v3957, %v3956
    %v4246 = vpack.c.b16 %v3959, %v3958
    %v4247 = vpack.c.b16 %v3961, %v3960
    %v4248 = vpack.c.b16 %v3963, %v3962
    %v4249 = vpack.c.b16 %v3965, %v3964
    %v4250 = vpack.c.b16 %v3967, %v3966
    %v4251 = vpack.c.b16 %v3969, %v3968
    %v4252 = vpack.c.b16 %v3971, %v3970
    %v4253 = vpack.c.b16 %v3973, %v3972
    %v4254 = vpack.c.b16 %v3975, %v3974
    %v4255 = vpack.c.b16 %v3977, %v3976
    %v4256 = vpack.c.b16 %v3979, %v3978
    %v4257 = vpack.c.b16 %v3981, %v3980
    %v4258 = vpack.c.b16 %v3983, %v3982
    %v4259 = vpack.c.b16 %v3985, %v3984
    %v4260 = vpack.c.b16 %v3987, %v3986
    %v4261 = vpack.c.b16 %v3989, %v3988
    %v4262 = vpack.c.b16 %v3991, %v3990
    %v4263 = vpack.c.b16 %v3993, %v3992
    %v4264 = vpack.c.b16 %v3995, %v3994
    %v4265 = vpack.c.b16 %v3997, %v3996
    %v4266 = vpack.c.b16 %v3999, %v3998
    %v4267 = vpack.c.b16 %v4001, %v4000
    %v4268 = vpack.c.b16 %v4003, %v4002
    %v4269 = vpack.c.b16 %v4005, %v4004
    %v4270 = vpack.c.b16 %v4007, %v4006
    %v4271 = vpack.c.b16 %v4009, %v4008
    %v4272 = vpack.c.b16 %v4011, %v4010
    %v4273 = vpack.c.b16 %v4013, %v4012
    %v4274 = vpack.c.b16 %v4015, %v4014
    %v4275 = vpack.c.b16 %v4017, %v4016
    %v4276 = vpack.c.b16 %v4019, %v4018
    %v4277 = vpack.c.b16 %v4021, %v4020
    %v4278 = vpack.c.b16 %v4023, %v4022
    %v4279 = vpack.c.b16 %v4025, %v4024
    %v4280 = vpack.c.b16 %v4027, %v4026
    %v4281 = vpack.c.b16 %v4029, %v4028
    %v4282 = vpack.c.b16 %v4031, %v4030
    %v4283 = vpack.c.b16 %v4033, %v4032
    %v4284 = vpack.c.b16 %v4035, %v4034
    %v4285 = vpack.c.b16 %v4037, %v4036
    %v4286 = vpack.c.b16 %v4039, %v4038
    %v4287 = vpack.c.b16 %v4041, %v4040
    %v4288 = vpack.c.b16 %v4043, %v4042
    %v4289 = vpack.c.b16 %v4045, %v4044
    %v4290 = vpack.c.b16 %v4047, %v4046
    %v4291 = vpack.c.b16 %v4049, %v4048
    %v4292 = vpack.c.b16 %v4051, %v4050
    %v4293 = vpack.c.b16 %v4053, %v4052
    %v4294 = vpack.c.b16 %v4055, %v4054
    %v4295 = vpack.c.b16 %v4057, %v4056
    %v4296 = vpack.c.b16 %v4059, %v4058
    %v4297 = vpack.c.b16 %v4061, %v4060
    %v4298 = vpack.c.b16 %v4063, %v4062
    %v4299 = vpack.c.b16 %v4065, %v4064
    %v4300 = vpack.c.b16 %v4067, %v4066
    %v4301 = vpack.c.b16 %v4069, %v4068
    %v4302 = vpack.c.b16 %v4071, %v4070
    %v4303 = vpack.c.b16 %v4073, %v4072
    %v4304 = vpack.c.b16 %v4075, %v4074
    %v4305 = vpack.c.b16 %v4077, %v4076
    %v4306 = vpack.c.b16 %v4079, %v4078
    %v4307 = vpack.c.b16 %v4081, %v4080
    %v4308 = vpack.c.b16 %v4083, %v4082
    %v4309 = vpack.c.b16 %v4085, %v4084
    %v4310 = vpack.c.b16 %v4087, %v4086
    %v4311 = vpack.c.b16 %v4089, %v4088
    %v4312 = vpack.c.b16 %v4091, %v4090
    %v4313 = vpack.c.b16 %v4093, %v4092
    %v4314 = vpack.c.b16 %v4095, %v4094
    %v4315 = vpack.c.b16 %v4097, %v4096
    %v4316 = vpack.c.b16 %v4099, %v4098
    %v4317 = vpack.c.b16 %v4101, %v4100
    %v4318 = vpack.c.b16 %v4103, %v4102
    %v4319 = vpack.c.b16 %v4105, %v4104
    %v4320 = vpack.c.b16 %v4107, %v4106
    %v4321 = vpack.c.b16 %v4109, %v4108
    %v4322 = vpack.c.b16 %v4111, %v4110
    %v4323 = vpack.c.b16 %v4113, %v4112
    %v4324 = vpack.c.b16 %v4115, %v4114
    %v4325 = vpack.c.b16 %v4117, %v4116
    %v4326 = vpack.c.b16 %v4119, %v4118
    %v4327 = vpack.c.b16 %v4121, %v4120
    %v4328 = vpack.c.b16 %v4123, %v4122
    %v4329 = vpack.c.b16 %v4125, %v4124
    %v4330 = vpack.c.b16 %v4127, %v4126
    %v4331 = vpack.c.b16 %v4129, %v4128
    %v4332 = vpack.c.b16 %v4131, %v4130
    %v4333 = vpack.c.b16 %v4133, %v4132
    %v4334 = vpack.c.b16 %v4135, %v4134
    %v4335 = vpack.c.b16 %v4137, %v4136
    %v4336 = vpack.c.b16 %v4139, %v4138
    %v4337 = vpack.c.b16 %v4141, %v4140
    %v4338 = vpack.c.b16 %v4143, %v4142
    %v4339 = vpack.c.b16 %v4145, %v4144
    %v4340 = vpack.c.b16 %v4147, %v4146
    %v4341 = vpack.c.b16 %v4149, %v4148
    %4534 = vmatprep.subr.bf16.mxu0 0
    %4535 = vmatpush1.bf16.msra.mxu0 %v4157
    %4536 = vmatprep.subr.bf16.mxu0 0
    %4537 = vmatpush1.bf16.msra.mxu0 %v4156
    %4538 = vmatprep.subr.bf16.mxu0 0
    %4539 = vmatpush1.bf16.msra.mxu0 %v4155
    %4540 = vmatprep.subr.bf16.mxu0 0
    %4541 = vmatpush1.bf16.msra.mxu0 %v4154
    %4542 = vmatprep.subr.bf16.mxu0 0
    %4543 = vmatpush1.bf16.msra.mxu0 %v4153
    %4544 = vmatprep.subr.bf16.mxu0 0
    %4545 = vmatpush1.bf16.msra.mxu0 %v4152
    %4546 = vmatprep.subr.bf16.mxu0 0
    %4547 = vmatpush1.bf16.msra.mxu0 %v4151
    %4548 = vmatprep.subr.bf16.mxu0 0
    %4549 = vmatpush1.bf16.msra.mxu0 %v4150
    %4550 = vmatprep.subr.bf16.mxu0 0
    %4551 = vmatpush2.bf16.msra.mxu0 %v4165
    %4552 = vmatprep.subr.bf16.mxu0 0
    %4553 = vmatpush2.bf16.msra.mxu0 %v4164
    %4554 = vmatprep.subr.bf16.mxu0 0
    %4555 = vmatpush2.bf16.msra.mxu0 %v4163
    %4556 = vmatprep.subr.bf16.mxu0 0
    %4557 = vmatpush2.bf16.msra.mxu0 %v4162
    %4558 = vmatprep.subr.bf16.mxu0 0
    %4559 = vmatpush2.bf16.msra.mxu0 %v4161
    %4560 = vmatprep.subr.bf16.mxu0 0
    %4561 = vmatpush2.bf16.msra.mxu0 %v4160
    %4562 = vmatprep.subr.bf16.mxu0 0
    %4563 = vmatpush2.bf16.msra.mxu0 %v4159
    %4564 = vmatprep.subr.bf16.mxu0 0
    %4565 = vmatpush2.bf16.msra.mxu0 %v4158
    %4566 = vmatprep.mubr.bf16.mxu0 %v2944
    %4567 = vmatmul.mubr.bf16.gmra.mxu0 %v2943
    %v4568 = vpop.f32.mrf.mxu0
    %v4569 = vadd.f32 %v3380, %v4568
    %v4570 = vpop.f32.mrf.mxu0
    %v4571 = vpop.f32.mrf.mxu0
    %v4572 = vadd.f32 %v3380, %v4571
    %v4573 = vpop.f32.mrf.mxu0
    %4574 = vmatprep.mubr.bf16.mxu0 %v2968
    %4575 = vmatmul.mubr.bf16.gmra.mxu0 %v2967
    %v4576 = vpop.f32.mrf.mxu0
    %v4577 = vadd.f32 %v3380, %v4576
    %v4578 = vpop.f32.mrf.mxu0
    %v4579 = vpop.f32.mrf.mxu0
    %v4580 = vadd.f32 %v3380, %v4579
    %v4581 = vpop.f32.mrf.mxu0
    %4582 = vdwg.mxu0
    %4583 = vmatprep.subr.bf16.mxu0 0
    %4584 = vmatpush1.bf16.msra.mxu0 %v4173
    %4585 = vmatprep.subr.bf16.mxu0 0
    %4586 = vmatpush1.bf16.msra.mxu0 %v4172
    %4587 = vmatprep.subr.bf16.mxu0 0
    %4588 = vmatpush1.bf16.msra.mxu0 %v4171
    %4589 = vmatprep.subr.bf16.mxu0 0
    %4590 = vmatpush1.bf16.msra.mxu0 %v4170
    %4591 = vmatprep.subr.bf16.mxu0 0
    %4592 = vmatpush1.bf16.msra.mxu0 %v4169
    %4593 = vmatprep.subr.bf16.mxu0 0
    %4594 = vmatpush1.bf16.msra.mxu0 %v4168
    %4595 = vmatprep.subr.bf16.mxu0 0
    %4596 = vmatpush1.bf16.msra.mxu0 %v4167
    %4597 = vmatprep.subr.bf16.mxu0 0
    %4598 = vmatpush1.bf16.msra.mxu0 %v4166
    %4599 = vmatprep.subr.bf16.mxu0 0
    %4600 = vmatpush2.bf16.msra.mxu0 %v4181
    %4601 = vmatprep.subr.bf16.mxu0 0
    %4602 = vmatpush2.bf16.msra.mxu0 %v4180
    %4603 = vmatprep.subr.bf16.mxu0 0
    %4604 = vmatpush2.bf16.msra.mxu0 %v4179
    %4605 = vmatprep.subr.bf16.mxu0 0
    %4606 = vmatpush2.bf16.msra.mxu0 %v4178
    %4607 = vmatprep.subr.bf16.mxu0 0
    %4608 = vmatpush2.bf16.msra.mxu0 %v4177
    %4609 = vmatprep.subr.bf16.mxu0 0
    %4610 = vmatpush2.bf16.msra.mxu0 %v4176
    %4611 = vmatprep.subr.bf16.mxu0 0
    %4612 = vmatpush2.bf16.msra.mxu0 %v4175
    %4613 = vmatprep.subr.bf16.mxu0 0
    %4614 = vmatpush2.bf16.msra.mxu0 %v4174
    %4615 = vmatprep.mubr.bf16.mxu0 %v2946
    %4616 = vmatmul.mubr.bf16.gmra.mxu0 %v2945
    %v4617 = vpop.f32.mrf.mxu0
    %v4618 = vadd.f32 %v4569, %v4617
    %v4619 = vpop.f32.mrf.mxu0
    %v4620 = vpop.f32.mrf.mxu0
    %v4621 = vadd.f32 %v4572, %v4620
    %v4622 = vpop.f32.mrf.mxu0
    %4623 = vmatprep.mubr.bf16.mxu0 %v2970
    %4624 = vmatmul.mubr.bf16.gmra.mxu0 %v2969
    %v4625 = vpop.f32.mrf.mxu0
    %v4626 = vadd.f32 %v4577, %v4625
    %v4627 = vpop.f32.mrf.mxu0
    %v4628 = vpop.f32.mrf.mxu0
    %v4629 = vadd.f32 %v4580, %v4628
    %v4630 = vpop.f32.mrf.mxu0
    %4631 = vdwg.mxu0
    %4632 = vmatprep.subr.bf16.mxu0 0
    %4633 = vmatpush1.bf16.msra.mxu0 %v4189
    %4634 = vmatprep.subr.bf16.mxu0 0
    %4635 = vmatpush1.bf16.msra.mxu0 %v4188
    %4636 = vmatprep.subr.bf16.mxu0 0
    %4637 = vmatpush1.bf16.msra.mxu0 %v4187
    %4638 = vmatprep.subr.bf16.mxu0 0
    %4639 = vmatpush1.bf16.msra.mxu0 %v4186
    %4640 = vmatprep.subr.bf16.mxu0 0
    %4641 = vmatpush1.bf16.msra.mxu0 %v4185
    %4642 = vmatprep.subr.bf16.mxu0 0
    %4643 = vmatpush1.bf16.msra.mxu0 %v4184
    %4644 = vmatprep.subr.bf16.mxu0 0
    %4645 = vmatpush1.bf16.msra.mxu0 %v4183
    %4646 = vmatprep.subr.bf16.mxu0 0
    %4647 = vmatpush1.bf16.msra.mxu0 %v4182
    %4648 = vmatprep.subr.bf16.mxu0 0
    %4649 = vmatpush2.bf16.msra.mxu0 %v4197
    %4650 = vmatprep.subr.bf16.mxu0 0
    %4651 = vmatpush2.bf16.msra.mxu0 %v4196
    %4652 = vmatprep.subr.bf16.mxu0 0
    %4653 = vmatpush2.bf16.msra.mxu0 %v4195
    %4654 = vmatprep.subr.bf16.mxu0 0
    %4655 = vmatpush2.bf16.msra.mxu0 %v4194
    %4656 = vmatprep.subr.bf16.mxu0 0
    %4657 = vmatpush2.bf16.msra.mxu0 %v4193
    %4658 = vmatprep.subr.bf16.mxu0 0
    %4659 = vmatpush2.bf16.msra.mxu0 %v4192
    %4660 = vmatprep.subr.bf16.mxu0 0
    %4661 = vmatpush2.bf16.msra.mxu0 %v4191
    %4662 = vmatprep.subr.bf16.mxu0 0
    %4663 = vmatpush2.bf16.msra.mxu0 %v4190
    %4664 = vmatprep.mubr.bf16.mxu0 %v2948
    %4665 = vmatmul.mubr.bf16.gmra.mxu0 %v2947
    %v4666 = vpop.f32.mrf.mxu0
    %v4667 = vadd.f32 %v4618, %v4666
    %v4668 = vpop.f32.mrf.mxu0
    %v4669 = vpop.f32.mrf.mxu0
    %v4670 = vadd.f32 %v4621, %v4669
    %v4671 = vpop.f32.mrf.mxu0
    %4672 = vmatprep.mubr.bf16.mxu0 %v2972
    %4673 = vmatmul.mubr.bf16.gmra.mxu0 %v2971
    %v4674 = vpop.f32.mrf.mxu0
    %v4675 = vadd.f32 %v4626, %v4674
    %v4676 = vpop.f32.mrf.mxu0
    %v4677 = vpop.f32.mrf.mxu0
    %v4678 = vadd.f32 %v4629, %v4677
    %v4679 = vpop.f32.mrf.mxu0
    %4680 = vdwg.mxu0
    %4681 = vmatprep.subr.bf16.mxu0 0
    %4682 = vmatpush1.bf16.msra.mxu0 %v4205
    %4683 = vmatprep.subr.bf16.mxu0 0
    %4684 = vmatpush1.bf16.msra.mxu0 %v4204
    %4685 = vmatprep.subr.bf16.mxu0 0
    %4686 = vmatpush1.bf16.msra.mxu0 %v4203
    %4687 = vmatprep.subr.bf16.mxu0 0
    %4688 = vmatpush1.bf16.msra.mxu0 %v4202
    %4689 = vmatprep.subr.bf16.mxu0 0
    %4690 = vmatpush1.bf16.msra.mxu0 %v4201
    %4691 = vmatprep.subr.bf16.mxu0 0
    %4692 = vmatpush1.bf16.msra.mxu0 %v4200
    %4693 = vmatprep.subr.bf16.mxu0 0
    %4694 = vmatpush1.bf16.msra.mxu0 %v4199
    %4695 = vmatprep.subr.bf16.mxu0 0
    %4696 = vmatpush1.bf16.msra.mxu0 %v4198
    %4697 = vmatprep.subr.bf16.mxu0 0
    %4698 = vmatpush2.bf16.msra.mxu0 %v4213
    %4699 = vmatprep.subr.bf16.mxu0 0
    %4700 = vmatpush2.bf16.msra.mxu0 %v4212
    %4701 = vmatprep.subr.bf16.mxu0 0
    %4702 = vmatpush2.bf16.msra.mxu0 %v4211
    %4703 = vmatprep.subr.bf16.mxu0 0
    %4704 = vmatpush2.bf16.msra.mxu0 %v4210
    %4705 = vmatprep.subr.bf16.mxu0 0
    %4706 = vmatpush2.bf16.msra.mxu0 %v4209
    %4707 = vmatprep.subr.bf16.mxu0 0
    %4708 = vmatpush2.bf16.msra.mxu0 %v4208
    %4709 = vmatprep.subr.bf16.mxu0 0
    %4710 = vmatpush2.bf16.msra.mxu0 %v4207
    %4711 = vmatprep.subr.bf16.mxu0 0
    %4712 = vmatpush2.bf16.msra.mxu0 %v4206
    %4713 = vmatprep.mubr.bf16.mxu0 %v2950
    %4714 = vmatmul.mubr.bf16.gmra.mxu0 %v2949
    %v4715 = vpop.f32.mrf.mxu0
    %v4716 = vadd.f32 %v4667, %v4715
    %v4717 = vpop.f32.mrf.mxu0
    %v4718 = vpop.f32.mrf.mxu0
    %v4719 = vadd.f32 %v4670, %v4718
    %v4720 = vpop.f32.mrf.mxu0
    %4721 = vmatprep.mubr.bf16.mxu0 %v2974
    %4722 = vmatmul.mubr.bf16.gmra.mxu0 %v2973
    %v4723 = vpop.f32.mrf.mxu0
    %v4724 = vadd.f32 %v4675, %v4723
    %v4725 = vpop.f32.mrf.mxu0
    %v4726 = vpop.f32.mrf.mxu0
    %v4727 = vadd.f32 %v4678, %v4726
    %v4728 = vpop.f32.mrf.mxu0
    %4729 = vdwg.mxu0
    %4730 = vmatprep.subr.bf16.mxu0 0
    %4731 = vmatpush1.bf16.msra.mxu0 %v4221
    %4732 = vmatprep.subr.bf16.mxu0 0
    %4733 = vmatpush1.bf16.msra.mxu0 %v4220
    %4734 = vmatprep.subr.bf16.mxu0 0
    %4735 = vmatpush1.bf16.msra.mxu0 %v4219
    %4736 = vmatprep.subr.bf16.mxu0 0
    %4737 = vmatpush1.bf16.msra.mxu0 %v4218
    %4738 = vmatprep.subr.bf16.mxu0 0
    %4739 = vmatpush1.bf16.msra.mxu0 %v4217
    %4740 = vmatprep.subr.bf16.mxu0 0
    %4741 = vmatpush1.bf16.msra.mxu0 %v4216
    %4742 = vmatprep.subr.bf16.mxu0 0
    %4743 = vmatpush1.bf16.msra.mxu0 %v4215
    %4744 = vmatprep.subr.bf16.mxu0 0
    %4745 = vmatpush1.bf16.msra.mxu0 %v4214
    %4746 = vmatprep.subr.bf16.mxu0 0
    %4747 = vmatpush2.bf16.msra.mxu0 %v4229
    %4748 = vmatprep.subr.bf16.mxu0 0
    %4749 = vmatpush2.bf16.msra.mxu0 %v4228
    %4750 = vmatprep.subr.bf16.mxu0 0
    %4751 = vmatpush2.bf16.msra.mxu0 %v4227
    %4752 = vmatprep.subr.bf16.mxu0 0
    %4753 = vmatpush2.bf16.msra.mxu0 %v4226
    %4754 = vmatprep.subr.bf16.mxu0 0
    %4755 = vmatpush2.bf16.msra.mxu0 %v4225
    %4756 = vmatprep.subr.bf16.mxu0 0
    %4757 = vmatpush2.bf16.msra.mxu0 %v4224
    %4758 = vmatprep.subr.bf16.mxu0 0
    %4759 = vmatpush2.bf16.msra.mxu0 %v4223
    %4760 = vmatprep.subr.bf16.mxu0 0
    %4761 = vmatpush2.bf16.msra.mxu0 %v4222
    %4762 = vmatprep.mubr.bf16.mxu0 %v2952
    %4763 = vmatmul.mubr.bf16.gmra.mxu0 %v2951
    %v4764 = vpop.f32.mrf.mxu0
    %v4765 = vadd.f32 %v4716, %v4764
    %v4766 = vpop.f32.mrf.mxu0
    %v4767 = vpop.f32.mrf.mxu0
    %v4768 = vadd.f32 %v4719, %v4767
    %v4769 = vpop.f32.mrf.mxu0
    %4770 = vmatprep.mubr.bf16.mxu0 %v2976
    %4771 = vmatmul.mubr.bf16.gmra.mxu0 %v2975
    %v4772 = vpop.f32.mrf.mxu0
    %v4773 = vadd.f32 %v4724, %v4772
    %v4774 = vpop.f32.mrf.mxu0
    %v4775 = vpop.f32.mrf.mxu0
    %v4776 = vadd.f32 %v4727, %v4775
    %v4777 = vpop.f32.mrf.mxu0
    %4778 = vdwg.mxu0
    %4779 = vmatprep.subr.bf16.mxu0 0
    %4780 = vmatpush1.bf16.msra.mxu0 %v4237
    %4781 = vmatprep.subr.bf16.mxu0 0
    %4782 = vmatpush1.bf16.msra.mxu0 %v4236
    %4783 = vmatprep.subr.bf16.mxu0 0
    %4784 = vmatpush1.bf16.msra.mxu0 %v4235
    %4785 = vmatprep.subr.bf16.mxu0 0
    %4786 = vmatpush1.bf16.msra.mxu0 %v4234
    %4787 = vmatprep.subr.bf16.mxu0 0
    %4788 = vmatpush1.bf16.msra.mxu0 %v4233
    %4789 = vmatprep.subr.bf16.mxu0 0
    %4790 = vmatpush1.bf16.msra.mxu0 %v4232
    %4791 = vmatprep.subr.bf16.mxu0 0
    %4792 = vmatpush1.bf16.msra.mxu0 %v4231
    %4793 = vmatprep.subr.bf16.mxu0 0
    %4794 = vmatpush1.bf16.msra.mxu0 %v4230
    %4795 = vmatprep.subr.bf16.mxu0 0
    %4796 = vmatpush2.bf16.msra.mxu0 %v4245
    %4797 = vmatprep.subr.bf16.mxu0 0
    %4798 = vmatpush2.bf16.msra.mxu0 %v4244
    %4799 = vmatprep.subr.bf16.mxu0 0
    %4800 = vmatpush2.bf16.msra.mxu0 %v4243
    %4801 = vmatprep.subr.bf16.mxu0 0
    %4802 = vmatpush2.bf16.msra.mxu0 %v4242
    %4803 = vmatprep.subr.bf16.mxu0 0
    %4804 = vmatpush2.bf16.msra.mxu0 %v4241
    %4805 = vmatprep.subr.bf16.mxu0 0
    %4806 = vmatpush2.bf16.msra.mxu0 %v4240
    %4807 = vmatprep.subr.bf16.mxu0 0
    %4808 = vmatpush2.bf16.msra.mxu0 %v4239
    %4809 = vmatprep.subr.bf16.mxu0 0
    %4810 = vmatpush2.bf16.msra.mxu0 %v4238
    %4811 = vmatprep.mubr.bf16.mxu0 %v2954
    %4812 = vmatmul.mubr.bf16.gmra.mxu0 %v2953
    %v4813 = vpop.f32.mrf.mxu0
    %v4814 = vadd.f32 %v4765, %v4813
    %v4815 = vpop.f32.mrf.mxu0
    %v4816 = vpop.f32.mrf.mxu0
    %v4817 = vadd.f32 %v4768, %v4816
    %v4818 = vpop.f32.mrf.mxu0
    %4819 = vmatprep.mubr.bf16.mxu0 %v2978
    %4820 = vmatmul.mubr.bf16.gmra.mxu0 %v2977
    %v4821 = vpop.f32.mrf.mxu0
    %v4822 = vadd.f32 %v4773, %v4821
    %v4823 = vpop.f32.mrf.mxu0
    %v4824 = vpop.f32.mrf.mxu0
    %v4825 = vadd.f32 %v4776, %v4824
    %v4826 = vpop.f32.mrf.mxu0
    %4827 = vdwg.mxu0
    %4828 = vmatprep.subr.bf16.mxu0 0
    %4829 = vmatpush1.bf16.msra.mxu0 %v4253
    %4830 = vmatprep.subr.bf16.mxu0 0
    %4831 = vmatpush1.bf16.msra.mxu0 %v4252
    %4832 = vmatprep.subr.bf16.mxu0 0
    %4833 = vmatpush1.bf16.msra.mxu0 %v4251
    %4834 = vmatprep.subr.bf16.mxu0 0
    %4835 = vmatpush1.bf16.msra.mxu0 %v4250
    %4836 = vmatprep.subr.bf16.mxu0 0
    %4837 = vmatpush1.bf16.msra.mxu0 %v4249
    %4838 = vmatprep.subr.bf16.mxu0 0
    %4839 = vmatpush1.bf16.msra.mxu0 %v4248
    %4840 = vmatprep.subr.bf16.mxu0 0
    %4841 = vmatpush1.bf16.msra.mxu0 %v4247
    %4842 = vmatprep.subr.bf16.mxu0 0
    %4843 = vmatpush1.bf16.msra.mxu0 %v4246
    %4844 = vmatprep.subr.bf16.mxu0 0
    %4845 = vmatpush2.bf16.msra.mxu0 %v4261
    %4846 = vmatprep.subr.bf16.mxu0 0
    %4847 = vmatpush2.bf16.msra.mxu0 %v4260
    %4848 = vmatprep.subr.bf16.mxu0 0
    %4849 = vmatpush2.bf16.msra.mxu0 %v4259
    %4850 = vmatprep.subr.bf16.mxu0 0
    %4851 = vmatpush2.bf16.msra.mxu0 %v4258
    %4852 = vmatprep.subr.bf16.mxu0 0
    %4853 = vmatpush2.bf16.msra.mxu0 %v4257
    %4854 = vmatprep.subr.bf16.mxu0 0
    %4855 = vmatpush2.bf16.msra.mxu0 %v4256
    %4856 = vmatprep.subr.bf16.mxu0 0
    %4857 = vmatpush2.bf16.msra.mxu0 %v4255
    %4858 = vmatprep.subr.bf16.mxu0 0
    %4859 = vmatpush2.bf16.msra.mxu0 %v4254
    %4860 = vmatprep.mubr.bf16.mxu0 %v2956
    %4861 = vmatmul.mubr.bf16.gmra.mxu0 %v2955
    %v4862 = vpop.f32.mrf.mxu0
    %v4863 = vadd.f32 %v4814, %v4862
    %v4864 = vpop.f32.mrf.mxu0
    %v4865 = vpop.f32.mrf.mxu0
    %v4866 = vadd.f32 %v4817, %v4865
    %v4867 = vpop.f32.mrf.mxu0
    %4868 = vmatprep.mubr.bf16.mxu0 %v2980
    %4869 = vmatmul.mubr.bf16.gmra.mxu0 %v2979
    %v4870 = vpop.f32.mrf.mxu0
    %v4871 = vadd.f32 %v4822, %v4870
    %v4872 = vpop.f32.mrf.mxu0
    %v4873 = vpop.f32.mrf.mxu0
    %v4874 = vadd.f32 %v4825, %v4873
    %v4875 = vpop.f32.mrf.mxu0
    %4876 = vdwg.mxu0
    %4877 = vmatprep.subr.bf16.mxu0 0
    %4878 = vmatpush1.bf16.msra.mxu0 %v4269
    %4879 = vmatprep.subr.bf16.mxu0 0
    %4880 = vmatpush1.bf16.msra.mxu0 %v4268
    %4881 = vmatprep.subr.bf16.mxu0 0
    %4882 = vmatpush1.bf16.msra.mxu0 %v4267
    %4883 = vmatprep.subr.bf16.mxu0 0
    %4884 = vmatpush1.bf16.msra.mxu0 %v4266
    %4885 = vmatprep.subr.bf16.mxu0 0
    %4886 = vmatpush1.bf16.msra.mxu0 %v4265
    %4887 = vmatprep.subr.bf16.mxu0 0
    %4888 = vmatpush1.bf16.msra.mxu0 %v4264
    %4889 = vmatprep.subr.bf16.mxu0 0
    %4890 = vmatpush1.bf16.msra.mxu0 %v4263
    %4891 = vmatprep.subr.bf16.mxu0 0
    %4892 = vmatpush1.bf16.msra.mxu0 %v4262
    %4893 = vmatprep.subr.bf16.mxu0 0
    %4894 = vmatpush2.bf16.msra.mxu0 %v4277
    %4895 = vmatprep.subr.bf16.mxu0 0
    %4896 = vmatpush2.bf16.msra.mxu0 %v4276
    %4897 = vmatprep.subr.bf16.mxu0 0
    %4898 = vmatpush2.bf16.msra.mxu0 %v4275
    %4899 = vmatprep.subr.bf16.mxu0 0
    %4900 = vmatpush2.bf16.msra.mxu0 %v4274
    %4901 = vmatprep.subr.bf16.mxu0 0
    %4902 = vmatpush2.bf16.msra.mxu0 %v4273
    %4903 = vmatprep.subr.bf16.mxu0 0
    %4904 = vmatpush2.bf16.msra.mxu0 %v4272
    %4905 = vmatprep.subr.bf16.mxu0 0
    %4906 = vmatpush2.bf16.msra.mxu0 %v4271
    %4907 = vmatprep.subr.bf16.mxu0 0
    %4908 = vmatpush2.bf16.msra.mxu0 %v4270
    %4909 = vmatprep.mubr.bf16.mxu0 %v2958
    %4910 = vmatmul.mubr.bf16.gmra.mxu0 %v2957
    %v4911 = vpop.f32.mrf.mxu0
    %v4912 = vadd.f32 %v4863, %v4911
    %v4913 = vpop.f32.mrf.mxu0
    %v4914 = vpop.f32.mrf.mxu0
    %v4915 = vadd.f32 %v4866, %v4914
    %v4916 = vpop.f32.mrf.mxu0
    %4917 = vmatprep.mubr.bf16.mxu0 %v2982
    %4918 = vmatmul.mubr.bf16.gmra.mxu0 %v2981
    %v4919 = vpop.f32.mrf.mxu0
    %v4920 = vadd.f32 %v4871, %v4919
    %v4921 = vpop.f32.mrf.mxu0
    %v4922 = vpop.f32.mrf.mxu0
    %v4923 = vadd.f32 %v4874, %v4922
    %v4924 = vpop.f32.mrf.mxu0
    %4925 = vdwg.mxu0
    %4926 = vmatprep.subr.bf16.mxu0 0
    %4927 = vmatpush1.bf16.msra.mxu0 %v4285
    %4928 = vmatprep.subr.bf16.mxu0 0
    %4929 = vmatpush1.bf16.msra.mxu0 %v4284
    %4930 = vmatprep.subr.bf16.mxu0 0
    %4931 = vmatpush1.bf16.msra.mxu0 %v4283
    %4932 = vmatprep.subr.bf16.mxu0 0
    %4933 = vmatpush1.bf16.msra.mxu0 %v4282
    %4934 = vmatprep.subr.bf16.mxu0 0
    %4935 = vmatpush1.bf16.msra.mxu0 %v4281
    %4936 = vmatprep.subr.bf16.mxu0 0
    %4937 = vmatpush1.bf16.msra.mxu0 %v4280
    %4938 = vmatprep.subr.bf16.mxu0 0
    %4939 = vmatpush1.bf16.msra.mxu0 %v4279
    %4940 = vmatprep.subr.bf16.mxu0 0
    %4941 = vmatpush1.bf16.msra.mxu0 %v4278
    %4942 = vmatprep.subr.bf16.mxu0 0
    %4943 = vmatpush2.bf16.msra.mxu0 %v4293
    %4944 = vmatprep.subr.bf16.mxu0 0
    %4945 = vmatpush2.bf16.msra.mxu0 %v4292
    %4946 = vmatprep.subr.bf16.mxu0 0
    %4947 = vmatpush2.bf16.msra.mxu0 %v4291
    %4948 = vmatprep.subr.bf16.mxu0 0
    %4949 = vmatpush2.bf16.msra.mxu0 %v4290
    %4950 = vmatprep.subr.bf16.mxu0 0
    %4951 = vmatpush2.bf16.msra.mxu0 %v4289
    %4952 = vmatprep.subr.bf16.mxu0 0
    %4953 = vmatpush2.bf16.msra.mxu0 %v4288
    %4954 = vmatprep.subr.bf16.mxu0 0
    %4955 = vmatpush2.bf16.msra.mxu0 %v4287
    %4956 = vmatprep.subr.bf16.mxu0 0
    %4957 = vmatpush2.bf16.msra.mxu0 %v4286
    %4958 = vmatprep.mubr.bf16.mxu0 %v2960
    %4959 = vmatmul.mubr.bf16.gmra.mxu0 %v2959
    %v4960 = vpop.f32.mrf.mxu0
    %v4961 = vadd.f32 %v4912, %v4960
    %v4962 = vpop.f32.mrf.mxu0
    %v4963 = vpop.f32.mrf.mxu0
    %v4964 = vadd.f32 %v4915, %v4963
    %v4965 = vpop.f32.mrf.mxu0
    %4966 = vmatprep.mubr.bf16.mxu0 %v2984
    %4967 = vmatmul.mubr.bf16.gmra.mxu0 %v2983
    %v4968 = vpop.f32.mrf.mxu0
    %v4969 = vadd.f32 %v4920, %v4968
    %v4970 = vpop.f32.mrf.mxu0
    %v4971 = vpop.f32.mrf.mxu0
    %v4972 = vadd.f32 %v4923, %v4971
    %v4973 = vpop.f32.mrf.mxu0
    %4974 = vdwg.mxu0
    %4975 = vmatprep.subr.bf16.mxu0 0
    %4976 = vmatpush1.bf16.msra.mxu0 %v4301
    %4977 = vmatprep.subr.bf16.mxu0 0
    %4978 = vmatpush1.bf16.msra.mxu0 %v4300
    %4979 = vmatprep.subr.bf16.mxu0 0
    %4980 = vmatpush1.bf16.msra.mxu0 %v4299
    %4981 = vmatprep.subr.bf16.mxu0 0
    %4982 = vmatpush1.bf16.msra.mxu0 %v4298
    %4983 = vmatprep.subr.bf16.mxu0 0
    %4984 = vmatpush1.bf16.msra.mxu0 %v4297
    %4985 = vmatprep.subr.bf16.mxu0 0
    %4986 = vmatpush1.bf16.msra.mxu0 %v4296
    %4987 = vmatprep.subr.bf16.mxu0 0
    %4988 = vmatpush1.bf16.msra.mxu0 %v4295
    %4989 = vmatprep.subr.bf16.mxu0 0
    %4990 = vmatpush1.bf16.msra.mxu0 %v4294
    %4991 = vmatprep.subr.bf16.mxu0 0
    %4992 = vmatpush2.bf16.msra.mxu0 %v4309
    %4993 = vmatprep.subr.bf16.mxu0 0
    %4994 = vmatpush2.bf16.msra.mxu0 %v4308
    %4995 = vmatprep.subr.bf16.mxu0 0
    %4996 = vmatpush2.bf16.msra.mxu0 %v4307
    %4997 = vmatprep.subr.bf16.mxu0 0
    %4998 = vmatpush2.bf16.msra.mxu0 %v4306
    %4999 = vmatprep.subr.bf16.mxu0 0
    %5000 = vmatpush2.bf16.msra.mxu0 %v4305
    %5001 = vmatprep.subr.bf16.mxu0 0
    %5002 = vmatpush2.bf16.msra.mxu0 %v4304
    %5003 = vmatprep.subr.bf16.mxu0 0
    %5004 = vmatpush2.bf16.msra.mxu0 %v4303
    %5005 = vmatprep.subr.bf16.mxu0 0
    %5006 = vmatpush2.bf16.msra.mxu0 %v4302
    %5007 = vmatprep.mubr.bf16.mxu0 %v2962
    %5008 = vmatmul.mubr.bf16.gmra.mxu0 %v2961
    %v5009 = vpop.f32.mrf.mxu0
    %v5010 = vadd.f32 %v4961, %v5009
    %v5011 = vpop.f32.mrf.mxu0
    %v5012 = vpop.f32.mrf.mxu0
    %v5013 = vadd.f32 %v4964, %v5012
    %v5014 = vpop.f32.mrf.mxu0
    %5015 = vmatprep.mubr.bf16.mxu0 %v2986
    %5016 = vmatmul.mubr.bf16.gmra.mxu0 %v2985
    %v5017 = vpop.f32.mrf.mxu0
    %v5018 = vadd.f32 %v4969, %v5017
    %v5019 = vpop.f32.mrf.mxu0
    %v5020 = vpop.f32.mrf.mxu0
    %v5021 = vadd.f32 %v4972, %v5020
    %v5022 = vpop.f32.mrf.mxu0
    %5023 = vdwg.mxu0
    %5024 = vmatprep.subr.bf16.mxu0 0
    %5025 = vmatpush1.bf16.msra.mxu0 %v4317
    %5026 = vmatprep.subr.bf16.mxu0 0
    %5027 = vmatpush1.bf16.msra.mxu0 %v4316
    %5028 = vmatprep.subr.bf16.mxu0 0
    %5029 = vmatpush1.bf16.msra.mxu0 %v4315
    %5030 = vmatprep.subr.bf16.mxu0 0
    %5031 = vmatpush1.bf16.msra.mxu0 %v4314
    %5032 = vmatprep.subr.bf16.mxu0 0
    %5033 = vmatpush1.bf16.msra.mxu0 %v4313
    %5034 = vmatprep.subr.bf16.mxu0 0
    %5035 = vmatpush1.bf16.msra.mxu0 %v4312
    %5036 = vmatprep.subr.bf16.mxu0 0
    %5037 = vmatpush1.bf16.msra.mxu0 %v4311
    %5038 = vmatprep.subr.bf16.mxu0 0
    %5039 = vmatpush1.bf16.msra.mxu0 %v4310
    %5040 = vmatprep.subr.bf16.mxu0 0
    %5041 = vmatpush2.bf16.msra.mxu0 %v4325
    %5042 = vmatprep.subr.bf16.mxu0 0
    %5043 = vmatpush2.bf16.msra.mxu0 %v4324
    %5044 = vmatprep.subr.bf16.mxu0 0
    %5045 = vmatpush2.bf16.msra.mxu0 %v4323
    %5046 = vmatprep.subr.bf16.mxu0 0
    %5047 = vmatpush2.bf16.msra.mxu0 %v4322
    %5048 = vmatprep.subr.bf16.mxu0 0
    %5049 = vmatpush2.bf16.msra.mxu0 %v4321
    %5050 = vmatprep.subr.bf16.mxu0 0
    %5051 = vmatpush2.bf16.msra.mxu0 %v4320
    %5052 = vmatprep.subr.bf16.mxu0 0
    %5053 = vmatpush2.bf16.msra.mxu0 %v4319
    %5054 = vmatprep.subr.bf16.mxu0 0
    %5055 = vmatpush2.bf16.msra.mxu0 %v4318
    %5056 = vmatprep.mubr.bf16.mxu0 %v2964
    %5057 = vmatmul.mubr.bf16.gmra.mxu0 %v2963
    %v5058 = vpop.f32.mrf.mxu0
    %v5059 = vadd.f32 %v5010, %v5058
    %v5060 = vpop.f32.mrf.mxu0
    %v5061 = vpop.f32.mrf.mxu0
    %v5062 = vadd.f32 %v5013, %v5061
    %v5063 = vpop.f32.mrf.mxu0
    %5064 = vmatprep.mubr.bf16.mxu0 %v2988
    %5065 = vmatmul.mubr.bf16.gmra.mxu0 %v2987
    %v5066 = vpop.f32.mrf.mxu0
    %v5067 = vadd.f32 %v5018, %v5066
    %v5068 = vpop.f32.mrf.mxu0
    %v5069 = vpop.f32.mrf.mxu0
    %v5070 = vadd.f32 %v5021, %v5069
    %v5071 = vpop.f32.mrf.mxu0
    %5072 = vdwg.mxu0
    %5073 = vmatprep.subr.bf16.mxu0 0
    %5074 = vmatpush1.bf16.msra.mxu0 %v4333
    %5075 = vmatprep.subr.bf16.mxu0 0
    %5076 = vmatpush1.bf16.msra.mxu0 %v4332
    %5077 = vmatprep.subr.bf16.mxu0 0
    %5078 = vmatpush1.bf16.msra.mxu0 %v4331
    %5079 = vmatprep.subr.bf16.mxu0 0
    %5080 = vmatpush1.bf16.msra.mxu0 %v4330
    %5081 = vmatprep.subr.bf16.mxu0 0
    %5082 = vmatpush1.bf16.msra.mxu0 %v4329
    %5083 = vmatprep.subr.bf16.mxu0 0
    %5084 = vmatpush1.bf16.msra.mxu0 %v4328
    %5085 = vmatprep.subr.bf16.mxu0 0
    %5086 = vmatpush1.bf16.msra.mxu0 %v4327
    %5087 = vmatprep.subr.bf16.mxu0 0
    %5088 = vmatpush1.bf16.msra.mxu0 %v4326
    %5089 = vmatprep.subr.bf16.mxu0 0
    %5090 = vmatpush2.bf16.msra.mxu0 %v4341
    %5091 = vmatprep.subr.bf16.mxu0 0
    %5092 = vmatpush2.bf16.msra.mxu0 %v4340
    %5093 = vmatprep.subr.bf16.mxu0 0
    %5094 = vmatpush2.bf16.msra.mxu0 %v4339
    %5095 = vmatprep.subr.bf16.mxu0 0
    %5096 = vmatpush2.bf16.msra.mxu0 %v4338
    %5097 = vmatprep.subr.bf16.mxu0 0
    %5098 = vmatpush2.bf16.msra.mxu0 %v4337
    %5099 = vmatprep.subr.bf16.mxu0 0
    %5100 = vmatpush2.bf16.msra.mxu0 %v4336
    %5101 = vmatprep.subr.bf16.mxu0 0
    %5102 = vmatpush2.bf16.msra.mxu0 %v4335
    %5103 = vmatprep.subr.bf16.mxu0 0
    %5104 = vmatpush2.bf16.msra.mxu0 %v4334
    %5105 = vmatprep.mubr.bf16.mxu0 %v2966
    %5106 = vmatmul.mubr.bf16.gmra.mxu0 %v2965
    %v5107 = vpop.f32.mrf.mxu0
    %v5108 = vadd.f32 %v5059, %v5107
    %v5109 = vpop.f32.mrf.mxu0
    %v5110 = vpop.f32.mrf.mxu0
    %v5111 = vadd.f32 %v5062, %v5110
    %v5112 = vpop.f32.mrf.mxu0
    %5113 = vmatprep.mubr.bf16.mxu0 %v2990
    %5114 = vmatmul.mubr.bf16.gmra.mxu0 %v2989
    %v5115 = vpop.f32.mrf.mxu0
    %v5116 = vadd.f32 %v5067, %v5115
    %v5117 = vpop.f32.mrf.mxu0
    %v5118 = vpop.f32.mrf.mxu0
    %v5119 = vadd.f32 %v5070, %v5118
    %v5120 = vpop.f32.mrf.mxu0
    %5121 = vdwg.mxu0
    %v5122 = vadd.f32 %v81, %v5108
    %v5123 = vadd.f32 %v82, %v5111
    %v5124 = vadd.f32 %v83, %v5116
    %v5125 = vadd.f32 %v84, %v5119
    %5126 = vst [vmem:[#allocation10] sm:$0xff] %v5122
    %5127 = vst [vmem:[#allocation10 + $0x8] sm:$0xff] %v5123
    %5128 = vst [vmem:[#allocation10 + $0x10] sm:$0xff] %v5124
    %5129 = vst [vmem:[#allocation10 + $0x18] sm:$0xff] %v5125
    // Predicated region
    $region46: #{tpu_custom_call.1} parent=1 // pred_check
      _
    $region47: #{tpu_custom_call.1} parent=1 // pred_check_branch
      %5131 = sbr.rel (0) target = $region49
    $region48: #{tpu_custom_call.1} parent=1 // pred_region
      %s5133 = ssub.s32 512, 512
      %5134 = vsyncadd [#allocation4], %s5133
      %s5135 = sshll.u32 [#allocation10], 4
      %s5136 = int_to_ptr.vmem [resolvable:$true] %s5135
      %5141 = dma.vmem_to_hbm [thread:$0]  %s5136, 512, %s7, [#allocation4], 128, 128, 8
    $region49: #{tpu_custom_call.1} parent=1 // pred_fallthru
      _
    // Predicated region
    $region50: #{tpu_custom_call.1} parent=1 // pred_check
      _
    $region51: #{tpu_custom_call.1} parent=1 // pred_check_branch
      %5143 = sbr.rel (0) target = $region53
    $region52: #{tpu_custom_call.1} parent=1 // pred_region
      %5144 = dma.done [#allocation4], 512
    $region53: #{tpu_custom_call.1} parent=1 // pred_fallthru
      _
    %5145 = vsyncpa [#allocation3], 1
    %5146 = vsyncpa [#allocation6], 1
    %5147 = vsyncpa [#allocation9], 1
    %5148 = vsyncpa [#allocation4], 1

</llo_original>
